<compile_context>
chip_gen: v6e
topology: v6e:2x2x1
jax: 0.10.0
libtpu: 0.0.40
codegen_flags: <defaults>
</compile_context>

<pallas_src>
import jax
import jax.numpy as jnp
import numpy as np
from jax.experimental import pallas as pl
from jax.experimental.pallas import tpu as pltpu


# ----------------------------------------------------------------------------
# Fused conv-stack kernel (layers 1-3, phase-packed channels-last layout)
# ----------------------------------------------------------------------------
def conv_stack_kernel(xim_ref, w1e_ref, w1o_ref, sc1_ref, sh1_ref,
                      w2a_ref, w2b_ref, sc2_ref, sh2_ref,
                      w3a_ref, w3b_ref, sc3_ref, sh3_ref, o_ref):
    r, wf, _ = xim_ref.shape

    def lhs2d(parts):
        # Lane-concat of full-128 blocks (pure vreg stacking) + leading-dim
        # merge; parts are already bf16.
        a = parts[0] if len(parts) == 1 else jnp.concatenate(parts, axis=-1)
        return a.reshape(r * wf, a.shape[-1])

    def matmul(lhs, w_ref):
        n = w_ref.shape[-1]
        res = jnp.dot(lhs, w_ref[...], preferred_element_type=jnp.float32)
        return res.reshape(r, wf, n)

    def act_pool(za, zb, sc_ref, sh_ref):
        # BN affine + sigmoid (tanh form -> EUP) + MaxPool(1,2) fused max.
        sc = sc_ref[...].reshape(1, 1, -1)
        sh = sh_ref[...].reshape(1, 1, -1)
        sa = 0.5 * jnp.tanh(0.5 * (za * sc + sh)) + 0.5
        sb = 0.5 * jnp.tanh(0.5 * (zb * sc + sh)) + 0.5
        return jnp.maximum(sa, sb).astype(jnp.bfloat16)

    def shifted(p):
        # p[u-1] / p[u+1] along the position (sublane) axis with zero padding
        # (= conv boundary padding).  Cheap sublane-direction copies.
        z = jnp.zeros((r, 1, p.shape[-1]), p.dtype)
        pm = jnp.concatenate([z, p[:, :wf - 1, :]], axis=1)
        pp = jnp.concatenate([p[:, 1:, :], z], axis=1)
        return pm, pp

    # ---- layer 1: im2col'd raw input (r, wf, 24) -> (r, wf, 4*32) ----
    x = lhs2d([xim_ref[...].astype(jnp.bfloat16)])
    p1 = act_pool(matmul(x, w1e_ref), matmul(x, w1o_ref), sc1_ref, sh1_ref)

    # ---- layer 2: (r, wf, 4*32) -> (r, wf, 2*64) ----
    p1m, p1p = shifted(p1)
    p2 = act_pool(matmul(lhs2d([p1m, p1]), w2a_ref),
                  matmul(lhs2d([p1, p1p]), w2b_ref), sc2_ref, sh2_ref)

    # ---- layer 3: (r, wf, 2*64) -> (r, wf, 128) ----
    p2m, p2p = shifted(p2)
    p3 = act_pool(matmul(lhs2d([p2m, p2]), w3a_ref),
                  matmul(lhs2d([p2, p2p]), w3b_ref), sc3_ref, sh3_ref)

    o_ref[...] = p3


def conv_stack(xim, packed, r_blk):
    R, Wf, K1 = xim.shape
    (w1e, w1o, sc1, sh1), (w2a, w2b, sc2, sh2), (w3a, w3b, sc3, sh3) = packed
    n_out = w3a.shape[1]

    def wspec(a):
        return pl.BlockSpec(a.shape, lambda i: (0,) * a.ndim)

    weights = (w1e, w1o, sc1, sh1, w2a, w2b, sc2, sh2, w3a, w3b, sc3, sh3)
    return pl.pallas_call(
        conv_stack_kernel,
        out_shape=jax.ShapeDtypeStruct((R, Wf, n_out), jnp.bfloat16),
        grid=(R // r_blk,),
        in_specs=[pl.BlockSpec((r_blk, Wf, K1), lambda i: (i, 0, 0))]
        + [wspec(a) for a in weights],
        out_specs=pl.BlockSpec((r_blk, Wf, n_out), lambda i: (i, 0, 0)),
        compiler_params=pltpu.CompilerParams(
            dimension_semantics=("parallel",),
            vmem_limit_bytes=32 * 1024 * 1024),
    )(xim, *weights)


# ----------------------------------------------------------------------------
# FC kernels: Linear(F -> 128) split over ("parallel","arbitrary") grid, then a
# tiny combine kernel doing bias + sigmoid + Linear(128 -> 32).
# ----------------------------------------------------------------------------
def fc1_kernel(x_ref, w_ref, o_ref, acc_ref):
    k = pl.program_id(1)

    @pl.when(k == 0)
    def _():
        acc_ref[...] = jnp.zeros_like(acc_ref)

    acc_ref[...] += jnp.dot(x_ref[...], w_ref[...],
                            preferred_element_type=jnp.float32)

    @pl.when(k == pl.num_programs(1) - 1)
    def _():
        o_ref[...] = acc_ref[...][None]


def fc2_kernel(hp_ref, b1_ref, w2_ref, b2_ref, o_ref):
    z = jnp.sum(hp_ref[...], axis=0) + b1_ref[...]
    h = 0.5 * jnp.tanh(0.5 * z) + 0.5
    o_ref[...] = (jnp.dot(h, w2_ref[...], preferred_element_type=jnp.float32)
                  + b2_ref[...])


def _largest_tile(total, cap, quantum=128):
    if total <= quantum:
        return total
    cap = max(quantum, (cap // quantum) * quantum)
    best = quantum
    t = quantum
    while t <= min(cap, total):
        if total % t == 0:
            best = t
        t += quantum
    return best


def fc_forward(x, w1, b1, w2, b2, *, f_tile_max=8192, n_split=2):
    Bn, F = x.shape
    Dh = w1.shape[1]
    Do = w2.shape[1]
    if n_split < 1 or F % (n_split * 128) != 0:
        n_split = 1
    Fs = F // n_split
    f_tile = _largest_tile(Fs, f_tile_max)
    n_k = Fs // f_tile

    hp = pl.pallas_call(
        fc1_kernel,
        out_shape=jax.ShapeDtypeStruct((n_split, Bn, Dh), jnp.float32),
        grid=(n_split, n_k),
        in_specs=[
            pl.BlockSpec((Bn, f_tile), lambda j, k: (0, j * n_k + k)),
            pl.BlockSpec((f_tile, Dh), lambda j, k: (j * n_k + k, 0)),
        ],
        out_specs=pl.BlockSpec((1, Bn, Dh), lambda j, k: (j, 0, 0)),
        scratch_shapes=[pltpu.VMEM((Bn, Dh), jnp.float32)],
        compiler_params=pltpu.CompilerParams(
            dimension_semantics=("parallel", "arbitrary"),
            vmem_limit_bytes=32 * 1024 * 1024),
    )(x, w1)

    return pl.pallas_call(
        fc2_kernel,
        out_shape=jax.ShapeDtypeStruct((Bn, Do), jnp.float32),
    )(hp, b1, w2, b2)


# ----------------------------------------------------------------------------
# Host-side parameter packing (done once, outside the forward pass)
# ----------------------------------------------------------------------------
def _pack_layer1(w3, scale, shift):
    # w3: (3, 1, 32).  LHS1[u, m] = x[8u + m - 8]; conv1(8u+2q+j) tap t uses
    # m = 2q + j + t + 7.  Output lanes = q*32 + c (phase-major).
    k = np.asarray(w3, np.float32)[:, 0, :]
    C = k.shape[1]
    We = np.zeros((24, 4 * C), np.float32)
    Wo = np.zeros((24, 4 * C), np.float32)
    for q in range(4):
        for t in range(3):
            We[2 * q + t + 7, q * C:(q + 1) * C] = k[t]
            Wo[2 * q + t + 8, q * C:(q + 1) * C] = k[t]
    sc = np.tile(np.asarray(scale, np.float32).reshape(-1), 4).reshape(1, -1)
    sh = np.tile(np.asarray(shift, np.float32).reshape(-1), 4).reshape(1, -1)
    return (jnp.asarray(We, dtype=jnp.bfloat16),
            jnp.asarray(Wo, dtype=jnp.bfloat16),
            jnp.asarray(sc), jnp.asarray(sh))


def _pack_layer2(w3, scale, shift):
    # w3: (3, 32, 64).  LHS_A = [P1(u-1) | P1(u)], LHS_B = [P1(u) | P1(u+1)];
    # row (b, q, c) holds a1[4u + delta, c].  Output lanes = s*64 + d.
    k = np.asarray(w3, np.float32)
    C, D = k.shape[1], k.shape[2]
    WA = np.zeros((2 * 4 * C, 2 * D), np.float32)
    WB = np.zeros((2 * 4 * C, 2 * D), np.float32)
    for b in range(2):
        for q in range(4):
            r0 = b * 4 * C + q * C
            dA = 4 * b - 4 + q
            dB = 4 * b + q
            for s in range(2):
                tA = dA - 2 * s + 1
                if 0 <= tA <= 2:
                    WA[r0:r0 + C, s * D:(s + 1) * D] = k[tA]
                tB = dB - 2 * s
                if 0 <= tB <= 2:
                    WB[r0:r0 + C, s * D:(s + 1) * D] = k[tB]
    sc = np.tile(np.asarray(scale, np.float32).reshape(-1), 2).reshape(1, -1)
    sh = np.tile(np.asarray(shift, np.float32).reshape(-1), 2).reshape(1, -1)
    return (jnp.asarray(WA, dtype=jnp.bfloat16),
            jnp.asarray(WB, dtype=jnp.bfloat16),
            jnp.asarray(sc), jnp.asarray(sh))


def _pack_layer3(w3, scale, shift):
    # w3: (3, 64, 128).  LHS_A = [P2(u-1) | P2(u)], LHS_B = [P2(u) | P2(u+1)];
    # row (b, s, d) holds a2[2u + eps, d].  Output lanes = channel e.
    k = np.asarray(w3, np.float32)
    D, E = k.shape[1], k.shape[2]
    WA = np.zeros((2 * 2 * D, E), np.float32)
    WB = np.zeros((2 * 2 * D, E), np.float32)
    for b in range(2):
        for s in range(2):
            r0 = b * 2 * D + s * D
            tA = (2 * b - 2 + s) + 1
            if 0 <= tA <= 2:
                WA[r0:r0 + D, :] = k[tA]
            tB = 2 * b + s
            if 0 <= tB <= 2:
                WB[r0:r0 + D, :] = k[tB]
    sc = np.asarray(scale, np.float32).reshape(1, -1)
    sh = np.asarray(shift, np.float32).reshape(1, -1)
    return (jnp.asarray(WA, dtype=jnp.bfloat16),
            jnp.asarray(WB, dtype=jnp.bfloat16),
            jnp.asarray(sc), jnp.asarray(sh))


def pack_conv_params(conv_params):
    (wa, sa, ha), (wb, sb, hb), (wc, sc, hc) = conv_params
    assert wa.shape[1] == 1 and wa.shape[2] == 32
    assert wb.shape[1:] == (32, 64) and wc.shape[1:] == (64, 128)
    return (_pack_layer1(wa, sa, ha),
            _pack_layer2(wb, sb, hb),
            _pack_layer3(wc, sc, hc))


def prepare_fc_params(w1, b1, w2, b2, H, Wf):
    # Permute w1's rows so that the kernel's natural (H, Wf, C) flatten matches
    # PyTorch's (C, H, Wf) flatten; store w1 in bf16 (HBM-bound read).
    C = 128
    F, Dh = w1.shape
    assert F == C * H * Wf
    w1p = np.asarray(w1, np.float32).reshape(C, H, Wf, Dh)
    w1p = w1p.transpose(1, 2, 0, 3).reshape(F, Dh)
    return (jnp.asarray(w1p, dtype=jnp.bfloat16),
            jnp.asarray(b1, dtype=jnp.float32).reshape(1, Dh),
            jnp.asarray(w2, dtype=jnp.float32),
            jnp.asarray(b2, dtype=jnp.float32).reshape(1, -1))


# ----------------------------------------------------------------------------
# Forward-pass glue (only cheap XLA ops on the small raw input / free reshapes)
# ----------------------------------------------------------------------------
def _layer1_im2col(x_nchw):
    # (B, 1, H, W) -> (B*H, W//8, 24) where lane m holds x[8u + m - 8]
    # (zero-padded at the sequence boundaries -> conv padding).
    B, Cin, H, W = x_nchw.shape
    assert Cin == 1 and W % 8 == 0
    R, Wf = B * H, W // 8
    xr = x_nchw.astype(jnp.float32).reshape(R, Wf, 8)
    z = jnp.zeros((R, 1, 8), jnp.float32)
    prev = jnp.concatenate([z, xr[:, :Wf - 1, :]], axis=1)
    nxt = jnp.concatenate([xr[:, 1:, :], z], axis=1)
    return jnp.concatenate([prev, xr, nxt], axis=-1)


def _pick_row_block(R, cap=16):
    for r in range(min(cap, R), 0, -1):
        if R % r == 0:
            return r
    return 1


def pallas_forward(x_nchw, packed_conv, packed_fc, *, row_block_cap=16,
                   f_tile_max=8192):
    B, _, H, W = x_nchw.shape
    R, Wf = B * H, W // 8
    xim = _layer1_im2col(x_nchw)                          # (R, Wf, 24) f32
    r_blk = _pick_row_block(R, row_block_cap)
    conv_out = conv_stack(xim, packed_conv, r_blk)        # (R, Wf, 128) bf16
    flat = conv_out.reshape(B, H * Wf * 128)              # free reshape
    w1p, b1, w2, b2 = packed_fc
    return fc_forward(flat, w1p, b1, w2, b2, f_tile_max=f_tile_max)


# ----------------------------------------------------------------------------
# Pure-JAX f32 reference (NCHW, PyTorch semantics) for correctness checking
# ----------------------------------------------------------------------------
def reference_forward(x_nchw, conv_params, fc_params):
    x = x_nchw.astype(jnp.float32)
    for w3, scale, shift in conv_params:
        B, C, H, W = x.shape
        Cout = w3.shape[2]
        xp = jnp.pad(x, ((0, 0), (0, 0), (0, 0), (1, 1)))
        y = jnp.zeros((B, Cout, H, W), jnp.float32)
        for k in range(3):
            y = y + jnp.einsum('bchw,cd->bdhw', xp[:, :, :, k:k + W], w3[k])
        y = y * scale.reshape(1, Cout, 1, 1) + shift.reshape(1, Cout, 1, 1)
        y = jax.nn.sigmoid(y)
        x = y.reshape(B, Cout, H, W // 2, 2).max(axis=-1)
    B = x.shape[0]
    flat = x.reshape(B, -1)
    w1, b1, w2, b2 = fc_params
    h = jax.nn.sigmoid(flat @ w1 + b1)
    return h @ w2 + b2


# ----------------------------------------------------------------------------
# Deterministic parameter construction (shapes from EEGNet2D.__init__)
# ----------------------------------------------------------------------------
def make_conv_params(key, cin, cout):
    kw, kb = jax.random.split(key)
    # kaiming_normal_, mode='fan_out', nonlinearity='sigmoid' -> gain 1
    std = 1.0 / jnp.sqrt(cout * 3.0)
    w3 = jax.random.normal(kw, (3, cin, cout), jnp.float32) * std
    bias = jax.random.normal(kb, (cout,), jnp.float32) * 0.01
    eps = 1e-5
    bn_scale = 1.0 / jnp.sqrt(1.0 + eps)       # gamma=1, running_var=1
    scale = jnp.full((cout,), bn_scale, jnp.float32)
    shift = bias * bn_scale                    # conv bias folded (mean=0, beta=0)
    return w3, scale, shift


if __name__ == "__main__":
    # Small shapes consistent with the module: NCHW, W divisible by 8.
    B, Cin, H, W = 2, 1, 4, 64
    key = jax.random.PRNGKey(0)
    kx, kc, k1, k2, k3, k4 = jax.random.split(key, 6)

    x = jax.random.normal(kx, (B, Cin, H, W), jnp.float32)

    conv_params = []
    cin = Cin
    for kk, cout in zip(jax.random.split(kc, 3), (32, 64, 128)):
        conv_params.append(make_conv_params(kk, cin, cout))
        cin = cout

    # fc input size = 128 * H * (W // 8) (the hardcoded 204800 in the PyTorch
    # module corresponds to the default 10 x 1280 input; derived from shapes here)
    Wf = W // 8
    F = 128 * H * Wf
    w1 = jax.random.normal(k1, (F, 128), jnp.float32) * 0.01
    b1 = jax.random.normal(k2, (128,), jnp.float32) * 0.01
    w2 = jax.random.normal(k3, (128, 32), jnp.float32) * 0.01
    b2 = jax.random.normal(k4, (32,), jnp.float32) * 0.01

    packed_conv = pack_conv_params(conv_params)
    packed_fc = prepare_fc_params(w1, b1, w2, b2, H, Wf)

    fwd = jax.jit(pallas_forward)
    out = fwd(x, packed_conv, packed_fc)
    out = jax.block_until_ready(out)

    ref = reference_forward(x, conv_params, (w1, b1, w2, b2))
    assert out.shape == (B, 32), out.shape
    if not jnp.allclose(out, ref, atol=2e-3, rtol=2e-3):
        max_err = float(jnp.max(jnp.abs(out - ref)))
        raise SystemExit(f"mismatch vs reference, max abs err = {max_err}")

    print("KERNEL_OK")
</pallas_src>

<mosaic_0001>
module attributes {stable_mosaic.version = 11 : i64} {
  func.func @conv_stack_kernel(%arg0: i32, %arg1: memref<8x8x24xf32, #tpu.memory_space<vmem>>, %arg2: memref<24x128xbf16, #tpu.memory_space<vmem>>, %arg3: memref<24x128xbf16, #tpu.memory_space<vmem>>, %arg4: memref<1x128xf32, #tpu.memory_space<vmem>>, %arg5: memref<1x128xf32, #tpu.memory_space<vmem>>, %arg6: memref<256x128xbf16, #tpu.memory_space<vmem>>, %arg7: memref<256x128xbf16, #tpu.memory_space<vmem>>, %arg8: memref<1x128xf32, #tpu.memory_space<vmem>>, %arg9: memref<1x128xf32, #tpu.memory_space<vmem>>, %arg10: memref<256x128xbf16, #tpu.memory_space<vmem>>, %arg11: memref<256x128xbf16, #tpu.memory_space<vmem>>, %arg12: memref<1x128xf32, #tpu.memory_space<vmem>>, %arg13: memref<1x128xf32, #tpu.memory_space<vmem>>, %arg14: memref<8x8x128xbf16, #tpu.memory_space<vmem>>) attributes {dimension_semantics = [#tpu.dimension_semantics<parallel>], iteration_bounds = array<i64: 1>, scalar_prefetch = 0 : i64, scratch_operands = 0 : i64, tpu.core_type = #tpu.core_type<tc>, window_params = [{transform_indices = @transform_0, window_bounds = array<i64: 8, 8, 24>}, {pipeline_mode = #tpu.pipeline_mode<synchronous>, transform_indices = @transform_1, window_bounds = array<i64: 24, 128>}, {pipeline_mode = #tpu.pipeline_mode<synchronous>, transform_indices = @transform_2, window_bounds = array<i64: 24, 128>}, {pipeline_mode = #tpu.pipeline_mode<synchronous>, transform_indices = @transform_3, window_bounds = array<i64: 1, 128>}, {pipeline_mode = #tpu.pipeline_mode<synchronous>, transform_indices = @transform_4, window_bounds = array<i64: 1, 128>}, {pipeline_mode = #tpu.pipeline_mode<synchronous>, transform_indices = @transform_5, window_bounds = array<i64: 256, 128>}, {pipeline_mode = #tpu.pipeline_mode<synchronous>, transform_indices = @transform_6, window_bounds = array<i64: 256, 128>}, {pipeline_mode = #tpu.pipeline_mode<synchronous>, transform_indices = @transform_7, window_bounds = array<i64: 1, 128>}, {pipeline_mode = #tpu.pipeline_mode<synchronous>, transform_indices = @transform_8, window_bounds = array<i64: 1, 128>}, {pipeline_mode = #tpu.pipeline_mode<synchronous>, transform_indices = @transform_9, window_bounds = array<i64: 256, 128>}, {pipeline_mode = #tpu.pipeline_mode<synchronous>, transform_indices = @transform_10, window_bounds = array<i64: 256, 128>}, {pipeline_mode = #tpu.pipeline_mode<synchronous>, transform_indices = @transform_11, window_bounds = array<i64: 1, 128>}, {pipeline_mode = #tpu.pipeline_mode<synchronous>, transform_indices = @transform_12, window_bounds = array<i64: 1, 128>}, {transform_indices = @transform_13, window_bounds = array<i64: 8, 8, 128>}]} {
    %c0 = arith.constant 0 : index
    %c0_0 = arith.constant 0 : index
    %c0_1 = arith.constant 0 : index
    %0 = vector.load %arg1[%c0, %c0_0, %c0_1] : memref<8x8x24xf32, #tpu.memory_space<vmem>>, vector<8x8x24xf32>
    %1 = arith.truncf %0 : vector<8x8x24xf32> to vector<8x8x24xbf16>
    %2 = vector.shape_cast %1 : vector<8x8x24xbf16> to vector<64x24xbf16>
    %c0_2 = arith.constant 0 : index
    %c0_3 = arith.constant 0 : index
    %3 = vector.load %arg2[%c0_2, %c0_3] : memref<24x128xbf16, #tpu.memory_space<vmem>>, vector<24x128xbf16>
    %cst = arith.constant dense<0.000000e+00> : vector<64x128xf32>
    %4 = tpu.matmul %2, %3, %cst {dimension_numbers = #tpu.dot_dimension_numbers<[1], [0], [0], [1], [0, 0, 1, 1], [], []>} : vector<64x24xbf16>, vector<24x128xbf16>, vector<64x128xf32> -> vector<64x128xf32>
    %5 = vector.shape_cast %4 : vector<64x128xf32> to vector<8x8x128xf32>
    %c0_4 = arith.constant 0 : index
    %c0_5 = arith.constant 0 : index
    %6 = vector.load %arg3[%c0_4, %c0_5] : memref<24x128xbf16, #tpu.memory_space<vmem>>, vector<24x128xbf16>
    %cst_6 = arith.constant dense<0.000000e+00> : vector<64x128xf32>
    %7 = tpu.matmul %2, %6, %cst_6 {dimension_numbers = #tpu.dot_dimension_numbers<[1], [0], [0], [1], [0, 0, 1, 1], [], []>} : vector<64x24xbf16>, vector<24x128xbf16>, vector<64x128xf32> -> vector<64x128xf32>
    %8 = vector.shape_cast %7 : vector<64x128xf32> to vector<8x8x128xf32>
    %c0_7 = arith.constant 0 : index
    %c0_8 = arith.constant 0 : index
    %9 = vector.load %arg4[%c0_7, %c0_8] : memref<1x128xf32, #tpu.memory_space<vmem>>, vector<1x128xf32>
    %10 = vector.shape_cast %9 : vector<1x128xf32> to vector<1x1x128xf32>
    %c0_9 = arith.constant 0 : index
    %c0_10 = arith.constant 0 : index
    %11 = vector.load %arg5[%c0_9, %c0_10] : memref<1x128xf32, #tpu.memory_space<vmem>>, vector<1x128xf32>
    %12 = vector.shape_cast %11 : vector<1x128xf32> to vector<1x1x128xf32>
    %13 = vector.broadcast %10 : vector<1x1x128xf32> to vector<8x8x128xf32>
    %14 = arith.mulf %5, %13 : vector<8x8x128xf32>
    %15 = vector.broadcast %12 : vector<1x1x128xf32> to vector<8x8x128xf32>
    %16 = arith.addf %14, %15 : vector<8x8x128xf32>
    %cst_11 = arith.constant 5.000000e-01 : f32
    %17 = vector.broadcast %cst_11 : f32 to vector<8x8x128xf32>
    %18 = arith.mulf %17, %16 : vector<8x8x128xf32>
    %19 = math.tanh %18 : vector<8x8x128xf32>
    %cst_12 = arith.constant 5.000000e-01 : f32
    %20 = vector.broadcast %cst_12 : f32 to vector<8x8x128xf32>
    %21 = arith.mulf %20, %19 : vector<8x8x128xf32>
    %cst_13 = arith.constant 5.000000e-01 : f32
    %22 = vector.broadcast %cst_13 : f32 to vector<8x8x128xf32>
    %23 = arith.addf %21, %22 : vector<8x8x128xf32>
    %24 = vector.broadcast %10 : vector<1x1x128xf32> to vector<8x8x128xf32>
    %25 = arith.mulf %8, %24 : vector<8x8x128xf32>
    %26 = vector.broadcast %12 : vector<1x1x128xf32> to vector<8x8x128xf32>
    %27 = arith.addf %25, %26 : vector<8x8x128xf32>
    %cst_14 = arith.constant 5.000000e-01 : f32
    %28 = vector.broadcast %cst_14 : f32 to vector<8x8x128xf32>
    %29 = arith.mulf %28, %27 : vector<8x8x128xf32>
    %30 = math.tanh %29 : vector<8x8x128xf32>
    %cst_15 = arith.constant 5.000000e-01 : f32
    %31 = vector.broadcast %cst_15 : f32 to vector<8x8x128xf32>
    %32 = arith.mulf %31, %30 : vector<8x8x128xf32>
    %cst_16 = arith.constant 5.000000e-01 : f32
    %33 = vector.broadcast %cst_16 : f32 to vector<8x8x128xf32>
    %34 = arith.addf %32, %33 : vector<8x8x128xf32>
    %35 = arith.maximumf %23, %34 : vector<8x8x128xf32>
    %36 = arith.truncf %35 : vector<8x8x128xf32> to vector<8x8x128xbf16>
    %cst_17 = arith.constant 0.000000e+00 : bf16
    %37 = vector.broadcast %cst_17 : bf16 to vector<8x1x128xbf16>
    %38 = vector.extract_strided_slice %36 {offsets = [0, 0, 0], sizes = [8, 7, 128], strides = [1, 1, 1]} : vector<8x8x128xbf16> to vector<8x7x128xbf16>
    %39 = tpu.concatenate %37, %38 in 1 : vector<8x1x128xbf16>, vector<8x7x128xbf16> -> vector<8x8x128xbf16>
    %40 = vector.extract_strided_slice %36 {offsets = [0, 1, 0], sizes = [8, 7, 128], strides = [1, 1, 1]} : vector<8x8x128xbf16> to vector<8x7x128xbf16>
    %41 = tpu.concatenate %40, %37 in 1 : vector<8x7x128xbf16>, vector<8x1x128xbf16> -> vector<8x8x128xbf16>
    %42 = tpu.concatenate %39, %36 in 2 : vector<8x8x128xbf16>, vector<8x8x128xbf16> -> vector<8x8x256xbf16>
    %43 = vector.shape_cast %42 : vector<8x8x256xbf16> to vector<64x256xbf16>
    %c0_18 = arith.constant 0 : index
    %c0_19 = arith.constant 0 : index
    %44 = vector.load %arg6[%c0_18, %c0_19] : memref<256x128xbf16, #tpu.memory_space<vmem>>, vector<256x128xbf16>
    %cst_20 = arith.constant dense<0.000000e+00> : vector<64x128xf32>
    %45 = tpu.matmul %43, %44, %cst_20 {dimension_numbers = #tpu.dot_dimension_numbers<[1], [0], [0], [1], [0, 0, 1, 1], [], []>} : vector<64x256xbf16>, vector<256x128xbf16>, vector<64x128xf32> -> vector<64x128xf32>
    %46 = vector.shape_cast %45 : vector<64x128xf32> to vector<8x8x128xf32>
    %47 = tpu.concatenate %36, %41 in 2 : vector<8x8x128xbf16>, vector<8x8x128xbf16> -> vector<8x8x256xbf16>
    %48 = vector.shape_cast %47 : vector<8x8x256xbf16> to vector<64x256xbf16>
    %c0_21 = arith.constant 0 : index
    %c0_22 = arith.constant 0 : index
    %49 = vector.load %arg7[%c0_21, %c0_22] : memref<256x128xbf16, #tpu.memory_space<vmem>>, vector<256x128xbf16>
    %cst_23 = arith.constant dense<0.000000e+00> : vector<64x128xf32>
    %50 = tpu.matmul %48, %49, %cst_23 {dimension_numbers = #tpu.dot_dimension_numbers<[1], [0], [0], [1], [0, 0, 1, 1], [], []>} : vector<64x256xbf16>, vector<256x128xbf16>, vector<64x128xf32> -> vector<64x128xf32>
    %51 = vector.shape_cast %50 : vector<64x128xf32> to vector<8x8x128xf32>
    %c0_24 = arith.constant 0 : index
    %c0_25 = arith.constant 0 : index
    %52 = vector.load %arg8[%c0_24, %c0_25] : memref<1x128xf32, #tpu.memory_space<vmem>>, vector<1x128xf32>
    %53 = vector.shape_cast %52 : vector<1x128xf32> to vector<1x1x128xf32>
    %c0_26 = arith.constant 0 : index
    %c0_27 = arith.constant 0 : index
    %54 = vector.load %arg9[%c0_26, %c0_27] : memref<1x128xf32, #tpu.memory_space<vmem>>, vector<1x128xf32>
    %55 = vector.shape_cast %54 : vector<1x128xf32> to vector<1x1x128xf32>
    %56 = vector.broadcast %53 : vector<1x1x128xf32> to vector<8x8x128xf32>
    %57 = arith.mulf %46, %56 : vector<8x8x128xf32>
    %58 = vector.broadcast %55 : vector<1x1x128xf32> to vector<8x8x128xf32>
    %59 = arith.addf %57, %58 : vector<8x8x128xf32>
    %cst_28 = arith.constant 5.000000e-01 : f32
    %60 = vector.broadcast %cst_28 : f32 to vector<8x8x128xf32>
    %61 = arith.mulf %60, %59 : vector<8x8x128xf32>
    %62 = math.tanh %61 : vector<8x8x128xf32>
    %cst_29 = arith.constant 5.000000e-01 : f32
    %63 = vector.broadcast %cst_29 : f32 to vector<8x8x128xf32>
    %64 = arith.mulf %63, %62 : vector<8x8x128xf32>
    %cst_30 = arith.constant 5.000000e-01 : f32
    %65 = vector.broadcast %cst_30 : f32 to vector<8x8x128xf32>
    %66 = arith.addf %64, %65 : vector<8x8x128xf32>
    %67 = vector.broadcast %53 : vector<1x1x128xf32> to vector<8x8x128xf32>
    %68 = arith.mulf %51, %67 : vector<8x8x128xf32>
    %69 = vector.broadcast %55 : vector<1x1x128xf32> to vector<8x8x128xf32>
    %70 = arith.addf %68, %69 : vector<8x8x128xf32>
    %cst_31 = arith.constant 5.000000e-01 : f32
    %71 = vector.broadcast %cst_31 : f32 to vector<8x8x128xf32>
    %72 = arith.mulf %71, %70 : vector<8x8x128xf32>
    %73 = math.tanh %72 : vector<8x8x128xf32>
    %cst_32 = arith.constant 5.000000e-01 : f32
    %74 = vector.broadcast %cst_32 : f32 to vector<8x8x128xf32>
    %75 = arith.mulf %74, %73 : vector<8x8x128xf32>
    %cst_33 = arith.constant 5.000000e-01 : f32
    %76 = vector.broadcast %cst_33 : f32 to vector<8x8x128xf32>
    %77 = arith.addf %75, %76 : vector<8x8x128xf32>
    %78 = arith.maximumf %66, %77 : vector<8x8x128xf32>
    %79 = arith.truncf %78 : vector<8x8x128xf32> to vector<8x8x128xbf16>
    %cst_34 = arith.constant 0.000000e+00 : bf16
    %80 = vector.broadcast %cst_34 : bf16 to vector<8x1x128xbf16>
    %81 = vector.extract_strided_slice %79 {offsets = [0, 0, 0], sizes = [8, 7, 128], strides = [1, 1, 1]} : vector<8x8x128xbf16> to vector<8x7x128xbf16>
    %82 = tpu.concatenate %80, %81 in 1 : vector<8x1x128xbf16>, vector<8x7x128xbf16> -> vector<8x8x128xbf16>
    %83 = vector.extract_strided_slice %79 {offsets = [0, 1, 0], sizes = [8, 7, 128], strides = [1, 1, 1]} : vector<8x8x128xbf16> to vector<8x7x128xbf16>
    %84 = tpu.concatenate %83, %80 in 1 : vector<8x7x128xbf16>, vector<8x1x128xbf16> -> vector<8x8x128xbf16>
    %85 = tpu.concatenate %82, %79 in 2 : vector<8x8x128xbf16>, vector<8x8x128xbf16> -> vector<8x8x256xbf16>
    %86 = vector.shape_cast %85 : vector<8x8x256xbf16> to vector<64x256xbf16>
    %c0_35 = arith.constant 0 : index
    %c0_36 = arith.constant 0 : index
    %87 = vector.load %arg10[%c0_35, %c0_36] : memref<256x128xbf16, #tpu.memory_space<vmem>>, vector<256x128xbf16>
    %cst_37 = arith.constant dense<0.000000e+00> : vector<64x128xf32>
    %88 = tpu.matmul %86, %87, %cst_37 {dimension_numbers = #tpu.dot_dimension_numbers<[1], [0], [0], [1], [0, 0, 1, 1], [], []>} : vector<64x256xbf16>, vector<256x128xbf16>, vector<64x128xf32> -> vector<64x128xf32>
    %89 = vector.shape_cast %88 : vector<64x128xf32> to vector<8x8x128xf32>
    %90 = tpu.concatenate %79, %84 in 2 : vector<8x8x128xbf16>, vector<8x8x128xbf16> -> vector<8x8x256xbf16>
    %91 = vector.shape_cast %90 : vector<8x8x256xbf16> to vector<64x256xbf16>
    %c0_38 = arith.constant 0 : index
    %c0_39 = arith.constant 0 : index
    %92 = vector.load %arg11[%c0_38, %c0_39] : memref<256x128xbf16, #tpu.memory_space<vmem>>, vector<256x128xbf16>
    %cst_40 = arith.constant dense<0.000000e+00> : vector<64x128xf32>
    %93 = tpu.matmul %91, %92, %cst_40 {dimension_numbers = #tpu.dot_dimension_numbers<[1], [0], [0], [1], [0, 0, 1, 1], [], []>} : vector<64x256xbf16>, vector<256x128xbf16>, vector<64x128xf32> -> vector<64x128xf32>
    %94 = vector.shape_cast %93 : vector<64x128xf32> to vector<8x8x128xf32>
    %c0_41 = arith.constant 0 : index
    %c0_42 = arith.constant 0 : index
    %95 = vector.load %arg12[%c0_41, %c0_42] : memref<1x128xf32, #tpu.memory_space<vmem>>, vector<1x128xf32>
    %96 = vector.shape_cast %95 : vector<1x128xf32> to vector<1x1x128xf32>
    %c0_43 = arith.constant 0 : index
    %c0_44 = arith.constant 0 : index
    %97 = vector.load %arg13[%c0_43, %c0_44] : memref<1x128xf32, #tpu.memory_space<vmem>>, vector<1x128xf32>
    %98 = vector.shape_cast %97 : vector<1x128xf32> to vector<1x1x128xf32>
    %99 = vector.broadcast %96 : vector<1x1x128xf32> to vector<8x8x128xf32>
    %100 = arith.mulf %89, %99 : vector<8x8x128xf32>
    %101 = vector.broadcast %98 : vector<1x1x128xf32> to vector<8x8x128xf32>
    %102 = arith.addf %100, %101 : vector<8x8x128xf32>
    %cst_45 = arith.constant 5.000000e-01 : f32
    %103 = vector.broadcast %cst_45 : f32 to vector<8x8x128xf32>
    %104 = arith.mulf %103, %102 : vector<8x8x128xf32>
    %105 = math.tanh %104 : vector<8x8x128xf32>
    %cst_46 = arith.constant 5.000000e-01 : f32
    %106 = vector.broadcast %cst_46 : f32 to vector<8x8x128xf32>
    %107 = arith.mulf %106, %105 : vector<8x8x128xf32>
    %cst_47 = arith.constant 5.000000e-01 : f32
    %108 = vector.broadcast %cst_47 : f32 to vector<8x8x128xf32>
    %109 = arith.addf %107, %108 : vector<8x8x128xf32>
    %110 = vector.broadcast %96 : vector<1x1x128xf32> to vector<8x8x128xf32>
    %111 = arith.mulf %94, %110 : vector<8x8x128xf32>
    %112 = vector.broadcast %98 : vector<1x1x128xf32> to vector<8x8x128xf32>
    %113 = arith.addf %111, %112 : vector<8x8x128xf32>
    %cst_48 = arith.constant 5.000000e-01 : f32
    %114 = vector.broadcast %cst_48 : f32 to vector<8x8x128xf32>
    %115 = arith.mulf %114, %113 : vector<8x8x128xf32>
    %116 = math.tanh %115 : vector<8x8x128xf32>
    %cst_49 = arith.constant 5.000000e-01 : f32
    %117 = vector.broadcast %cst_49 : f32 to vector<8x8x128xf32>
    %118 = arith.mulf %117, %116 : vector<8x8x128xf32>
    %cst_50 = arith.constant 5.000000e-01 : f32
    %119 = vector.broadcast %cst_50 : f32 to vector<8x8x128xf32>
    %120 = arith.addf %118, %119 : vector<8x8x128xf32>
    %121 = arith.maximumf %109, %120 : vector<8x8x128xf32>
    %122 = arith.truncf %121 : vector<8x8x128xf32> to vector<8x8x128xbf16>
    %c0_51 = arith.constant 0 : index
    %c0_52 = arith.constant 0 : index
    %c0_53 = arith.constant 0 : index
    %123 = vector.load %arg14[%c0_51, %c0_52, %c0_53] : memref<8x8x128xbf16, #tpu.memory_space<vmem>>, vector<8x8x128xbf16>
    tpu.vector_store %arg14[%c0_51, %c0_52, %c0_53], %122 {strides = array<i32>} : memref<8x8x128xbf16, #tpu.memory_space<vmem>>, vector<8x8x128xbf16>,
    return
  }
  func.func @transform_0(%arg0: i32) -> (i32, i32, i32) {
    %c0_i32 = arith.constant 0 : i32
    %c0_i32_0 = arith.constant 0 : i32
    %c0_i32_1 = arith.constant 0 : i32
    return %arg0, %c0_i32, %c0_i32_0 : i32, i32, i32
  }
  func.func @transform_1(%arg0: i32) -> (i32, i32) {
    %c0_i32 = arith.constant 0 : i32
    %c0_i32_0 = arith.constant 0 : i32
    %c0_i32_1 = arith.constant 0 : i32
    return %c0_i32, %c0_i32_0 : i32, i32
  }
  func.func @transform_2(%arg0: i32) -> (i32, i32) {
    %c0_i32 = arith.constant 0 : i32
    %c0_i32_0 = arith.constant 0 : i32
    %c0_i32_1 = arith.constant 0 : i32
    return %c0_i32, %c0_i32_0 : i32, i32
  }
  func.func @transform_3(%arg0: i32) -> (i32, i32) {
    %c0_i32 = arith.constant 0 : i32
    %c0_i32_0 = arith.constant 0 : i32
    %c0_i32_1 = arith.constant 0 : i32
    return %c0_i32, %c0_i32_0 : i32, i32
  }
  func.func @transform_4(%arg0: i32) -> (i32, i32) {
    %c0_i32 = arith.constant 0 : i32
    %c0_i32_0 = arith.constant 0 : i32
    %c0_i32_1 = arith.constant 0 : i32
    return %c0_i32, %c0_i32_0 : i32, i32
  }
  func.func @transform_5(%arg0: i32) -> (i32, i32) {
    %c0_i32 = arith.constant 0 : i32
    %c0_i32_0 = arith.constant 0 : i32
    %c0_i32_1 = arith.constant 0 : i32
    return %c0_i32, %c0_i32_0 : i32, i32
  }
  func.func @transform_6(%arg0: i32) -> (i32, i32) {
    %c0_i32 = arith.constant 0 : i32
    %c0_i32_0 = arith.constant 0 : i32
    %c0_i32_1 = arith.constant 0 : i32
    return %c0_i32, %c0_i32_0 : i32, i32
  }
  func.func @transform_7(%arg0: i32) -> (i32, i32) {
    %c0_i32 = arith.constant 0 : i32
    %c0_i32_0 = arith.constant 0 : i32
    %c0_i32_1 = arith.constant 0 : i32
    return %c0_i32, %c0_i32_0 : i32, i32
  }
  func.func @transform_8(%arg0: i32) -> (i32, i32) {
    %c0_i32 = arith.constant 0 : i32
    %c0_i32_0 = arith.constant 0 : i32
    %c0_i32_1 = arith.constant 0 : i32
    return %c0_i32, %c0_i32_0 : i32, i32
  }
  func.func @transform_9(%arg0: i32) -> (i32, i32) {
    %c0_i32 = arith.constant 0 : i32
    %c0_i32_0 = arith.constant 0 : i32
    %c0_i32_1 = arith.constant 0 : i32
    return %c0_i32, %c0_i32_0 : i32, i32
  }
  func.func @transform_10(%arg0: i32) -> (i32, i32) {
    %c0_i32 = arith.constant 0 : i32
    %c0_i32_0 = arith.constant 0 : i32
    %c0_i32_1 = arith.constant 0 : i32
    return %c0_i32, %c0_i32_0 : i32, i32
  }
  func.func @transform_11(%arg0: i32) -> (i32, i32) {
    %c0_i32 = arith.constant 0 : i32
    %c0_i32_0 = arith.constant 0 : i32
    %c0_i32_1 = arith.constant 0 : i32
    return %c0_i32, %c0_i32_0 : i32, i32
  }
  func.func @transform_12(%arg0: i32) -> (i32, i32) {
    %c0_i32 = arith.constant 0 : i32
    %c0_i32_0 = arith.constant 0 : i32
    %c0_i32_1 = arith.constant 0 : i32
    return %c0_i32, %c0_i32_0 : i32, i32
  }
  func.func @transform_13(%arg0: i32) -> (i32, i32, i32) {
    %c0_i32 = arith.constant 0 : i32
    %c0_i32_0 = arith.constant 0 : i32
    %c0_i32_1 = arith.constant 0 : i32
    return %arg0, %c0_i32, %c0_i32_0 : i32, i32, i32
  }
}

module attributes {stable_mosaic.version = 11 : i64} {
  func.func @fc1_kernel(%arg0: i32, %arg1: i32, %arg2: memref<2x2048xbf16, #tpu.memory_space<vmem>>, %arg3: memref<2048x128xbf16, #tpu.memory_space<vmem>>, %arg4: memref<1x2x128xf32, #tpu.memory_space<vmem>>, %arg5: memref<2x128xf32, #tpu.memory_space<vmem>>) attributes {dimension_semantics = [#tpu.dimension_semantics<parallel>, #tpu.dimension_semantics<arbitrary>], iteration_bounds = array<i64: 2, 1>, scalar_prefetch = 0 : i64, scratch_operands = 1 : i64, tpu.core_type = #tpu.core_type<tc>, window_params = [{transform_indices = @transform_0, window_bounds = array<i64: 2, 2048>}, {transform_indices = @transform_1, window_bounds = array<i64: 2048, 128>}, {transform_indices = @transform_2, window_bounds = array<i64: 1, 2, 128>}]} {
    %c0_i32 = arith.constant 0 : i32
    %0 = arith.cmpi eq, %arg1, %c0_i32 : i32
    %1 = arith.extui %0 : i1 to i32
    %c0_i32_0 = arith.constant 0 : i32
    %2 = arith.cmpi ne, %1, %c0_i32_0 : i32
    scf.if %2 {
      %cst_10 = arith.constant 0.000000e+00 : f32
      %12 = vector.broadcast %cst_10 : f32 to vector<2x128xf32>
      %c0_11 = arith.constant 0 : index
      %c0_12 = arith.constant 0 : index
      %13 = vector.load %arg5[%c0_11, %c0_12] : memref<2x128xf32, #tpu.memory_space<vmem>>, vector<2x128xf32>
      tpu.vector_store %arg5[%c0_11, %c0_12], %12 {strides = array<i32>} : memref<2x128xf32, #tpu.memory_space<vmem>>, vector<2x128xf32>,
    } else {
    }
    %c0 = arith.constant 0 : index
    %c0_1 = arith.constant 0 : index
    %3 = vector.load %arg5[%c0, %c0_1] : memref<2x128xf32, #tpu.memory_space<vmem>>, vector<2x128xf32>
    %c0_2 = arith.constant 0 : index
    %c0_3 = arith.constant 0 : index
    %4 = vector.load %arg2[%c0_2, %c0_3] : memref<2x2048xbf16, #tpu.memory_space<vmem>>, vector<2x2048xbf16>
    %c0_4 = arith.constant 0 : index
    %c0_5 = arith.constant 0 : index
    %5 = vector.load %arg3[%c0_4, %c0_5] : memref<2048x128xbf16, #tpu.memory_space<vmem>>, vector<2048x128xbf16>
    %cst = arith.constant dense<0.000000e+00> : vector<2x128xf32>
    %6 = tpu.matmul %4, %5, %cst {dimension_numbers = #tpu.dot_dimension_numbers<[1], [0], [0], [1], [0, 0, 1, 1], [], []>} : vector<2x2048xbf16>, vector<2048x128xbf16>, vector<2x128xf32> -> vector<2x128xf32>
    %7 = arith.addf %3, %6 : vector<2x128xf32>
    %c0_6 = arith.constant 0 : index
    %c0_7 = arith.constant 0 : index
    %8 = vector.load %arg5[%c0_6, %c0_7] : memref<2x128xf32, #tpu.memory_space<vmem>>, vector<2x128xf32>
    tpu.vector_store %arg5[%c0_6, %c0_7], %7 {strides = array<i32>} : memref<2x128xf32, #tpu.memory_space<vmem>>, vector<2x128xf32>,
    %c0_i32_8 = arith.constant 0 : i32
    %9 = arith.cmpi eq, %arg1, %c0_i32_8 : i32
    %10 = arith.extui %9 : i1 to i32
    %c0_i32_9 = arith.constant 0 : i32
    %11 = arith.cmpi ne, %10, %c0_i32_9 : i32
    scf.if %11 {
      %c0_10 = arith.constant 0 : index
      %c0_11 = arith.constant 0 : index
      %12 = vector.load %arg5[%c0_10, %c0_11] : memref<2x128xf32, #tpu.memory_space<vmem>>, vector<2x128xf32>
      %13 = vector.shape_cast %12 : vector<2x128xf32> to vector<1x2x128xf32>
      %c0_12 = arith.constant 0 : index
      %c0_13 = arith.constant 0 : index
      %c0_14 = arith.constant 0 : index
      %14 = vector.load %arg4[%c0_12, %c0_13, %c0_14] : memref<1x2x128xf32, #tpu.memory_space<vmem>>, vector<1x2x128xf32>
      tpu.vector_store %arg4[%c0_12, %c0_13, %c0_14], %13 {strides = array<i32>} : memref<1x2x128xf32, #tpu.memory_space<vmem>>, vector<1x2x128xf32>,
    } else {
    }
    return
  }
  func.func @transform_0(%arg0: i32, %arg1: i32) -> (i32, i32) {
    %c1_i32 = arith.constant 1 : i32
    %0 = arith.muli %arg0, %c1_i32 : i32
    %1 = arith.addi %0, %arg1 : i32
    %c0_i32 = arith.constant 0 : i32
    %c0_i32_0 = arith.constant 0 : i32
    return %c0_i32, %1 : i32, i32
  }
  func.func @transform_1(%arg0: i32, %arg1: i32) -> (i32, i32) {
    %c1_i32 = arith.constant 1 : i32
    %0 = arith.muli %arg0, %c1_i32 : i32
    %1 = arith.addi %0, %arg1 : i32
    %c0_i32 = arith.constant 0 : i32
    %c0_i32_0 = arith.constant 0 : i32
    return %1, %c0_i32 : i32, i32
  }
  func.func @transform_2(%arg0: i32, %arg1: i32) -> (i32, i32, i32) {
    %c0_i32 = arith.constant 0 : i32
    %c0_i32_0 = arith.constant 0 : i32
    %c0_i32_1 = arith.constant 0 : i32
    return %arg0, %c0_i32, %c0_i32_0 : i32, i32, i32
  }
}

module attributes {stable_mosaic.version = 11 : i64} {
  func.func @fc2_kernel(%arg0: memref<2x2x128xf32, #tpu.memory_space<vmem>>, %arg1: memref<1x128xf32, #tpu.memory_space<vmem>>, %arg2: memref<128x32xf32, #tpu.memory_space<vmem>>, %arg3: memref<1x32xf32, #tpu.memory_space<vmem>>, %arg4: memref<2x32xf32, #tpu.memory_space<vmem>>) attributes {dimension_semantics = [], scalar_prefetch = 0 : i64, scratch_operands = 0 : i64, tpu.core_type = #tpu.core_type<tc>} {
    %c0 = arith.constant 0 : index
    %c0_0 = arith.constant 0 : index
    %c0_1 = arith.constant 0 : index
    %0 = vector.load %arg0[%c0, %c0_0, %c0_1] : memref<2x2x128xf32, #tpu.memory_space<vmem>>, vector<2x2x128xf32>
    %cst = arith.constant dense<0.000000e+00> : vector<2x128xf32>
    %1 = vector.multi_reduction <add>, %0, %cst [0] : vector<2x2x128xf32> to vector<2x128xf32>
    %c0_2 = arith.constant 0 : index
    %c0_3 = arith.constant 0 : index
    %2 = vector.load %arg1[%c0_2, %c0_3] : memref<1x128xf32, #tpu.memory_space<vmem>>, vector<1x128xf32>
    %3 = vector.broadcast %2 : vector<1x128xf32> to vector<2x128xf32>
    %4 = arith.addf %1, %3 : vector<2x128xf32>
    %cst_4 = arith.constant 5.000000e-01 : f32
    %5 = vector.broadcast %cst_4 : f32 to vector<2x128xf32>
    %6 = arith.mulf %5, %4 : vector<2x128xf32>
    %7 = math.tanh %6 : vector<2x128xf32>
    %cst_5 = arith.constant 5.000000e-01 : f32
    %8 = vector.broadcast %cst_5 : f32 to vector<2x128xf32>
    %9 = arith.mulf %8, %7 : vector<2x128xf32>
    %cst_6 = arith.constant 5.000000e-01 : f32
    %10 = vector.broadcast %cst_6 : f32 to vector<2x128xf32>
    %11 = arith.addf %9, %10 : vector<2x128xf32>
    %c0_7 = arith.constant 0 : index
    %c0_8 = arith.constant 0 : index
    %12 = vector.load %arg2[%c0_7, %c0_8] : memref<128x32xf32, #tpu.memory_space<vmem>>, vector<128x32xf32>
    %cst_9 = arith.constant dense<0.000000e+00> : vector<2x32xf32>
    %13 = tpu.matmul %11, %12, %cst_9 {dimension_numbers = #tpu.dot_dimension_numbers<[1], [0], [0], [1], [0, 0, 1, 1], [], []>} : vector<2x128xf32>, vector<128x32xf32>, vector<2x32xf32> -> vector<2x32xf32>
    %c0_10 = arith.constant 0 : index
    %c0_11 = arith.constant 0 : index
    %14 = vector.load %arg3[%c0_10, %c0_11] : memref<1x32xf32, #tpu.memory_space<vmem>>, vector<1x32xf32>
    %15 = vector.broadcast %14 : vector<1x32xf32> to vector<2x32xf32>
    %16 = arith.addf %13, %15 : vector<2x32xf32>
    %c0_12 = arith.constant 0 : index
    %c0_13 = arith.constant 0 : index
    %17 = vector.load %arg4[%c0_12, %c0_13] : memref<2x32xf32, #tpu.memory_space<vmem>>, vector<2x32xf32>
    tpu.vector_store %arg4[%c0_12, %c0_13], %16 {strides = array<i32>} : memref<2x32xf32, #tpu.memory_space<vmem>>, vector<2x32xf32>,
    return
  }
}

</mosaic_0001>

<llo_original>
// kernel: pallas_forward.5
$region0: #{pallas_forward.5}
  #allocation0 [shape = 'u32[]', space=smem, size = 0x4, offset = 0x4, fixed_abs, tag = 'smem constant byte address 0x4 - core index']
  #allocation1 [shape = 'u32[144,128]{1,0:T(1,128)}', space=vmem, size = 0x12000, scoped, tag = 'internal scratch']
  %s0 = inlined_call_operand.vmem [shape: f32[2,2,128], index: 0, kind: input, shape index: {}]
  %s1 = inlined_call_operand.vmem [shape: f32[1,128], index: 1, kind: input, shape index: {}]
  %s2 = inlined_call_operand.vmem [shape: f32[128,32], index: 2, kind: input, shape index: {}]
  %s3 = inlined_call_operand.vmem [shape: f32[1,32], index: 3, kind: input, shape index: {}]
  %s4 = inlined_call_operand.hbm [shape: f32[2,32], index: 4, kind: output, shape index: {}]
  %s5 = sld [smem:[#allocation0]]
  $region26: #{pallas_forward.5} parent=0
    _
  %s7 = ssub.s32 1, %s5
  %s8 = scalar_select 0, %s7, %s5
  $region1: #{pallas_forward.5} parent=0
    #allocation2 [shape = 'u8[1024]{0}', space=vmem, size = 0x400, scoped, tag = 'output window, operand 0, single buffered']
    #allocation3 [shape = 's32[1]{0}', space=sflag, size = 0x4, scoped, tag = 'scoped memory for pallas_forward.5']
    %9 = vsyncpa [#allocation3], 0
    // Predicated region
    $region2: #{pallas_forward.5} parent=1 // pred_check
      _
    $region3: #{pallas_forward.5} parent=1 // pred_check_branch
      %11 = sbr.rel (0) target = $region5
    $region4: #{pallas_forward.5} parent=1 // pred_region
      _
    $region5: #{pallas_forward.5} parent=1 // pred_fallthru
      _
    // Predicated region
    $region6: #{pallas_forward.5} parent=1 // pred_check
      _
    $region7: #{pallas_forward.5} parent=1 // pred_check_branch
      %13 = sbr.rel (0) target = $region9
    $region8: #{pallas_forward.5} parent=1 // pred_region
      _
    $region9: #{pallas_forward.5} parent=1 // pred_fallthru
      _
    // Predicated region
    $region10: #{pallas_forward.5} parent=1 // pred_check
      _
    $region11: #{pallas_forward.5} parent=1 // pred_check_branch
      %15 = sbr.rel (0) target = $region13
    $region12: #{pallas_forward.5} parent=1 // pred_region
      _
    $region13: #{pallas_forward.5} parent=1 // pred_fallthru
      _
    // Predicated region
    $region14: #{pallas_forward.5} parent=1 // pred_check
      _
    $region15: #{pallas_forward.5} parent=1 // pred_check_branch
      %17 = sbr.rel (0) target = $region17
    $region16: #{pallas_forward.5} parent=1 // pred_region
      _
    $region17: #{pallas_forward.5} parent=1 // pred_fallthru
      _
    %v18 = vld [vmem:[%s0] sm:$0x3]
    %v19 = vld [vmem:[%s0 + $0x2] sm:$0x3]
    %vm20 = vcmask 1041408
    %v21 = vsel %vm20, %v18, 0.0
    %v22 = vsel %vm20, %v19, 0.0
    %v23 = vadd.f32 %v21, %v22
    %v24 = vld [vmem:[%s1] sm:$0x1]
    %v26 = vlaneseq
    %v27 = vshrl.u32 %v26, 7
    %v28 = vsub.s32 0, %v27
    %v29 = vrot.slane %v24, %v28
    %v31 = vadd.f32 %v23, %v29
    %v32 = vmul.f32 %v31, 0.5
    %v33 = vtanh.pop %v32
    %v34 = vmul.f32 %v33, 0.5
    %v35 = vadd.f32 %v34, 0.5
    %v36 = vld [vmem:[%s2] sm:$0xff]
    %v37 = vld [vmem:[%s2 + $0x8] sm:$0xff]
    %v38 = vld [vmem:[%s2 + $0x10] sm:$0xff]
    %v39 = vld [vmem:[%s2 + $0x18] sm:$0xff]
    %v40 = vld [vmem:[%s2 + $0x20] sm:$0xff]
    %v41 = vld [vmem:[%s2 + $0x28] sm:$0xff]
    %v42 = vld [vmem:[%s2 + $0x30] sm:$0xff]
    %v43 = vld [vmem:[%s2 + $0x38] sm:$0xff]
    %v44 = vld [vmem:[%s2 + $0x40] sm:$0xff]
    %v45 = vld [vmem:[%s2 + $0x48] sm:$0xff]
    %v46 = vld [vmem:[%s2 + $0x50] sm:$0xff]
    %v47 = vld [vmem:[%s2 + $0x58] sm:$0xff]
    %v48 = vld [vmem:[%s2 + $0x60] sm:$0xff]
    %v49 = vld [vmem:[%s2 + $0x68] sm:$0xff]
    %v50 = vld [vmem:[%s2 + $0x70] sm:$0xff]
    %v51 = vld [vmem:[%s2 + $0x78] sm:$0xff]
    %v52 = vld [vmem:[%s3] sm:$0x1]
    %v54 = vlaneseq
    %v55 = vshrl.u32 %v54, 7
    %v56 = vsub.s32 0, %v55
    %v57 = vrot.slane %v52, %v56
    %59 = vmatprep.subr.mxu0 0.0
    %60 = vmatpush1.msra.mxu0 %v51
    %61 = vmatprep.subr.mxu0 0.0
    %62 = vmatpush1.msra.mxu0 %v50
    %63 = vmatprep.subr.mxu0 0.0
    %64 = vmatpush1.msra.mxu0 %v49
    %65 = vmatprep.subr.mxu0 0.0
    %66 = vmatpush1.msra.mxu0 %v48
    %67 = vmatprep.subr.mxu0 0.0
    %68 = vmatpush1.msra.mxu0 %v47
    %69 = vmatprep.subr.mxu0 0.0
    %70 = vmatpush1.msra.mxu0 %v46
    %71 = vmatprep.subr.mxu0 0.0
    %72 = vmatpush1.msra.mxu0 %v45
    %73 = vmatprep.subr.mxu0 0.0
    %74 = vmatpush1.msra.mxu0 %v44
    %75 = vmatprep.subr.mxu0 0.0
    %76 = vmatpush1.msra.mxu0 %v43
    %77 = vmatprep.subr.mxu0 0.0
    %78 = vmatpush1.msra.mxu0 %v42
    %79 = vmatprep.subr.mxu0 0.0
    %80 = vmatpush1.msra.mxu0 %v41
    %81 = vmatprep.subr.mxu0 0.0
    %82 = vmatpush1.msra.mxu0 %v40
    %83 = vmatprep.subr.mxu0 0.0
    %84 = vmatpush1.msra.mxu0 %v39
    %85 = vmatprep.subr.mxu0 0.0
    %86 = vmatpush1.msra.mxu0 %v38
    %87 = vmatprep.subr.mxu0 0.0
    %88 = vmatpush1.msra.mxu0 %v37
    %89 = vmatprep.subr.mxu0 0.0
    %90 = vmatpush1.msra.mxu0 %v36
    %91 = vmatprep.subr.mxu0 0.0
    %92 = vmatpush2.msra.mxu0 0.0
    %93 = vmatprep.subr.mxu0 0.0
    %94 = vmatpush2.msra.mxu0 0.0
    %95 = vmatprep.subr.mxu0 0.0
    %96 = vmatpush2.msra.mxu0 0.0
    %97 = vmatprep.subr.mxu0 0.0
    %98 = vmatpush2.msra.mxu0 0.0
    %99 = vmatprep.subr.mxu0 0.0
    %100 = vmatpush2.msra.mxu0 0.0
    %101 = vmatprep.subr.mxu0 0.0
    %102 = vmatpush2.msra.mxu0 0.0
    %103 = vmatprep.subr.mxu0 0.0
    %104 = vmatpush2.msra.mxu0 0.0
    %105 = vmatprep.subr.mxu0 0.0
    %106 = vmatpush2.msra.mxu0 0.0
    %107 = vmatprep.subr.mxu0 0.0
    %108 = vmatpush2.msra.mxu0 0.0
    %109 = vmatprep.subr.mxu0 0.0
    %110 = vmatpush2.msra.mxu0 0.0
    %111 = vmatprep.subr.mxu0 0.0
    %112 = vmatpush2.msra.mxu0 0.0
    %113 = vmatprep.subr.mxu0 0.0
    %114 = vmatpush2.msra.mxu0 0.0
    %115 = vmatprep.subr.mxu0 0.0
    %116 = vmatpush2.msra.mxu0 0.0
    %117 = vmatprep.subr.mxu0 0.0
    %118 = vmatpush2.msra.mxu0 0.0
    %119 = vmatprep.subr.mxu0 0.0
    %120 = vmatpush2.msra.mxu0 0.0
    %121 = vmatprep.subr.mxu0 0.0
    %122 = vmatpush2.msra.mxu0 0.0
    %123 = vmatprep.mubr.f32.mxu0 0.0
    %124 = vmatmul.mubr.f32.gmra.mxu0 %v35
    %v125 = vpop.f32.mrf.mxu0
    %v126 = vadd.f32 %v57, %v125
    %v127 = vpop.f32.mrf.mxu0
    %128 = vdwg.mxu0
    %vm129 = vcmask 254976
    %130 = vst.msk [vmem:[#allocation2] sm:$0x3] %vm129, %v126
    // Predicated region
    $region18: #{pallas_forward.5} parent=1 // pred_check
      _
    $region19: #{pallas_forward.5} parent=1 // pred_check_branch
      %132 = sbr.rel (0) target = $region21
    $region20: #{pallas_forward.5} parent=1 // pred_region
      %s134 = ssub.s32 32, 32
      %135 = vsyncadd [#allocation3], %s134
      %s137 = sshll.u32 [#allocation2], 4
      %s138 = int_to_ptr.vmem [resolvable:$true] %s137
      %140 = dma.vmem_to_hbm [thread:$0]  %s138, 32, %s4, [#allocation3]
    $region21: #{pallas_forward.5} parent=1 // pred_fallthru
      _
    // Predicated region
    $region22: #{pallas_forward.5} parent=1 // pred_check
      _
    $region23: #{pallas_forward.5} parent=1 // pred_check_branch
      %142 = sbr.rel (0) target = $region25
    $region24: #{pallas_forward.5} parent=1 // pred_region
      %143 = dma.done [#allocation3], 32
    $region25: #{pallas_forward.5} parent=1 // pred_fallthru
      _
    %144 = vsyncpa [#allocation3], 1

// kernel: pallas_forward.4
$region0: #{pallas_forward.4}
  #allocation0 [shape = 'u32[]', space=smem, size = 0x4, offset = 0x4, fixed_abs, tag = 'smem constant byte address 0x4 - core index']
  #allocation1 [shape = 'u32[144,128]{1,0:T(1,128)}', space=vmem, size = 0x12000, scoped, tag = 'internal scratch']
  #allocation2 [shape = 'f32[2,128]{1,0:T(2,128)}', space=vmem, size = 0x400, scoped, tag = 'scratch operand']
  %s0 = inlined_call_operand.vmem [shape: bf16[2,4096], index: 0, kind: input, shape index: {}]
  %s1 = inlined_call_operand.hbm [shape: bf16[4096,128], index: 1, kind: input, shape index: {}]
  %s2 = inlined_call_operand.vmem [shape: f32[2,2,128], index: 2, kind: output, shape index: {}]
  %s3 = sld [smem:[#allocation0]]
  $region53: #{pallas_forward.4} parent=0
    _
  %s5 = ssub.s32 1, %s3
  %s6 = scalar_select 0, %s5, %s3
  $region1: #{pallas_forward.4} parent=0
    #allocation3 [shape = 'u8[1048576]{0}', space=vmem, size = 0x100000, scoped, tag = 'input window, operand 1']
    #allocation4 [shape = 's32[2]{0}', space=sflag, size = 0x8, scoped, tag = 'scoped memory for pallas_forward.4']
    %7 = vsyncpa [#allocation4], 0
    %s8 = scalar_lea.sflag [#allocation4], 1
    %9 = vsyncpa %s8, 0
    loop: start=0, step=1, limit=4
    $region2: #{pallas_forward.4} parent=1 // loop_pre_header
      _
    $region3: #{pallas_forward.4} parent=1 // loop_header
      %s11 = sphi 0, %s15
      %p12 = scmp.ge.s32.totalorder %s11, 4
      %s18 = sphi 0, %s30
      %s19 = sphi 0, %s26
      %s20 = sphi 0, %s18
      %s21 = sphi 0, %s19
      %s22 = sphi 0, %s20
      %s23 = sphi 0, %s21
      %s35 = sphi 0, %s37
      %s38 = sphi 0, %s35
      %s39 = sphi 0, %s38
      %s55 = sphi 0, %s39
      %s63 = sphi 0, %s65
      %s66 = sphi 0, %s63
      %s67 = sphi 0, %s66
      %s83 = sphi 0, %s67
      %s89 = sphi 0, %s91
      %s92 = sphi 0, %s89
      %s93 = sphi 0, %s92
      %s109 = sphi 0, %s93
    $region4: #{pallas_forward.4} parent=1 // loop_header_branch
      %14 = sbr.rel (%p12) target = $region8
    $region5: #{pallas_forward.4} parent=1 // loop_body
      %s16 = ssub.s32 %s11, 1
      %s17 = ssub.s32 %s11, 2
      %s24 = sadd.s32 1, %s19
      %p25 = scmp.ge.s32.totalorder %s24, 1
      %s26 = scalar_select %p25, 0, %s24
      %s27 = sadd.s32 1, %s18
      %s28 = scalar_select %p25, %s27, %s18
      %p29 = scmp.ge.s32.totalorder %s28, 2
      %s30 = scalar_select %p29, 0, %s28
      %s31 = sadd.s32 %s18, %s19
      %s32 = sadd.s32 %s30, %s26
      %s33 = ssub.s32 %s31, %s32
      %p34 = scmp.eq.s32.totalorder %s33, 0
      %s36 = sadd.s32 %s35, 1
      %s37 = scalar_select %p34, %s35, %s36
      %p40 = pneg %p34
      %p41 = scmp.eq.s32.totalorder %s11, 1
      %p42 = por %p40, %p41
      %p43 = scmp.ne.s32.totalorder %s35, %s38
      %p44 = scmp.eq.s32.totalorder %s11, 0
      %p45 = por %p43, %p44
      %p46 = scmp.ne.s32.totalorder %s35, %s38
      %p47 = scmp.eq.s32.totalorder %s16, 1
      %p48 = por %p46, %p47
      %p49 = scmp.ne.s32.totalorder %s38, %s39
      %p50 = scmp.eq.s32.totalorder %s16, 0
      %p51 = por %p49, %p50
      %p52 = scmp.ne.s32.totalorder %s38, %s39
      %p53 = scmp.eq.s32.totalorder %s17, 1
      %p54 = por %p52, %p53
      %p56 = scmp.ne.s32.totalorder %s39, %s55
      %p57 = scmp.eq.s32.totalorder %s17, 0
      %p58 = por %p56, %p57
      %s59 = sadd.s32 %s18, %s19
      %s60 = sadd.s32 %s30, %s26
      %s61 = ssub.s32 %s59, %s60
      %p62 = scmp.eq.s32.totalorder %s61, 0
      %s64 = sadd.s32 %s63, 1
      %s65 = scalar_select %p62, %s63, %s64
      %p68 = pneg %p62
      %p69 = scmp.eq.s32.totalorder %s11, 1
      %p70 = por %p68, %p69
      %p71 = scmp.ne.s32.totalorder %s63, %s66
      %p72 = scmp.eq.s32.totalorder %s11, 0
      %p73 = por %p71, %p72
      %p74 = scmp.ne.s32.totalorder %s63, %s66
      %p75 = scmp.eq.s32.totalorder %s16, 1
      %p76 = por %p74, %p75
      %p77 = scmp.ne.s32.totalorder %s66, %s67
      %p78 = scmp.eq.s32.totalorder %s16, 0
      %p79 = por %p77, %p78
      %p80 = scmp.ne.s32.totalorder %s66, %s67
      %p81 = scmp.eq.s32.totalorder %s17, 1
      %p82 = por %p80, %p81
      %p84 = scmp.ne.s32.totalorder %s67, %s83
      %p85 = scmp.eq.s32.totalorder %s17, 0
      %p86 = por %p84, %p85
      %s87 = ssub.s32 %s18, %s30
      %p88 = scmp.eq.s32.totalorder %s87, 0
      %s90 = sadd.s32 %s89, 1
      %s91 = scalar_select %p88, %s89, %s90
      %p94 = pneg %p88
      %p95 = scmp.eq.s32.totalorder %s11, 1
      %p96 = por %p94, %p95
      %p97 = scmp.ne.s32.totalorder %s89, %s92
      %p98 = scmp.eq.s32.totalorder %s11, 0
      %p99 = por %p97, %p98
      %p100 = scmp.ne.s32.totalorder %s89, %s92
      %p101 = scmp.eq.s32.totalorder %s16, 1
      %p102 = por %p100, %p101
      %p103 = scmp.ne.s32.totalorder %s92, %s93
      %p104 = scmp.eq.s32.totalorder %s16, 0
      %p105 = por %p103, %p104
      %p106 = scmp.ne.s32.totalorder %s92, %s93
      %p107 = scmp.eq.s32.totalorder %s17, 1
      %p108 = por %p106, %p107
      %p110 = scmp.ne.s32.totalorder %s93, %s109
      %p111 = scmp.eq.s32.totalorder %s17, 0
      %p112 = por %p110, %p111
      %p113 = scmp.le.s32.totalorder 1, %s11
      %p114 = scmp.lt.s32.totalorder %s11, 3
      %p115 = pnand %p113, %p114
      %p116 = pneg %p115
      // Predicated region
      $region9: #{pallas_forward.4} parent=5 // pred_check
        _
      $region10: #{pallas_forward.4} parent=5 // pred_check_branch
        %118 = sbr.rel (%p115) target = $region12
      $region11: #{pallas_forward.4} parent=5 // pred_region
        %s119 = ssub.s32 %s11, 1
      $region12: #{pallas_forward.4} parent=5 // pred_fallthru
        _
      %p120 = scmp.lt.s32.totalorder %s11, 2
      // Predicated region
      $region13: #{pallas_forward.4} parent=5 // pred_check
        %p121 = pneg %p120
      $region14: #{pallas_forward.4} parent=5 // pred_check_branch
        %123 = sbr.rel (%p121) target = $region16
      $region15: #{pallas_forward.4} parent=5 // pred_region
        // Predicated region
        $region17: #{pallas_forward.4} parent=15 // pred_check
          %p124 = pneg %p45
        $region18: #{pallas_forward.4} parent=15 // pred_check_branch
          %126 = sbr.rel (%p124) target = $region20
        $region19: #{pallas_forward.4} parent=15 // pred_region
          %s127 = sadd.s32 %s18, %s19
          %s128 = smul.u32 16, %s127
          %p129 = scmp.lt.s32.totalorder %s128, 31
          %s130 = scalar_select %p129, %s128, 31
          %s131 = scalar_lea.vmem %s0, %s130
          %s132 = sadd.s32 %s18, %s19
          %s133 = smul.u32 16, %s132
        $region20: #{pallas_forward.4} parent=15 // pred_fallthru
          _
        // Predicated region
        $region21: #{pallas_forward.4} parent=15 // pred_check
          %p134 = pneg %p73
        $region22: #{pallas_forward.4} parent=15 // pred_check_branch
          %136 = sbr.rel (%p134) target = $region24
        $region23: #{pallas_forward.4} parent=15 // pred_region
          %s137 = sand.u32 %s63, 1
          %s138 = scalar_lea.sflag [#allocation4], %s137
          %s139 = sand.u32 %s63, 1
          %s140 = smul.addr %s139, 1024
          %s141 = scalar_lea.vmem [#allocation3], %s140
          %s142 = sadd.s32 %s18, %s19
          %s143 = smul.u32 256, %s142
          %s145 = ssub.s32 16384, 16384
          %146 = vsyncadd %s138, %s145
          %s147 = smul.addr %s143, 64
          %s148 = scalar_lea.hbm %s1, %s147
          %s149 = sshll.u32 %s141, 4
          %s150 = int_to_ptr.vmem [resolvable:$true] %s149
          %155 = dma.hbm_to_vmem [thread:$0]  %s148, 16384, %s150, %s138, 64, 64, 4
        $region24: #{pallas_forward.4} parent=15 // pred_fallthru
          _
      $region16: #{pallas_forward.4} parent=5 // pred_fallthru
        _
      %p156 = scmp.le.s32.totalorder 1, %s11
      %p157 = scmp.lt.s32.totalorder %s11, 3
      %p158 = pnand %p156, %p157
      %p159 = pneg %p158
      // Predicated region
      $region25: #{pallas_forward.4} parent=5 // pred_check
        _
      $region26: #{pallas_forward.4} parent=5 // pred_check_branch
        %161 = sbr.rel (%p158) target = $region28
      $region27: #{pallas_forward.4} parent=5 // pred_region
        %s162 = ssub.s32 %s11, 1
        %s163 = sand.u32 %s66, 1
        %s164 = scalar_lea.sflag [#allocation4], %s163
        %s165 = sand.u32 %s66, 1
        %s166 = smul.addr %s165, 1024
        %s167 = scalar_lea.vmem [#allocation3], %s166
        // Predicated region
        $region29: #{pallas_forward.4} parent=27 // pred_check
          %p168 = pneg %p79
        $region30: #{pallas_forward.4} parent=27 // pred_check_branch
          %170 = sbr.rel (%p168) target = $region32
        $region31: #{pallas_forward.4} parent=27 // pred_region
          %171 = dma.done %s164, 16384
        $region32: #{pallas_forward.4} parent=27 // pred_fallthru
          _
        %s172 = sadd.s32 %s20, %s21
        %s173 = smul.u32 16, %s172
        %p174 = scmp.lt.s32.totalorder %s173, 31
        %s175 = scalar_select %p174, %s173, 31
        %s176 = scalar_lea.vmem %s0, %s175
        %p177 = pneg %p51
        %p178 = pneg %p48
        %s179 = sand.u32 %s66, 1
        %s180 = scalar_lea.sflag [#allocation4], %s179
        %s181 = sand.u32 %s66, 1
        %s182 = smul.addr %s181, 1024
        %s183 = scalar_lea.vmem [#allocation3], %s182
        %p184 = pneg %p79
        %p185 = pneg %p76
        %p186 = pneg %p105
        %p187 = pneg %p102
        %p188 = scmp.lt.s32.totalorder %s20, 1
        %s189 = scalar_select %p188, %s20, 1
        %s190 = smul.addr %s189, 2
        %s191 = scalar_lea.vmem %s2, %s190
        %s192 = sadd.s32 %s20, %s21
        %s193 = smul.u32 16, %s192
        %p194 = scmp.lt.s32.totalorder %s193, 31
        %s195 = scalar_select %p194, %s193, 31
        %s196 = scalar_lea.vmem %s0, %s195
        %s197 = sadd.s32 %s20, %s21
        %s198 = smul.u32 16, %s197
        %s199 = sadd.s32 %s20, %s21
        %s200 = smul.u32 256, %s199
        %p201 = scmp.lt.s32.totalorder %s20, 1
        %s202 = scalar_select %p201, %s20, 1
        %s203 = smul.addr %s202, 2
        %s204 = scalar_lea.vmem %s2, %s203
        %p206 = scmp.eq.s32.totalorder %s21, 0
        // Predicated region
        $region33: #{pallas_forward.4} parent=27 // pred_check
          %p207 = pneg %p206
        $region34: #{pallas_forward.4} parent=27 // pred_check_branch
          %209 = sbr.rel (%p207) target = $region36
        $region35: #{pallas_forward.4} parent=27 // pred_region
          %210 = vst [vmem:[#allocation2] sm:$0x3] 0.0
        $region36: #{pallas_forward.4} parent=27 // pred_fallthru
          _
        %v211 = vld [vmem:[#allocation2] sm:$0x3]
        %v212 = vld [vmem:[%s196] sm:$0xff]
        %v213 = vld [vmem:[%s196 + $0x8] sm:$0xff]
        %v214 = vld [vmem:[%s167] sm:$0xf]
        %v215 = vld [vmem:[%s167 + $0x4] sm:$0xf]
        %v216 = vld [vmem:[%s167 + $0x8] sm:$0xf]
        %v217 = vld [vmem:[%s167 + $0xc] sm:$0xf]
        %v218 = vld [vmem:[%s167 + $0x10] sm:$0xf]
        %v219 = vld [vmem:[%s167 + $0x14] sm:$0xf]
        %v220 = vld [vmem:[%s167 + $0x18] sm:$0xf]
        %v221 = vld [vmem:[%s167 + $0x1c] sm:$0xf]
        %v222 = vld [vmem:[%s167 + $0x20] sm:$0xf]
        %v223 = vld [vmem:[%s167 + $0x24] sm:$0xf]
        %v224 = vld [vmem:[%s167 + $0x28] sm:$0xf]
        %v225 = vld [vmem:[%s167 + $0x2c] sm:$0xf]
        %v226 = vld [vmem:[%s167 + $0x30] sm:$0xf]
        %v227 = vld [vmem:[%s167 + $0x34] sm:$0xf]
        %v228 = vld [vmem:[%s167 + $0x38] sm:$0xf]
        %v229 = vld [vmem:[%s167 + $0x3c] sm:$0xf]
        %v230 = vld [vmem:[%s167 + $0x40] sm:$0xf]
        %v231 = vld [vmem:[%s167 + $0x44] sm:$0xf]
        %v232 = vld [vmem:[%s167 + $0x48] sm:$0xf]
        %v233 = vld [vmem:[%s167 + $0x4c] sm:$0xf]
        %v234 = vld [vmem:[%s167 + $0x50] sm:$0xf]
        %v235 = vld [vmem:[%s167 + $0x54] sm:$0xf]
        %v236 = vld [vmem:[%s167 + $0x58] sm:$0xf]
        %v237 = vld [vmem:[%s167 + $0x5c] sm:$0xf]
        %v238 = vld [vmem:[%s167 + $0x60] sm:$0xf]
        %v239 = vld [vmem:[%s167 + $0x64] sm:$0xf]
        %v240 = vld [vmem:[%s167 + $0x68] sm:$0xf]
        %v241 = vld [vmem:[%s167 + $0x6c] sm:$0xf]
        %v242 = vld [vmem:[%s167 + $0x70] sm:$0xf]
        %v243 = vld [vmem:[%s167 + $0x74] sm:$0xf]
        %v244 = vld [vmem:[%s167 + $0x78] sm:$0xf]
        %v245 = vld [vmem:[%s167 + $0x7c] sm:$0xf]
        %v246 = vld [vmem:[%s167 + $0x80] sm:$0xf]
        %v247 = vld [vmem:[%s167 + $0x84] sm:$0xf]
        %v248 = vld [vmem:[%s167 + $0x88] sm:$0xf]
        %v249 = vld [vmem:[%s167 + $0x8c] sm:$0xf]
        %v250 = vld [vmem:[%s167 + $0x90] sm:$0xf]
        %v251 = vld [vmem:[%s167 + $0x94] sm:$0xf]
        %v252 = vld [vmem:[%s167 + $0x98] sm:$0xf]
        %v253 = vld [vmem:[%s167 + $0x9c] sm:$0xf]
        %v254 = vld [vmem:[%s167 + $0xa0] sm:$0xf]
        %v255 = vld [vmem:[%s167 + $0xa4] sm:$0xf]
        %v256 = vld [vmem:[%s167 + $0xa8] sm:$0xf]
        %v257 = vld [vmem:[%s167 + $0xac] sm:$0xf]
        %v258 = vld [vmem:[%s167 + $0xb0] sm:$0xf]
        %v259 = vld [vmem:[%s167 + $0xb4] sm:$0xf]
        %v260 = vld [vmem:[%s167 + $0xb8] sm:$0xf]
        %v261 = vld [vmem:[%s167 + $0xbc] sm:$0xf]
        %v262 = vld [vmem:[%s167 + $0xc0] sm:$0xf]
        %v263 = vld [vmem:[%s167 + $0xc4] sm:$0xf]
        %v264 = vld [vmem:[%s167 + $0xc8] sm:$0xf]
        %v265 = vld [vmem:[%s167 + $0xcc] sm:$0xf]
        %v266 = vld [vmem:[%s167 + $0xd0] sm:$0xf]
        %v267 = vld [vmem:[%s167 + $0xd4] sm:$0xf]
        %v268 = vld [vmem:[%s167 + $0xd8] sm:$0xf]
        %v269 = vld [vmem:[%s167 + $0xdc] sm:$0xf]
        %v270 = vld [vmem:[%s167 + $0xe0] sm:$0xf]
        %v271 = vld [vmem:[%s167 + $0xe4] sm:$0xf]
        %v272 = vld [vmem:[%s167 + $0xe8] sm:$0xf]
        %v273 = vld [vmem:[%s167 + $0xec] sm:$0xf]
        %v274 = vld [vmem:[%s167 + $0xf0] sm:$0xf]
        %v275 = vld [vmem:[%s167 + $0xf4] sm:$0xf]
        %v276 = vld [vmem:[%s167 + $0xf8] sm:$0xf]
        %v277 = vld [vmem:[%s167 + $0xfc] sm:$0xf]
        %v278 = vld [vmem:[%s167 + $0x100] sm:$0xf]
        %v279 = vld [vmem:[%s167 + $0x104] sm:$0xf]
        %v280 = vld [vmem:[%s167 + $0x108] sm:$0xf]
        %v281 = vld [vmem:[%s167 + $0x10c] sm:$0xf]
        %v282 = vld [vmem:[%s167 + $0x110] sm:$0xf]
        %v283 = vld [vmem:[%s167 + $0x114] sm:$0xf]
        %v284 = vld [vmem:[%s167 + $0x118] sm:$0xf]
        %v285 = vld [vmem:[%s167 + $0x11c] sm:$0xf]
        %v286 = vld [vmem:[%s167 + $0x120] sm:$0xf]
        %v287 = vld [vmem:[%s167 + $0x124] sm:$0xf]
        %v288 = vld [vmem:[%s167 + $0x128] sm:$0xf]
        %v289 = vld [vmem:[%s167 + $0x12c] sm:$0xf]
        %v290 = vld [vmem:[%s167 + $0x130] sm:$0xf]
        %v291 = vld [vmem:[%s167 + $0x134] sm:$0xf]
        %v292 = vld [vmem:[%s167 + $0x138] sm:$0xf]
        %v293 = vld [vmem:[%s167 + $0x13c] sm:$0xf]
        %v294 = vld [vmem:[%s167 + $0x140] sm:$0xf]
        %v295 = vld [vmem:[%s167 + $0x144] sm:$0xf]
        %v296 = vld [vmem:[%s167 + $0x148] sm:$0xf]
        %v297 = vld [vmem:[%s167 + $0x14c] sm:$0xf]
        %v298 = vld [vmem:[%s167 + $0x150] sm:$0xf]
        %v299 = vld [vmem:[%s167 + $0x154] sm:$0xf]
        %v300 = vld [vmem:[%s167 + $0x158] sm:$0xf]
        %v301 = vld [vmem:[%s167 + $0x15c] sm:$0xf]
        %v302 = vld [vmem:[%s167 + $0x160] sm:$0xf]
        %v303 = vld [vmem:[%s167 + $0x164] sm:$0xf]
        %v304 = vld [vmem:[%s167 + $0x168] sm:$0xf]
        %v305 = vld [vmem:[%s167 + $0x16c] sm:$0xf]
        %v306 = vld [vmem:[%s167 + $0x170] sm:$0xf]
        %v307 = vld [vmem:[%s167 + $0x174] sm:$0xf]
        %v308 = vld [vmem:[%s167 + $0x178] sm:$0xf]
        %v309 = vld [vmem:[%s167 + $0x17c] sm:$0xf]
        %v310 = vld [vmem:[%s167 + $0x180] sm:$0xf]
        %v311 = vld [vmem:[%s167 + $0x184] sm:$0xf]
        %v312 = vld [vmem:[%s167 + $0x188] sm:$0xf]
        %v313 = vld [vmem:[%s167 + $0x18c] sm:$0xf]
        %v314 = vld [vmem:[%s167 + $0x190] sm:$0xf]
        %v315 = vld [vmem:[%s167 + $0x194] sm:$0xf]
        %v316 = vld [vmem:[%s167 + $0x198] sm:$0xf]
        %v317 = vld [vmem:[%s167 + $0x19c] sm:$0xf]
        %v318 = vld [vmem:[%s167 + $0x1a0] sm:$0xf]
        %v319 = vld [vmem:[%s167 + $0x1a4] sm:$0xf]
        %v320 = vld [vmem:[%s167 + $0x1a8] sm:$0xf]
        %v321 = vld [vmem:[%s167 + $0x1ac] sm:$0xf]
        %v322 = vld [vmem:[%s167 + $0x1b0] sm:$0xf]
        %v323 = vld [vmem:[%s167 + $0x1b4] sm:$0xf]
        %v324 = vld [vmem:[%s167 + $0x1b8] sm:$0xf]
        %v325 = vld [vmem:[%s167 + $0x1bc] sm:$0xf]
        %v326 = vld [vmem:[%s167 + $0x1c0] sm:$0xf]
        %v327 = vld [vmem:[%s167 + $0x1c4] sm:$0xf]
        %v328 = vld [vmem:[%s167 + $0x1c8] sm:$0xf]
        %v329 = vld [vmem:[%s167 + $0x1cc] sm:$0xf]
        %v330 = vld [vmem:[%s167 + $0x1d0] sm:$0xf]
        %v331 = vld [vmem:[%s167 + $0x1d4] sm:$0xf]
        %v332 = vld [vmem:[%s167 + $0x1d8] sm:$0xf]
        %v333 = vld [vmem:[%s167 + $0x1dc] sm:$0xf]
        %v334 = vld [vmem:[%s167 + $0x1e0] sm:$0xf]
        %v335 = vld [vmem:[%s167 + $0x1e4] sm:$0xf]
        %v336 = vld [vmem:[%s167 + $0x1e8] sm:$0xf]
        %v337 = vld [vmem:[%s167 + $0x1ec] sm:$0xf]
        %v338 = vld [vmem:[%s167 + $0x1f0] sm:$0xf]
        %v339 = vld [vmem:[%s167 + $0x1f4] sm:$0xf]
        %v340 = vld [vmem:[%s167 + $0x1f8] sm:$0xf]
        %v341 = vld [vmem:[%s167 + $0x1fc] sm:$0xf]
        %v342 = vld [vmem:[%s167 + $0x200] sm:$0xf]
        %v343 = vld [vmem:[%s167 + $0x204] sm:$0xf]
        %v344 = vld [vmem:[%s167 + $0x208] sm:$0xf]
        %v345 = vld [vmem:[%s167 + $0x20c] sm:$0xf]
        %v346 = vld [vmem:[%s167 + $0x210] sm:$0xf]
        %v347 = vld [vmem:[%s167 + $0x214] sm:$0xf]
        %v348 = vld [vmem:[%s167 + $0x218] sm:$0xf]
        %v349 = vld [vmem:[%s167 + $0x21c] sm:$0xf]
        %v350 = vld [vmem:[%s167 + $0x220] sm:$0xf]
        %v351 = vld [vmem:[%s167 + $0x224] sm:$0xf]
        %v352 = vld [vmem:[%s167 + $0x228] sm:$0xf]
        %v353 = vld [vmem:[%s167 + $0x22c] sm:$0xf]
        %v354 = vld [vmem:[%s167 + $0x230] sm:$0xf]
        %v355 = vld [vmem:[%s167 + $0x234] sm:$0xf]
        %v356 = vld [vmem:[%s167 + $0x238] sm:$0xf]
        %v357 = vld [vmem:[%s167 + $0x23c] sm:$0xf]
        %v358 = vld [vmem:[%s167 + $0x240] sm:$0xf]
        %v359 = vld [vmem:[%s167 + $0x244] sm:$0xf]
        %v360 = vld [vmem:[%s167 + $0x248] sm:$0xf]
        %v361 = vld [vmem:[%s167 + $0x24c] sm:$0xf]
        %v362 = vld [vmem:[%s167 + $0x250] sm:$0xf]
        %v363 = vld [vmem:[%s167 + $0x254] sm:$0xf]
        %v364 = vld [vmem:[%s167 + $0x258] sm:$0xf]
        %v365 = vld [vmem:[%s167 + $0x25c] sm:$0xf]
        %v366 = vld [vmem:[%s167 + $0x260] sm:$0xf]
        %v367 = vld [vmem:[%s167 + $0x264] sm:$0xf]
        %v368 = vld [vmem:[%s167 + $0x268] sm:$0xf]
        %v369 = vld [vmem:[%s167 + $0x26c] sm:$0xf]
        %v370 = vld [vmem:[%s167 + $0x270] sm:$0xf]
        %v371 = vld [vmem:[%s167 + $0x274] sm:$0xf]
        %v372 = vld [vmem:[%s167 + $0x278] sm:$0xf]
        %v373 = vld [vmem:[%s167 + $0x27c] sm:$0xf]
        %v374 = vld [vmem:[%s167 + $0x280] sm:$0xf]
        %v375 = vld [vmem:[%s167 + $0x284] sm:$0xf]
        %v376 = vld [vmem:[%s167 + $0x288] sm:$0xf]
        %v377 = vld [vmem:[%s167 + $0x28c] sm:$0xf]
        %v378 = vld [vmem:[%s167 + $0x290] sm:$0xf]
        %v379 = vld [vmem:[%s167 + $0x294] sm:$0xf]
        %v380 = vld [vmem:[%s167 + $0x298] sm:$0xf]
        %v381 = vld [vmem:[%s167 + $0x29c] sm:$0xf]
        %v382 = vld [vmem:[%s167 + $0x2a0] sm:$0xf]
        %v383 = vld [vmem:[%s167 + $0x2a4] sm:$0xf]
        %v384 = vld [vmem:[%s167 + $0x2a8] sm:$0xf]
        %v385 = vld [vmem:[%s167 + $0x2ac] sm:$0xf]
        %v386 = vld [vmem:[%s167 + $0x2b0] sm:$0xf]
        %v387 = vld [vmem:[%s167 + $0x2b4] sm:$0xf]
        %v388 = vld [vmem:[%s167 + $0x2b8] sm:$0xf]
        %v389 = vld [vmem:[%s167 + $0x2bc] sm:$0xf]
        %v390 = vld [vmem:[%s167 + $0x2c0] sm:$0xf]
        %v391 = vld [vmem:[%s167 + $0x2c4] sm:$0xf]
        %v392 = vld [vmem:[%s167 + $0x2c8] sm:$0xf]
        %v393 = vld [vmem:[%s167 + $0x2cc] sm:$0xf]
        %v394 = vld [vmem:[%s167 + $0x2d0] sm:$0xf]
        %v395 = vld [vmem:[%s167 + $0x2d4] sm:$0xf]
        %v396 = vld [vmem:[%s167 + $0x2d8] sm:$0xf]
        %v397 = vld [vmem:[%s167 + $0x2dc] sm:$0xf]
        %v398 = vld [vmem:[%s167 + $0x2e0] sm:$0xf]
        %v399 = vld [vmem:[%s167 + $0x2e4] sm:$0xf]
        %v400 = vld [vmem:[%s167 + $0x2e8] sm:$0xf]
        %v401 = vld [vmem:[%s167 + $0x2ec] sm:$0xf]
        %v402 = vld [vmem:[%s167 + $0x2f0] sm:$0xf]
        %v403 = vld [vmem:[%s167 + $0x2f4] sm:$0xf]
        %v404 = vld [vmem:[%s167 + $0x2f8] sm:$0xf]
        %v405 = vld [vmem:[%s167 + $0x2fc] sm:$0xf]
        %v406 = vld [vmem:[%s167 + $0x300] sm:$0xf]
        %v407 = vld [vmem:[%s167 + $0x304] sm:$0xf]
        %v408 = vld [vmem:[%s167 + $0x308] sm:$0xf]
        %v409 = vld [vmem:[%s167 + $0x30c] sm:$0xf]
        %v410 = vld [vmem:[%s167 + $0x310] sm:$0xf]
        %v411 = vld [vmem:[%s167 + $0x314] sm:$0xf]
        %v412 = vld [vmem:[%s167 + $0x318] sm:$0xf]
        %v413 = vld [vmem:[%s167 + $0x31c] sm:$0xf]
        %v414 = vld [vmem:[%s167 + $0x320] sm:$0xf]
        %v415 = vld [vmem:[%s167 + $0x324] sm:$0xf]
        %v416 = vld [vmem:[%s167 + $0x328] sm:$0xf]
        %v417 = vld [vmem:[%s167 + $0x32c] sm:$0xf]
        %v418 = vld [vmem:[%s167 + $0x330] sm:$0xf]
        %v419 = vld [vmem:[%s167 + $0x334] sm:$0xf]
        %v420 = vld [vmem:[%s167 + $0x338] sm:$0xf]
        %v421 = vld [vmem:[%s167 + $0x33c] sm:$0xf]
        %v422 = vld [vmem:[%s167 + $0x340] sm:$0xf]
        %v423 = vld [vmem:[%s167 + $0x344] sm:$0xf]
        %v424 = vld [vmem:[%s167 + $0x348] sm:$0xf]
        %v425 = vld [vmem:[%s167 + $0x34c] sm:$0xf]
        %v426 = vld [vmem:[%s167 + $0x350] sm:$0xf]
        %v427 = vld [vmem:[%s167 + $0x354] sm:$0xf]
        %v428 = vld [vmem:[%s167 + $0x358] sm:$0xf]
        %v429 = vld [vmem:[%s167 + $0x35c] sm:$0xf]
        %v430 = vld [vmem:[%s167 + $0x360] sm:$0xf]
        %v431 = vld [vmem:[%s167 + $0x364] sm:$0xf]
        %v432 = vld [vmem:[%s167 + $0x368] sm:$0xf]
        %v433 = vld [vmem:[%s167 + $0x36c] sm:$0xf]
        %v434 = vld [vmem:[%s167 + $0x370] sm:$0xf]
        %v435 = vld [vmem:[%s167 + $0x374] sm:$0xf]
        %v436 = vld [vmem:[%s167 + $0x378] sm:$0xf]
        %v437 = vld [vmem:[%s167 + $0x37c] sm:$0xf]
        %v438 = vld [vmem:[%s167 + $0x380] sm:$0xf]
        %v439 = vld [vmem:[%s167 + $0x384] sm:$0xf]
        %v440 = vld [vmem:[%s167 + $0x388] sm:$0xf]
        %v441 = vld [vmem:[%s167 + $0x38c] sm:$0xf]
        %v442 = vld [vmem:[%s167 + $0x390] sm:$0xf]
        %v443 = vld [vmem:[%s167 + $0x394] sm:$0xf]
        %v444 = vld [vmem:[%s167 + $0x398] sm:$0xf]
        %v445 = vld [vmem:[%s167 + $0x39c] sm:$0xf]
        %v446 = vld [vmem:[%s167 + $0x3a0] sm:$0xf]
        %v447 = vld [vmem:[%s167 + $0x3a4] sm:$0xf]
        %v448 = vld [vmem:[%s167 + $0x3a8] sm:$0xf]
        %v449 = vld [vmem:[%s167 + $0x3ac] sm:$0xf]
        %v450 = vld [vmem:[%s167 + $0x3b0] sm:$0xf]
        %v451 = vld [vmem:[%s167 + $0x3b4] sm:$0xf]
        %v452 = vld [vmem:[%s167 + $0x3b8] sm:$0xf]
        %v453 = vld [vmem:[%s167 + $0x3bc] sm:$0xf]
        %v454 = vld [vmem:[%s167 + $0x3c0] sm:$0xf]
        %v455 = vld [vmem:[%s167 + $0x3c4] sm:$0xf]
        %v456 = vld [vmem:[%s167 + $0x3c8] sm:$0xf]
        %v457 = vld [vmem:[%s167 + $0x3cc] sm:$0xf]
        %v458 = vld [vmem:[%s167 + $0x3d0] sm:$0xf]
        %v459 = vld [vmem:[%s167 + $0x3d4] sm:$0xf]
        %v460 = vld [vmem:[%s167 + $0x3d8] sm:$0xf]
        %v461 = vld [vmem:[%s167 + $0x3dc] sm:$0xf]
        %v462 = vld [vmem:[%s167 + $0x3e0] sm:$0xf]
        %v463 = vld [vmem:[%s167 + $0x3e4] sm:$0xf]
        %v464 = vld [vmem:[%s167 + $0x3e8] sm:$0xf]
        %v465 = vld [vmem:[%s167 + $0x3ec] sm:$0xf]
        %v466 = vld [vmem:[%s167 + $0x3f0] sm:$0xf]
        %v467 = vld [vmem:[%s167 + $0x3f4] sm:$0xf]
        %v468 = vld [vmem:[%s167 + $0x3f8] sm:$0xf]
        %v469 = vld [vmem:[%s167 + $0x3fc] sm:$0xf]
        %v472 = vcombine.high %v212, %v212
        %v474 = vunpack.c.l.s4 1966171168
        %v475 = vunpack.c.0.s8 %v474
        %v476 = vlaneseq
        %v477 = vshrl.u32 %v476, 7
        %v478 = vsub.s32 %v475, %v477
        %v479 = vrot.slane %v212, %v478
        %v481 = vunpack.c.l.s4 1966171168
        %v482 = vunpack.c.0.s8 %v481
        %v483 = vlaneseq
        %v484 = vshrl.u32 %v483, 7
        %v485 = vsub.s32 %v482, %v484
        %v486 = vrot.slane %v472, %v485
        %v487 = vcombine.high %v479, %v479
        %v488 = vcombine.high %v486, %v486
        %v490 = vunpack.c.l.s4 1966171168
        %v491 = vunpack.c.0.s8 %v490
        %v492 = vlaneseq
        %v493 = vshrl.u32 %v492, 7
        %v494 = vsub.s32 %v491, %v493
        %v495 = vrot.slane %v479, %v494
        %v497 = vunpack.c.l.s4 1966171168
        %v498 = vunpack.c.0.s8 %v497
        %v499 = vlaneseq
        %v500 = vshrl.u32 %v499, 7
        %v501 = vsub.s32 %v498, %v500
        %v502 = vrot.slane %v486, %v501
        %v504 = vunpack.c.l.s4 1966171168
        %v505 = vunpack.c.0.s8 %v504
        %v506 = vlaneseq
        %v507 = vshrl.u32 %v506, 7
        %v508 = vsub.s32 %v505, %v507
        %v509 = vrot.slane %v487, %v508
        %v511 = vunpack.c.l.s4 1966171168
        %v512 = vunpack.c.0.s8 %v511
        %v513 = vlaneseq
        %v514 = vshrl.u32 %v513, 7
        %v515 = vsub.s32 %v512, %v514
        %v516 = vrot.slane %v488, %v515
        %v517 = vcombine.high %v495, %v495
        %v518 = vcombine.high %v502, %v502
        %v519 = vcombine.high %v509, %v509
        %v520 = vcombine.high %v516, %v516
        %v521 = vcombine.high %v213, %v213
        %v523 = vunpack.c.l.s4 1966171168
        %v524 = vunpack.c.0.s8 %v523
        %v525 = vlaneseq
        %v526 = vshrl.u32 %v525, 7
        %v527 = vsub.s32 %v524, %v526
        %v528 = vrot.slane %v213, %v527
        %v530 = vunpack.c.l.s4 1966171168
        %v531 = vunpack.c.0.s8 %v530
        %v532 = vlaneseq
        %v533 = vshrl.u32 %v532, 7
        %v534 = vsub.s32 %v531, %v533
        %v535 = vrot.slane %v521, %v534
        %v536 = vcombine.high %v528, %v528
        %v537 = vcombine.high %v535, %v535
        %v539 = vunpack.c.l.s4 1966171168
        %v540 = vunpack.c.0.s8 %v539
        %v541 = vlaneseq
        %v542 = vshrl.u32 %v541, 7
        %v543 = vsub.s32 %v540, %v542
        %v544 = vrot.slane %v528, %v543
        %v546 = vunpack.c.l.s4 1966171168
        %v547 = vunpack.c.0.s8 %v546
        %v548 = vlaneseq
        %v549 = vshrl.u32 %v548, 7
        %v550 = vsub.s32 %v547, %v549
        %v551 = vrot.slane %v535, %v550
        %v553 = vunpack.c.l.s4 1966171168
        %v554 = vunpack.c.0.s8 %v553
        %v555 = vlaneseq
        %v556 = vshrl.u32 %v555, 7
        %v557 = vsub.s32 %v554, %v556
        %v558 = vrot.slane %v536, %v557
        %v560 = vunpack.c.l.s4 1966171168
        %v561 = vunpack.c.0.s8 %v560
        %v562 = vlaneseq
        %v563 = vshrl.u32 %v562, 7
        %v564 = vsub.s32 %v561, %v563
        %v565 = vrot.slane %v537, %v564
        %v566 = vcombine.high %v544, %v544
        %v567 = vcombine.high %v551, %v551
        %v568 = vcombine.high %v558, %v558
        %v569 = vcombine.high %v565, %v565
        %v842 = vunpack.c.l.b16 %v214
        %v843 = vunpack.c.l.b16 %v215
        %v844 = vunpack.c.l.b16 %v216
        %v845 = vunpack.c.l.b16 %v217
        %v846 = vunpack.c.l.b16 %v218
        %v847 = vunpack.c.l.b16 %v219
        %v848 = vunpack.c.l.b16 %v220
        %v849 = vunpack.c.l.b16 %v221
        %v850 = vunpack.c.l.b16 %v222
        %v851 = vunpack.c.l.b16 %v223
        %v852 = vunpack.c.l.b16 %v224
        %v853 = vunpack.c.l.b16 %v225
        %v854 = vunpack.c.l.b16 %v226
        %v855 = vunpack.c.l.b16 %v227
        %v856 = vunpack.c.l.b16 %v228
        %v857 = vunpack.c.l.b16 %v229
        %v858 = vunpack.c.l.b16 %v230
        %v859 = vunpack.c.l.b16 %v231
        %v860 = vunpack.c.l.b16 %v232
        %v861 = vunpack.c.l.b16 %v233
        %v862 = vunpack.c.l.b16 %v234
        %v863 = vunpack.c.l.b16 %v235
        %v864 = vunpack.c.l.b16 %v236
        %v865 = vunpack.c.l.b16 %v237
        %v866 = vunpack.c.l.b16 %v238
        %v867 = vunpack.c.l.b16 %v239
        %v868 = vunpack.c.l.b16 %v240
        %v869 = vunpack.c.l.b16 %v241
        %v870 = vunpack.c.l.b16 %v242
        %v871 = vunpack.c.l.b16 %v243
        %v872 = vunpack.c.l.b16 %v244
        %v873 = vunpack.c.l.b16 %v245
        %v874 = vunpack.c.l.b16 %v246
        %v875 = vunpack.c.l.b16 %v247
        %v876 = vunpack.c.l.b16 %v248
        %v877 = vunpack.c.l.b16 %v249
        %v878 = vunpack.c.l.b16 %v250
        %v879 = vunpack.c.l.b16 %v251
        %v880 = vunpack.c.l.b16 %v252
        %v881 = vunpack.c.l.b16 %v253
        %v882 = vunpack.c.l.b16 %v254
        %v883 = vunpack.c.l.b16 %v255
        %v884 = vunpack.c.l.b16 %v256
        %v885 = vunpack.c.l.b16 %v257
        %v886 = vunpack.c.l.b16 %v258
        %v887 = vunpack.c.l.b16 %v259
        %v888 = vunpack.c.l.b16 %v260
        %v889 = vunpack.c.l.b16 %v261
        %v890 = vunpack.c.l.b16 %v262
        %v891 = vunpack.c.l.b16 %v263
        %v892 = vunpack.c.l.b16 %v264
        %v893 = vunpack.c.l.b16 %v265
        %v894 = vunpack.c.l.b16 %v266
        %v895 = vunpack.c.l.b16 %v267
        %v896 = vunpack.c.l.b16 %v268
        %v897 = vunpack.c.l.b16 %v269
        %v898 = vunpack.c.l.b16 %v270
        %v899 = vunpack.c.l.b16 %v271
        %v900 = vunpack.c.l.b16 %v272
        %v901 = vunpack.c.l.b16 %v273
        %v902 = vunpack.c.l.b16 %v274
        %v903 = vunpack.c.l.b16 %v275
        %v904 = vunpack.c.l.b16 %v276
        %v905 = vunpack.c.l.b16 %v277
        %v906 = vunpack.c.l.b16 %v278
        %v907 = vunpack.c.l.b16 %v279
        %v908 = vunpack.c.l.b16 %v280
        %v909 = vunpack.c.l.b16 %v281
        %v910 = vunpack.c.l.b16 %v282
        %v911 = vunpack.c.l.b16 %v283
        %v912 = vunpack.c.l.b16 %v284
        %v913 = vunpack.c.l.b16 %v285
        %v914 = vunpack.c.l.b16 %v286
        %v915 = vunpack.c.l.b16 %v287
        %v916 = vunpack.c.l.b16 %v288
        %v917 = vunpack.c.l.b16 %v289
        %v918 = vunpack.c.l.b16 %v290
        %v919 = vunpack.c.l.b16 %v291
        %v920 = vunpack.c.l.b16 %v292
        %v921 = vunpack.c.l.b16 %v293
        %v922 = vunpack.c.l.b16 %v294
        %v923 = vunpack.c.l.b16 %v295
        %v924 = vunpack.c.l.b16 %v296
        %v925 = vunpack.c.l.b16 %v297
        %v926 = vunpack.c.l.b16 %v298
        %v927 = vunpack.c.l.b16 %v299
        %v928 = vunpack.c.l.b16 %v300
        %v929 = vunpack.c.l.b16 %v301
        %v930 = vunpack.c.l.b16 %v302
        %v931 = vunpack.c.l.b16 %v303
        %v932 = vunpack.c.l.b16 %v304
        %v933 = vunpack.c.l.b16 %v305
        %v934 = vunpack.c.l.b16 %v306
        %v935 = vunpack.c.l.b16 %v307
        %v936 = vunpack.c.l.b16 %v308
        %v937 = vunpack.c.l.b16 %v309
        %v938 = vunpack.c.l.b16 %v310
        %v939 = vunpack.c.l.b16 %v311
        %v940 = vunpack.c.l.b16 %v312
        %v941 = vunpack.c.l.b16 %v313
        %v942 = vunpack.c.l.b16 %v314
        %v943 = vunpack.c.l.b16 %v315
        %v944 = vunpack.c.l.b16 %v316
        %v945 = vunpack.c.l.b16 %v317
        %v946 = vunpack.c.l.b16 %v318
        %v947 = vunpack.c.l.b16 %v319
        %v948 = vunpack.c.l.b16 %v320
        %v949 = vunpack.c.l.b16 %v321
        %v950 = vunpack.c.l.b16 %v322
        %v951 = vunpack.c.l.b16 %v323
        %v952 = vunpack.c.l.b16 %v324
        %v953 = vunpack.c.l.b16 %v325
        %v954 = vunpack.c.l.b16 %v326
        %v955 = vunpack.c.l.b16 %v327
        %v956 = vunpack.c.l.b16 %v328
        %v957 = vunpack.c.l.b16 %v329
        %v958 = vunpack.c.l.b16 %v330
        %v959 = vunpack.c.l.b16 %v331
        %v960 = vunpack.c.l.b16 %v332
        %v961 = vunpack.c.l.b16 %v333
        %v962 = vunpack.c.l.b16 %v334
        %v963 = vunpack.c.l.b16 %v335
        %v964 = vunpack.c.l.b16 %v336
        %v965 = vunpack.c.l.b16 %v337
        %v966 = vunpack.c.l.b16 %v338
        %v967 = vunpack.c.l.b16 %v339
        %v968 = vunpack.c.l.b16 %v340
        %v969 = vunpack.c.l.b16 %v341
        %v970 = vunpack.c.l.b16 %v342
        %v971 = vunpack.c.l.b16 %v343
        %v972 = vunpack.c.l.b16 %v344
        %v973 = vunpack.c.l.b16 %v345
        %v974 = vunpack.c.l.b16 %v346
        %v975 = vunpack.c.l.b16 %v347
        %v976 = vunpack.c.l.b16 %v348
        %v977 = vunpack.c.l.b16 %v349
        %v978 = vunpack.c.l.b16 %v350
        %v979 = vunpack.c.l.b16 %v351
        %v980 = vunpack.c.l.b16 %v352
        %v981 = vunpack.c.l.b16 %v353
        %v982 = vunpack.c.l.b16 %v354
        %v983 = vunpack.c.l.b16 %v355
        %v984 = vunpack.c.l.b16 %v356
        %v985 = vunpack.c.l.b16 %v357
        %v986 = vunpack.c.l.b16 %v358
        %v987 = vunpack.c.l.b16 %v359
        %v988 = vunpack.c.l.b16 %v360
        %v989 = vunpack.c.l.b16 %v361
        %v990 = vunpack.c.l.b16 %v362
        %v991 = vunpack.c.l.b16 %v363
        %v992 = vunpack.c.l.b16 %v364
        %v993 = vunpack.c.l.b16 %v365
        %v994 = vunpack.c.l.b16 %v366
        %v995 = vunpack.c.l.b16 %v367
        %v996 = vunpack.c.l.b16 %v368
        %v997 = vunpack.c.l.b16 %v369
        %v998 = vunpack.c.l.b16 %v370
        %v999 = vunpack.c.l.b16 %v371
        %v1000 = vunpack.c.l.b16 %v372
        %v1001 = vunpack.c.l.b16 %v373
        %v1002 = vunpack.c.l.b16 %v374
        %v1003 = vunpack.c.l.b16 %v375
        %v1004 = vunpack.c.l.b16 %v376
        %v1005 = vunpack.c.l.b16 %v377
        %v1006 = vunpack.c.l.b16 %v378
        %v1007 = vunpack.c.l.b16 %v379
        %v1008 = vunpack.c.l.b16 %v380
        %v1009 = vunpack.c.l.b16 %v381
        %v1010 = vunpack.c.l.b16 %v382
        %v1011 = vunpack.c.l.b16 %v383
        %v1012 = vunpack.c.l.b16 %v384
        %v1013 = vunpack.c.l.b16 %v385
        %v1014 = vunpack.c.l.b16 %v386
        %v1015 = vunpack.c.l.b16 %v387
        %v1016 = vunpack.c.l.b16 %v388
        %v1017 = vunpack.c.l.b16 %v389
        %v1018 = vunpack.c.l.b16 %v390
        %v1019 = vunpack.c.l.b16 %v391
        %v1020 = vunpack.c.l.b16 %v392
        %v1021 = vunpack.c.l.b16 %v393
        %v1022 = vunpack.c.l.b16 %v394
        %v1023 = vunpack.c.l.b16 %v395
        %v1024 = vunpack.c.l.b16 %v396
        %v1025 = vunpack.c.l.b16 %v397
        %v1026 = vunpack.c.l.b16 %v398
        %v1027 = vunpack.c.l.b16 %v399
        %v1028 = vunpack.c.l.b16 %v400
        %v1029 = vunpack.c.l.b16 %v401
        %v1030 = vunpack.c.l.b16 %v402
        %v1031 = vunpack.c.l.b16 %v403
        %v1032 = vunpack.c.l.b16 %v404
        %v1033 = vunpack.c.l.b16 %v405
        %v1034 = vunpack.c.l.b16 %v406
        %v1035 = vunpack.c.l.b16 %v407
        %v1036 = vunpack.c.l.b16 %v408
        %v1037 = vunpack.c.l.b16 %v409
        %v1038 = vunpack.c.l.b16 %v410
        %v1039 = vunpack.c.l.b16 %v411
        %v1040 = vunpack.c.l.b16 %v412
        %v1041 = vunpack.c.l.b16 %v413
        %v1042 = vunpack.c.l.b16 %v414
        %v1043 = vunpack.c.l.b16 %v415
        %v1044 = vunpack.c.l.b16 %v416
        %v1045 = vunpack.c.l.b16 %v417
        %v1046 = vunpack.c.l.b16 %v418
        %v1047 = vunpack.c.l.b16 %v419
        %v1048 = vunpack.c.l.b16 %v420
        %v1049 = vunpack.c.l.b16 %v421
        %v1050 = vunpack.c.l.b16 %v422
        %v1051 = vunpack.c.l.b16 %v423
        %v1052 = vunpack.c.l.b16 %v424
        %v1053 = vunpack.c.l.b16 %v425
        %v1054 = vunpack.c.l.b16 %v426
        %v1055 = vunpack.c.l.b16 %v427
        %v1056 = vunpack.c.l.b16 %v428
        %v1057 = vunpack.c.l.b16 %v429
        %v1058 = vunpack.c.l.b16 %v430
        %v1059 = vunpack.c.l.b16 %v431
        %v1060 = vunpack.c.l.b16 %v432
        %v1061 = vunpack.c.l.b16 %v433
        %v1062 = vunpack.c.l.b16 %v434
        %v1063 = vunpack.c.l.b16 %v435
        %v1064 = vunpack.c.l.b16 %v436
        %v1065 = vunpack.c.l.b16 %v437
        %v1066 = vunpack.c.l.b16 %v438
        %v1067 = vunpack.c.l.b16 %v439
        %v1068 = vunpack.c.l.b16 %v440
        %v1069 = vunpack.c.l.b16 %v441
        %v1070 = vunpack.c.l.b16 %v442
        %v1071 = vunpack.c.l.b16 %v443
        %v1072 = vunpack.c.l.b16 %v444
        %v1073 = vunpack.c.l.b16 %v445
        %v1074 = vunpack.c.l.b16 %v446
        %v1075 = vunpack.c.l.b16 %v447
        %v1076 = vunpack.c.l.b16 %v448
        %v1077 = vunpack.c.l.b16 %v449
        %v1078 = vunpack.c.l.b16 %v450
        %v1079 = vunpack.c.l.b16 %v451
        %v1080 = vunpack.c.l.b16 %v452
        %v1081 = vunpack.c.l.b16 %v453
        %v1082 = vunpack.c.l.b16 %v454
        %v1083 = vunpack.c.l.b16 %v455
        %v1084 = vunpack.c.l.b16 %v456
        %v1085 = vunpack.c.l.b16 %v457
        %v1086 = vunpack.c.l.b16 %v458
        %v1087 = vunpack.c.l.b16 %v459
        %v1088 = vunpack.c.l.b16 %v460
        %v1089 = vunpack.c.l.b16 %v461
        %v1090 = vunpack.c.l.b16 %v462
        %v1091 = vunpack.c.l.b16 %v463
        %v1092 = vunpack.c.l.b16 %v464
        %v1093 = vunpack.c.l.b16 %v465
        %v1094 = vunpack.c.l.b16 %v466
        %v1095 = vunpack.c.l.b16 %v467
        %v1096 = vunpack.c.l.b16 %v468
        %v1097 = vunpack.c.l.b16 %v469
        %v1098 = vpack.c.b16 %v843, %v842
        %v1099 = vpack.c.b16 %v845, %v844
        %v1100 = vpack.c.b16 %v847, %v846
        %v1101 = vpack.c.b16 %v849, %v848
        %v1102 = vpack.c.b16 %v851, %v850
        %v1103 = vpack.c.b16 %v853, %v852
        %v1104 = vpack.c.b16 %v855, %v854
        %v1105 = vpack.c.b16 %v857, %v856
        %v1106 = vpack.c.b16 %v859, %v858
        %v1107 = vpack.c.b16 %v861, %v860
        %v1108 = vpack.c.b16 %v863, %v862
        %v1109 = vpack.c.b16 %v865, %v864
        %v1110 = vpack.c.b16 %v867, %v866
        %v1111 = vpack.c.b16 %v869, %v868
        %v1112 = vpack.c.b16 %v871, %v870
        %v1113 = vpack.c.b16 %v873, %v872
        %v1114 = vpack.c.b16 %v875, %v874
        %v1115 = vpack.c.b16 %v877, %v876
        %v1116 = vpack.c.b16 %v879, %v878
        %v1117 = vpack.c.b16 %v881, %v880
        %v1118 = vpack.c.b16 %v883, %v882
        %v1119 = vpack.c.b16 %v885, %v884
        %v1120 = vpack.c.b16 %v887, %v886
        %v1121 = vpack.c.b16 %v889, %v888
        %v1122 = vpack.c.b16 %v891, %v890
        %v1123 = vpack.c.b16 %v893, %v892
        %v1124 = vpack.c.b16 %v895, %v894
        %v1125 = vpack.c.b16 %v897, %v896
        %v1126 = vpack.c.b16 %v899, %v898
        %v1127 = vpack.c.b16 %v901, %v900
        %v1128 = vpack.c.b16 %v903, %v902
        %v1129 = vpack.c.b16 %v905, %v904
        %v1130 = vpack.c.b16 %v907, %v906
        %v1131 = vpack.c.b16 %v909, %v908
        %v1132 = vpack.c.b16 %v911, %v910
        %v1133 = vpack.c.b16 %v913, %v912
        %v1134 = vpack.c.b16 %v915, %v914
        %v1135 = vpack.c.b16 %v917, %v916
        %v1136 = vpack.c.b16 %v919, %v918
        %v1137 = vpack.c.b16 %v921, %v920
        %v1138 = vpack.c.b16 %v923, %v922
        %v1139 = vpack.c.b16 %v925, %v924
        %v1140 = vpack.c.b16 %v927, %v926
        %v1141 = vpack.c.b16 %v929, %v928
        %v1142 = vpack.c.b16 %v931, %v930
        %v1143 = vpack.c.b16 %v933, %v932
        %v1144 = vpack.c.b16 %v935, %v934
        %v1145 = vpack.c.b16 %v937, %v936
        %v1146 = vpack.c.b16 %v939, %v938
        %v1147 = vpack.c.b16 %v941, %v940
        %v1148 = vpack.c.b16 %v943, %v942
        %v1149 = vpack.c.b16 %v945, %v944
        %v1150 = vpack.c.b16 %v947, %v946
        %v1151 = vpack.c.b16 %v949, %v948
        %v1152 = vpack.c.b16 %v951, %v950
        %v1153 = vpack.c.b16 %v953, %v952
        %v1154 = vpack.c.b16 %v955, %v954
        %v1155 = vpack.c.b16 %v957, %v956
        %v1156 = vpack.c.b16 %v959, %v958
        %v1157 = vpack.c.b16 %v961, %v960
        %v1158 = vpack.c.b16 %v963, %v962
        %v1159 = vpack.c.b16 %v965, %v964
        %v1160 = vpack.c.b16 %v967, %v966
        %v1161 = vpack.c.b16 %v969, %v968
        %v1162 = vpack.c.b16 %v971, %v970
        %v1163 = vpack.c.b16 %v973, %v972
        %v1164 = vpack.c.b16 %v975, %v974
        %v1165 = vpack.c.b16 %v977, %v976
        %v1166 = vpack.c.b16 %v979, %v978
        %v1167 = vpack.c.b16 %v981, %v980
        %v1168 = vpack.c.b16 %v983, %v982
        %v1169 = vpack.c.b16 %v985, %v984
        %v1170 = vpack.c.b16 %v987, %v986
        %v1171 = vpack.c.b16 %v989, %v988
        %v1172 = vpack.c.b16 %v991, %v990
        %v1173 = vpack.c.b16 %v993, %v992
        %v1174 = vpack.c.b16 %v995, %v994
        %v1175 = vpack.c.b16 %v997, %v996
        %v1176 = vpack.c.b16 %v999, %v998
        %v1177 = vpack.c.b16 %v1001, %v1000
        %v1178 = vpack.c.b16 %v1003, %v1002
        %v1179 = vpack.c.b16 %v1005, %v1004
        %v1180 = vpack.c.b16 %v1007, %v1006
        %v1181 = vpack.c.b16 %v1009, %v1008
        %v1182 = vpack.c.b16 %v1011, %v1010
        %v1183 = vpack.c.b16 %v1013, %v1012
        %v1184 = vpack.c.b16 %v1015, %v1014
        %v1185 = vpack.c.b16 %v1017, %v1016
        %v1186 = vpack.c.b16 %v1019, %v1018
        %v1187 = vpack.c.b16 %v1021, %v1020
        %v1188 = vpack.c.b16 %v1023, %v1022
        %v1189 = vpack.c.b16 %v1025, %v1024
        %v1190 = vpack.c.b16 %v1027, %v1026
        %v1191 = vpack.c.b16 %v1029, %v1028
        %v1192 = vpack.c.b16 %v1031, %v1030
        %v1193 = vpack.c.b16 %v1033, %v1032
        %v1194 = vpack.c.b16 %v1035, %v1034
        %v1195 = vpack.c.b16 %v1037, %v1036
        %v1196 = vpack.c.b16 %v1039, %v1038
        %v1197 = vpack.c.b16 %v1041, %v1040
        %v1198 = vpack.c.b16 %v1043, %v1042
        %v1199 = vpack.c.b16 %v1045, %v1044
        %v1200 = vpack.c.b16 %v1047, %v1046
        %v1201 = vpack.c.b16 %v1049, %v1048
        %v1202 = vpack.c.b16 %v1051, %v1050
        %v1203 = vpack.c.b16 %v1053, %v1052
        %v1204 = vpack.c.b16 %v1055, %v1054
        %v1205 = vpack.c.b16 %v1057, %v1056
        %v1206 = vpack.c.b16 %v1059, %v1058
        %v1207 = vpack.c.b16 %v1061, %v1060
        %v1208 = vpack.c.b16 %v1063, %v1062
        %v1209 = vpack.c.b16 %v1065, %v1064
        %v1210 = vpack.c.b16 %v1067, %v1066
        %v1211 = vpack.c.b16 %v1069, %v1068
        %v1212 = vpack.c.b16 %v1071, %v1070
        %v1213 = vpack.c.b16 %v1073, %v1072
        %v1214 = vpack.c.b16 %v1075, %v1074
        %v1215 = vpack.c.b16 %v1077, %v1076
        %v1216 = vpack.c.b16 %v1079, %v1078
        %v1217 = vpack.c.b16 %v1081, %v1080
        %v1218 = vpack.c.b16 %v1083, %v1082
        %v1219 = vpack.c.b16 %v1085, %v1084
        %v1220 = vpack.c.b16 %v1087, %v1086
        %v1221 = vpack.c.b16 %v1089, %v1088
        %v1222 = vpack.c.b16 %v1091, %v1090
        %v1223 = vpack.c.b16 %v1093, %v1092
        %v1224 = vpack.c.b16 %v1095, %v1094
        %v1225 = vpack.c.b16 %v1097, %v1096
        %1354 = vmatprep.subr.bf16.mxu0 0
        %1355 = vmatpush1.bf16.msra.mxu0 %v1105
        %1356 = vmatprep.subr.bf16.mxu0 0
        %1357 = vmatpush1.bf16.msra.mxu0 %v1104
        %1358 = vmatprep.subr.bf16.mxu0 0
        %1359 = vmatpush1.bf16.msra.mxu0 %v1103
        %1360 = vmatprep.subr.bf16.mxu0 0
        %1361 = vmatpush1.bf16.msra.mxu0 %v1102
        %1362 = vmatprep.subr.bf16.mxu0 0
        %1363 = vmatpush1.bf16.msra.mxu0 %v1101
        %1364 = vmatprep.subr.bf16.mxu0 0
        %1365 = vmatpush1.bf16.msra.mxu0 %v1100
        %1366 = vmatprep.subr.bf16.mxu0 0
        %1367 = vmatpush1.bf16.msra.mxu0 %v1099
        %1368 = vmatprep.subr.bf16.mxu0 0
        %1369 = vmatpush1.bf16.msra.mxu0 %v1098
        %1370 = vmatprep.subr.bf16.mxu0 0
        %1371 = vmatpush2.bf16.msra.mxu0 %v1113
        %1372 = vmatprep.subr.bf16.mxu0 0
        %1373 = vmatpush2.bf16.msra.mxu0 %v1112
        %1374 = vmatprep.subr.bf16.mxu0 0
        %1375 = vmatpush2.bf16.msra.mxu0 %v1111
        %1376 = vmatprep.subr.bf16.mxu0 0
        %1377 = vmatpush2.bf16.msra.mxu0 %v1110
        %1378 = vmatprep.subr.bf16.mxu0 0
        %1379 = vmatpush2.bf16.msra.mxu0 %v1109
        %1380 = vmatprep.subr.bf16.mxu0 0
        %1381 = vmatpush2.bf16.msra.mxu0 %v1108
        %1382 = vmatprep.subr.bf16.mxu0 0
        %1383 = vmatpush2.bf16.msra.mxu0 %v1107
        %1384 = vmatprep.subr.bf16.mxu0 0
        %1385 = vmatpush2.bf16.msra.mxu0 %v1106
        %1386 = vmatprep.mubr.bf16.mxu0 %v509
        %1387 = vmatmul.mubr.bf16.gmra.mxu0 %v495
        %v1388 = vpop.f32.mrf.mxu0
        %v1389 = vadd.f32 0.0, %v1388
        %v1390 = vpop.f32.mrf.mxu0
        %v1391 = vpop.f32.mrf.mxu0
        %v1392 = vpop.f32.mrf.mxu0
        %1393 = vdwg.mxu0
        %1394 = vmatprep.subr.bf16.mxu0 0
        %1395 = vmatpush1.bf16.msra.mxu0 %v1121
        %1396 = vmatprep.subr.bf16.mxu0 0
        %1397 = vmatpush1.bf16.msra.mxu0 %v1120
        %1398 = vmatprep.subr.bf16.mxu0 0
        %1399 = vmatpush1.bf16.msra.mxu0 %v1119
        %1400 = vmatprep.subr.bf16.mxu0 0
        %1401 = vmatpush1.bf16.msra.mxu0 %v1118
        %1402 = vmatprep.subr.bf16.mxu0 0
        %1403 = vmatpush1.bf16.msra.mxu0 %v1117
        %1404 = vmatprep.subr.bf16.mxu0 0
        %1405 = vmatpush1.bf16.msra.mxu0 %v1116
        %1406 = vmatprep.subr.bf16.mxu0 0
        %1407 = vmatpush1.bf16.msra.mxu0 %v1115
        %1408 = vmatprep.subr.bf16.mxu0 0
        %1409 = vmatpush1.bf16.msra.mxu0 %v1114
        %1410 = vmatprep.subr.bf16.mxu0 0
        %1411 = vmatpush2.bf16.msra.mxu0 %v1129
        %1412 = vmatprep.subr.bf16.mxu0 0
        %1413 = vmatpush2.bf16.msra.mxu0 %v1128
        %1414 = vmatprep.subr.bf16.mxu0 0
        %1415 = vmatpush2.bf16.msra.mxu0 %v1127
        %1416 = vmatprep.subr.bf16.mxu0 0
        %1417 = vmatpush2.bf16.msra.mxu0 %v1126
        %1418 = vmatprep.subr.bf16.mxu0 0
        %1419 = vmatpush2.bf16.msra.mxu0 %v1125
        %1420 = vmatprep.subr.bf16.mxu0 0
        %1421 = vmatpush2.bf16.msra.mxu0 %v1124
        %1422 = vmatprep.subr.bf16.mxu0 0
        %1423 = vmatpush2.bf16.msra.mxu0 %v1123
        %1424 = vmatprep.subr.bf16.mxu0 0
        %1425 = vmatpush2.bf16.msra.mxu0 %v1122
        %1426 = vmatprep.mubr.bf16.mxu0 %v519
        %1427 = vmatmul.mubr.bf16.gmra.mxu0 %v517
        %v1428 = vpop.f32.mrf.mxu0
        %v1429 = vadd.f32 %v1389, %v1428
        %v1430 = vpop.f32.mrf.mxu0
        %v1431 = vpop.f32.mrf.mxu0
        %v1432 = vpop.f32.mrf.mxu0
        %1433 = vdwg.mxu0
        %1434 = vmatprep.subr.bf16.mxu0 0
        %1435 = vmatpush1.bf16.msra.mxu0 %v1137
        %1436 = vmatprep.subr.bf16.mxu0 0
        %1437 = vmatpush1.bf16.msra.mxu0 %v1136
        %1438 = vmatprep.subr.bf16.mxu0 0
        %1439 = vmatpush1.bf16.msra.mxu0 %v1135
        %1440 = vmatprep.subr.bf16.mxu0 0
        %1441 = vmatpush1.bf16.msra.mxu0 %v1134
        %1442 = vmatprep.subr.bf16.mxu0 0
        %1443 = vmatpush1.bf16.msra.mxu0 %v1133
        %1444 = vmatprep.subr.bf16.mxu0 0
        %1445 = vmatpush1.bf16.msra.mxu0 %v1132
        %1446 = vmatprep.subr.bf16.mxu0 0
        %1447 = vmatpush1.bf16.msra.mxu0 %v1131
        %1448 = vmatprep.subr.bf16.mxu0 0
        %1449 = vmatpush1.bf16.msra.mxu0 %v1130
        %1450 = vmatprep.subr.bf16.mxu0 0
        %1451 = vmatpush2.bf16.msra.mxu0 %v1145
        %1452 = vmatprep.subr.bf16.mxu0 0
        %1453 = vmatpush2.bf16.msra.mxu0 %v1144
        %1454 = vmatprep.subr.bf16.mxu0 0
        %1455 = vmatpush2.bf16.msra.mxu0 %v1143
        %1456 = vmatprep.subr.bf16.mxu0 0
        %1457 = vmatpush2.bf16.msra.mxu0 %v1142
        %1458 = vmatprep.subr.bf16.mxu0 0
        %1459 = vmatpush2.bf16.msra.mxu0 %v1141
        %1460 = vmatprep.subr.bf16.mxu0 0
        %1461 = vmatpush2.bf16.msra.mxu0 %v1140
        %1462 = vmatprep.subr.bf16.mxu0 0
        %1463 = vmatpush2.bf16.msra.mxu0 %v1139
        %1464 = vmatprep.subr.bf16.mxu0 0
        %1465 = vmatpush2.bf16.msra.mxu0 %v1138
        %1466 = vmatprep.mubr.bf16.mxu0 %v516
        %1467 = vmatmul.mubr.bf16.gmra.mxu0 %v502
        %v1468 = vpop.f32.mrf.mxu0
        %v1469 = vadd.f32 %v1429, %v1468
        %v1470 = vpop.f32.mrf.mxu0
        %v1471 = vpop.f32.mrf.mxu0
        %v1472 = vpop.f32.mrf.mxu0
        %1473 = vdwg.mxu0
        %1474 = vmatprep.subr.bf16.mxu0 0
        %1475 = vmatpush1.bf16.msra.mxu0 %v1153
        %1476 = vmatprep.subr.bf16.mxu0 0
        %1477 = vmatpush1.bf16.msra.mxu0 %v1152
        %1478 = vmatprep.subr.bf16.mxu0 0
        %1479 = vmatpush1.bf16.msra.mxu0 %v1151
        %1480 = vmatprep.subr.bf16.mxu0 0
        %1481 = vmatpush1.bf16.msra.mxu0 %v1150
        %1482 = vmatprep.subr.bf16.mxu0 0
        %1483 = vmatpush1.bf16.msra.mxu0 %v1149
        %1484 = vmatprep.subr.bf16.mxu0 0
        %1485 = vmatpush1.bf16.msra.mxu0 %v1148
        %1486 = vmatprep.subr.bf16.mxu0 0
        %1487 = vmatpush1.bf16.msra.mxu0 %v1147
        %1488 = vmatprep.subr.bf16.mxu0 0
        %1489 = vmatpush1.bf16.msra.mxu0 %v1146
        %1490 = vmatprep.subr.bf16.mxu0 0
        %1491 = vmatpush2.bf16.msra.mxu0 %v1161
        %1492 = vmatprep.subr.bf16.mxu0 0
        %1493 = vmatpush2.bf16.msra.mxu0 %v1160
        %1494 = vmatprep.subr.bf16.mxu0 0
        %1495 = vmatpush2.bf16.msra.mxu0 %v1159
        %1496 = vmatprep.subr.bf16.mxu0 0
        %1497 = vmatpush2.bf16.msra.mxu0 %v1158
        %1498 = vmatprep.subr.bf16.mxu0 0
        %1499 = vmatpush2.bf16.msra.mxu0 %v1157
        %1500 = vmatprep.subr.bf16.mxu0 0
        %1501 = vmatpush2.bf16.msra.mxu0 %v1156
        %1502 = vmatprep.subr.bf16.mxu0 0
        %1503 = vmatpush2.bf16.msra.mxu0 %v1155
        %1504 = vmatprep.subr.bf16.mxu0 0
        %1505 = vmatpush2.bf16.msra.mxu0 %v1154
        %1506 = vmatprep.mubr.bf16.mxu0 %v520
        %1507 = vmatmul.mubr.bf16.gmra.mxu0 %v518
        %v1508 = vpop.f32.mrf.mxu0
        %v1509 = vadd.f32 %v1469, %v1508
        %v1510 = vpop.f32.mrf.mxu0
        %v1511 = vpop.f32.mrf.mxu0
        %v1512 = vpop.f32.mrf.mxu0
        %1513 = vdwg.mxu0
        %1514 = vmatprep.subr.bf16.mxu0 0
        %1515 = vmatpush1.bf16.msra.mxu0 %v1169
        %1516 = vmatprep.subr.bf16.mxu0 0
        %1517 = vmatpush1.bf16.msra.mxu0 %v1168
        %1518 = vmatprep.subr.bf16.mxu0 0
        %1519 = vmatpush1.bf16.msra.mxu0 %v1167
        %1520 = vmatprep.subr.bf16.mxu0 0
        %1521 = vmatpush1.bf16.msra.mxu0 %v1166
        %1522 = vmatprep.subr.bf16.mxu0 0
        %1523 = vmatpush1.bf16.msra.mxu0 %v1165
        %1524 = vmatprep.subr.bf16.mxu0 0
        %1525 = vmatpush1.bf16.msra.mxu0 %v1164
        %1526 = vmatprep.subr.bf16.mxu0 0
        %1527 = vmatpush1.bf16.msra.mxu0 %v1163
        %1528 = vmatprep.subr.bf16.mxu0 0
        %1529 = vmatpush1.bf16.msra.mxu0 %v1162
        %1530 = vmatprep.subr.bf16.mxu0 0
        %1531 = vmatpush2.bf16.msra.mxu0 %v1177
        %1532 = vmatprep.subr.bf16.mxu0 0
        %1533 = vmatpush2.bf16.msra.mxu0 %v1176
        %1534 = vmatprep.subr.bf16.mxu0 0
        %1535 = vmatpush2.bf16.msra.mxu0 %v1175
        %1536 = vmatprep.subr.bf16.mxu0 0
        %1537 = vmatpush2.bf16.msra.mxu0 %v1174
        %1538 = vmatprep.subr.bf16.mxu0 0
        %1539 = vmatpush2.bf16.msra.mxu0 %v1173
        %1540 = vmatprep.subr.bf16.mxu0 0
        %1541 = vmatpush2.bf16.msra.mxu0 %v1172
        %1542 = vmatprep.subr.bf16.mxu0 0
        %1543 = vmatpush2.bf16.msra.mxu0 %v1171
        %1544 = vmatprep.subr.bf16.mxu0 0
        %1545 = vmatpush2.bf16.msra.mxu0 %v1170
        %1546 = vmatprep.mubr.bf16.mxu0 %v558
        %1547 = vmatmul.mubr.bf16.gmra.mxu0 %v544
        %v1548 = vpop.f32.mrf.mxu0
        %v1549 = vadd.f32 %v1509, %v1548
        %v1550 = vpop.f32.mrf.mxu0
        %v1551 = vpop.f32.mrf.mxu0
        %v1552 = vpop.f32.mrf.mxu0
        %1553 = vdwg.mxu0
        %1554 = vmatprep.subr.bf16.mxu0 0
        %1555 = vmatpush1.bf16.msra.mxu0 %v1185
        %1556 = vmatprep.subr.bf16.mxu0 0
        %1557 = vmatpush1.bf16.msra.mxu0 %v1184
        %1558 = vmatprep.subr.bf16.mxu0 0
        %1559 = vmatpush1.bf16.msra.mxu0 %v1183
        %1560 = vmatprep.subr.bf16.mxu0 0
        %1561 = vmatpush1.bf16.msra.mxu0 %v1182
        %1562 = vmatprep.subr.bf16.mxu0 0
        %1563 = vmatpush1.bf16.msra.mxu0 %v1181
        %1564 = vmatprep.subr.bf16.mxu0 0
        %1565 = vmatpush1.bf16.msra.mxu0 %v1180
        %1566 = vmatprep.subr.bf16.mxu0 0
        %1567 = vmatpush1.bf16.msra.mxu0 %v1179
        %1568 = vmatprep.subr.bf16.mxu0 0
        %1569 = vmatpush1.bf16.msra.mxu0 %v1178
        %1570 = vmatprep.subr.bf16.mxu0 0
        %1571 = vmatpush2.bf16.msra.mxu0 %v1193
        %1572 = vmatprep.subr.bf16.mxu0 0
        %1573 = vmatpush2.bf16.msra.mxu0 %v1192
        %1574 = vmatprep.subr.bf16.mxu0 0
        %1575 = vmatpush2.bf16.msra.mxu0 %v1191
        %1576 = vmatprep.subr.bf16.mxu0 0
        %1577 = vmatpush2.bf16.msra.mxu0 %v1190
        %1578 = vmatprep.subr.bf16.mxu0 0
        %1579 = vmatpush2.bf16.msra.mxu0 %v1189
        %1580 = vmatprep.subr.bf16.mxu0 0
        %1581 = vmatpush2.bf16.msra.mxu0 %v1188
        %1582 = vmatprep.subr.bf16.mxu0 0
        %1583 = vmatpush2.bf16.msra.mxu0 %v1187
        %1584 = vmatprep.subr.bf16.mxu0 0
        %1585 = vmatpush2.bf16.msra.mxu0 %v1186
        %1586 = vmatprep.mubr.bf16.mxu0 %v568
        %1587 = vmatmul.mubr.bf16.gmra.mxu0 %v566
        %v1588 = vpop.f32.mrf.mxu0
        %v1589 = vadd.f32 %v1549, %v1588
        %v1590 = vpop.f32.mrf.mxu0
        %v1591 = vpop.f32.mrf.mxu0
        %v1592 = vpop.f32.mrf.mxu0
        %1593 = vdwg.mxu0
        %1594 = vmatprep.subr.bf16.mxu0 0
        %1595 = vmatpush1.bf16.msra.mxu0 %v1201
        %1596 = vmatprep.subr.bf16.mxu0 0
        %1597 = vmatpush1.bf16.msra.mxu0 %v1200
        %1598 = vmatprep.subr.bf16.mxu0 0
        %1599 = vmatpush1.bf16.msra.mxu0 %v1199
        %1600 = vmatprep.subr.bf16.mxu0 0
        %1601 = vmatpush1.bf16.msra.mxu0 %v1198
        %1602 = vmatprep.subr.bf16.mxu0 0
        %1603 = vmatpush1.bf16.msra.mxu0 %v1197
        %1604 = vmatprep.subr.bf16.mxu0 0
        %1605 = vmatpush1.bf16.msra.mxu0 %v1196
        %1606 = vmatprep.subr.bf16.mxu0 0
        %1607 = vmatpush1.bf16.msra.mxu0 %v1195
        %1608 = vmatprep.subr.bf16.mxu0 0
        %1609 = vmatpush1.bf16.msra.mxu0 %v1194
        %1610 = vmatprep.subr.bf16.mxu0 0
        %1611 = vmatpush2.bf16.msra.mxu0 %v1209
        %1612 = vmatprep.subr.bf16.mxu0 0
        %1613 = vmatpush2.bf16.msra.mxu0 %v1208
        %1614 = vmatprep.subr.bf16.mxu0 0
        %1615 = vmatpush2.bf16.msra.mxu0 %v1207
        %1616 = vmatprep.subr.bf16.mxu0 0
        %1617 = vmatpush2.bf16.msra.mxu0 %v1206
        %1618 = vmatprep.subr.bf16.mxu0 0
        %1619 = vmatpush2.bf16.msra.mxu0 %v1205
        %1620 = vmatprep.subr.bf16.mxu0 0
        %1621 = vmatpush2.bf16.msra.mxu0 %v1204
        %1622 = vmatprep.subr.bf16.mxu0 0
        %1623 = vmatpush2.bf16.msra.mxu0 %v1203
        %1624 = vmatprep.subr.bf16.mxu0 0
        %1625 = vmatpush2.bf16.msra.mxu0 %v1202
        %1626 = vmatprep.mubr.bf16.mxu0 %v565
        %1627 = vmatmul.mubr.bf16.gmra.mxu0 %v551
        %v1628 = vpop.f32.mrf.mxu0
        %v1629 = vadd.f32 %v1589, %v1628
        %v1630 = vpop.f32.mrf.mxu0
        %v1631 = vpop.f32.mrf.mxu0
        %v1632 = vpop.f32.mrf.mxu0
        %1633 = vdwg.mxu0
        %1634 = vmatprep.subr.bf16.mxu0 0
        %1635 = vmatpush1.bf16.msra.mxu0 %v1217
        %1636 = vmatprep.subr.bf16.mxu0 0
        %1637 = vmatpush1.bf16.msra.mxu0 %v1216
        %1638 = vmatprep.subr.bf16.mxu0 0
        %1639 = vmatpush1.bf16.msra.mxu0 %v1215
        %1640 = vmatprep.subr.bf16.mxu0 0
        %1641 = vmatpush1.bf16.msra.mxu0 %v1214
        %1642 = vmatprep.subr.bf16.mxu0 0
        %1643 = vmatpush1.bf16.msra.mxu0 %v1213
        %1644 = vmatprep.subr.bf16.mxu0 0
        %1645 = vmatpush1.bf16.msra.mxu0 %v1212
        %1646 = vmatprep.subr.bf16.mxu0 0
        %1647 = vmatpush1.bf16.msra.mxu0 %v1211
        %1648 = vmatprep.subr.bf16.mxu0 0
        %1649 = vmatpush1.bf16.msra.mxu0 %v1210
        %1650 = vmatprep.subr.bf16.mxu0 0
        %1651 = vmatpush2.bf16.msra.mxu0 %v1225
        %1652 = vmatprep.subr.bf16.mxu0 0
        %1653 = vmatpush2.bf16.msra.mxu0 %v1224
        %1654 = vmatprep.subr.bf16.mxu0 0
        %1655 = vmatpush2.bf16.msra.mxu0 %v1223
        %1656 = vmatprep.subr.bf16.mxu0 0
        %1657 = vmatpush2.bf16.msra.mxu0 %v1222
        %1658 = vmatprep.subr.bf16.mxu0 0
        %1659 = vmatpush2.bf16.msra.mxu0 %v1221
        %1660 = vmatprep.subr.bf16.mxu0 0
        %1661 = vmatpush2.bf16.msra.mxu0 %v1220
        %1662 = vmatprep.subr.bf16.mxu0 0
        %1663 = vmatpush2.bf16.msra.mxu0 %v1219
        %1664 = vmatprep.subr.bf16.mxu0 0
        %1665 = vmatpush2.bf16.msra.mxu0 %v1218
        %1666 = vmatprep.mubr.bf16.mxu0 %v569
        %1667 = vmatmul.mubr.bf16.gmra.mxu0 %v567
        %v1668 = vpop.f32.mrf.mxu0
        %v1669 = vadd.f32 %v1629, %v1668
        %v1670 = vpop.f32.mrf.mxu0
        %v1671 = vpop.f32.mrf.mxu0
        %v1672 = vpop.f32.mrf.mxu0
        %1673 = vdwg.mxu0
        %v1674 = vadd.f32 %v211, %v1669
        %1675 = vst [vmem:[#allocation2] sm:$0x3] %v1674
        // Predicated region
        $region37: #{pallas_forward.4} parent=27 // pred_check
          %p1676 = pneg %p206
        $region38: #{pallas_forward.4} parent=27 // pred_check_branch
          %1678 = sbr.rel (%p1676) target = $region40
        $region39: #{pallas_forward.4} parent=27 // pred_region
          %v1679 = vld [vmem:[#allocation2] sm:$0x3]
          %1680 = vst [vmem:[%s204] sm:$0x3] %v1679
        $region40: #{pallas_forward.4} parent=27 // pred_fallthru
          _
        %p1681 = scmp.lt.s32.totalorder %s20, 1
        %s1682 = scalar_select %p1681, %s20, 1
        %s1683 = smul.addr %s1682, 2
        %s1684 = scalar_lea.vmem %s2, %s1683
        // Predicated region
        $region41: #{pallas_forward.4} parent=27 // pred_check
          %p1685 = pneg %p102
        $region42: #{pallas_forward.4} parent=27 // pred_check_branch
          %1687 = sbr.rel (%p1685) target = $region44
        $region43: #{pallas_forward.4} parent=27 // pred_region
          _
        $region44: #{pallas_forward.4} parent=27 // pred_fallthru
          _
      $region28: #{pallas_forward.4} parent=5 // pred_fallthru
        _
      %p1688 = scmp.le.s32.totalorder 2, %s11
      // Predicated region
      $region45: #{pallas_forward.4} parent=5 // pred_check
        %p1689 = pneg %p1688
      $region46: #{pallas_forward.4} parent=5 // pred_check_branch
        %1691 = sbr.rel (%p1689) target = $region48
      $region47: #{pallas_forward.4} parent=5 // pred_region
        %s1692 = ssub.s32 %s11, 2
        // Predicated region
        $region49: #{pallas_forward.4} parent=47 // pred_check
          %p1693 = pneg %p108
        $region50: #{pallas_forward.4} parent=47 // pred_check_branch
          %1695 = sbr.rel (%p1693) target = $region52
        $region51: #{pallas_forward.4} parent=47 // pred_region
          %p1696 = scmp.lt.s32.totalorder %s22, 1
          %s1697 = scalar_select %p1696, %s22, 1
          %s1698 = smul.addr %s1697, 2
          %s1699 = scalar_lea.vmem %s2, %s1698
        $region52: #{pallas_forward.4} parent=47 // pred_fallthru
          _
      $region48: #{pallas_forward.4} parent=5 // pred_fallthru
        _
    $region6: #{pallas_forward.4} parent=1 // loop_footer
      %s15 = sadd.s32 1, %s11
    $region7: #{pallas_forward.4} parent=1 // loop_footer_branch
      %10 = sbr.rel target = $region3
    $region8: #{pallas_forward.4} parent=1 // loop_exit
      _
    %1700 = vsyncpa [#allocation4], 1
    %s1701 = scalar_lea.sflag [#allocation4], 1
    %1702 = vsyncpa %s1701, 1

// kernel: pallas_forward.3
$region0: #{pallas_forward.3}
  #allocation0 [shape = 'u32[]', space=smem, size = 0x4, offset = 0x4, fixed_abs, tag = 'smem constant byte address 0x4 - core index']
  #allocation1 [shape = 'u32[144,128]{1,0:T(1,128)}', space=vmem, size = 0x12000, scoped, tag = 'internal scratch']
  %s0 = inlined_call_operand.vmem [shape: f32[8,8,24], index: 0, kind: input, shape index: {}]
  %s1 = inlined_call_operand.vmem [shape: bf16[24,128], index: 1, kind: input, shape index: {}]
  %s2 = inlined_call_operand.vmem [shape: bf16[24,128], index: 2, kind: input, shape index: {}]
  %s3 = inlined_call_operand.vmem [shape: f32[1,128], index: 3, kind: input, shape index: {}]
  %s4 = inlined_call_operand.vmem [shape: f32[1,128], index: 4, kind: input, shape index: {}]
  %s5 = inlined_call_operand.vmem [shape: bf16[256,128], index: 5, kind: input, shape index: {}]
  %s6 = inlined_call_operand.vmem [shape: bf16[256,128], index: 6, kind: input, shape index: {}]
  %s7 = inlined_call_operand.vmem [shape: f32[1,128], index: 7, kind: input, shape index: {}]
  %s8 = inlined_call_operand.vmem [shape: f32[1,128], index: 8, kind: input, shape index: {}]
  %s9 = inlined_call_operand.vmem [shape: bf16[256,128], index: 9, kind: input, shape index: {}]
  %s10 = inlined_call_operand.vmem [shape: bf16[256,128], index: 10, kind: input, shape index: {}]
  %s11 = inlined_call_operand.vmem [shape: f32[1,128], index: 11, kind: input, shape index: {}]
  %s12 = inlined_call_operand.vmem [shape: f32[1,128], index: 12, kind: input, shape index: {}]
  %s13 = inlined_call_operand.vmem [shape: bf16[8,8,128], index: 13, kind: output, shape index: {}]
  %s14 = sld [smem:[#allocation0]]
  $region62: #{pallas_forward.3} parent=0
    _
  %s16 = ssub.s32 1, %s14
  %s17 = scalar_select 0, %s16, %s14
  // Predicated region
  $region2: #{pallas_forward.3} parent=0 // pred_check
    _
  $region3: #{pallas_forward.3} parent=0 // pred_check_branch
    %19 = sbr.rel (0) target = $region5
  $region4: #{pallas_forward.3} parent=0 // pred_region
    _
  $region5: #{pallas_forward.3} parent=0 // pred_fallthru
    _
  // Predicated region
  $region6: #{pallas_forward.3} parent=0 // pred_check
    _
  $region7: #{pallas_forward.3} parent=0 // pred_check_branch
    %21 = sbr.rel (0) target = $region9
  $region8: #{pallas_forward.3} parent=0 // pred_region
    _
  $region9: #{pallas_forward.3} parent=0 // pred_fallthru
    _
  // Predicated region
  $region10: #{pallas_forward.3} parent=0 // pred_check
    _
  $region11: #{pallas_forward.3} parent=0 // pred_check_branch
    %23 = sbr.rel (0) target = $region13
  $region12: #{pallas_forward.3} parent=0 // pred_region
    _
  $region13: #{pallas_forward.3} parent=0 // pred_fallthru
    _
  // Predicated region
  $region14: #{pallas_forward.3} parent=0 // pred_check
    _
  $region15: #{pallas_forward.3} parent=0 // pred_check_branch
    %25 = sbr.rel (0) target = $region17
  $region16: #{pallas_forward.3} parent=0 // pred_region
    _
  $region17: #{pallas_forward.3} parent=0 // pred_fallthru
    _
  // Predicated region
  $region18: #{pallas_forward.3} parent=0 // pred_check
    _
  $region19: #{pallas_forward.3} parent=0 // pred_check_branch
    %27 = sbr.rel (0) target = $region21
  $region20: #{pallas_forward.3} parent=0 // pred_region
    _
  $region21: #{pallas_forward.3} parent=0 // pred_fallthru
    _
  // Predicated region
  $region22: #{pallas_forward.3} parent=0 // pred_check
    _
  $region23: #{pallas_forward.3} parent=0 // pred_check_branch
    %29 = sbr.rel (0) target = $region25
  $region24: #{pallas_forward.3} parent=0 // pred_region
    _
  $region25: #{pallas_forward.3} parent=0 // pred_fallthru
    _
  // Predicated region
  $region26: #{pallas_forward.3} parent=0 // pred_check
    _
  $region27: #{pallas_forward.3} parent=0 // pred_check_branch
    %31 = sbr.rel (0) target = $region29
  $region28: #{pallas_forward.3} parent=0 // pred_region
    _
  $region29: #{pallas_forward.3} parent=0 // pred_fallthru
    _
  // Predicated region
  $region30: #{pallas_forward.3} parent=0 // pred_check
    _
  $region31: #{pallas_forward.3} parent=0 // pred_check_branch
    %33 = sbr.rel (0) target = $region33
  $region32: #{pallas_forward.3} parent=0 // pred_region
    _
  $region33: #{pallas_forward.3} parent=0 // pred_fallthru
    _
  // Predicated region
  $region34: #{pallas_forward.3} parent=0 // pred_check
    _
  $region35: #{pallas_forward.3} parent=0 // pred_check_branch
    %35 = sbr.rel (0) target = $region37
  $region36: #{pallas_forward.3} parent=0 // pred_region
    _
  $region37: #{pallas_forward.3} parent=0 // pred_fallthru
    _
  // Predicated region
  $region38: #{pallas_forward.3} parent=0 // pred_check
    _
  $region39: #{pallas_forward.3} parent=0 // pred_check_branch
    %37 = sbr.rel (0) target = $region41
  $region40: #{pallas_forward.3} parent=0 // pred_region
    _
  $region41: #{pallas_forward.3} parent=0 // pred_fallthru
    _
  // Predicated region
  $region42: #{pallas_forward.3} parent=0 // pred_check
    _
  $region43: #{pallas_forward.3} parent=0 // pred_check_branch
    %39 = sbr.rel (0) target = $region45
  $region44: #{pallas_forward.3} parent=0 // pred_region
    _
  $region45: #{pallas_forward.3} parent=0 // pred_fallthru
    _
  // Predicated region
  $region46: #{pallas_forward.3} parent=0 // pred_check
    _
  $region47: #{pallas_forward.3} parent=0 // pred_check_branch
    %41 = sbr.rel (0) target = $region49
  $region48: #{pallas_forward.3} parent=0 // pred_region
    _
  $region49: #{pallas_forward.3} parent=0 // pred_fallthru
    _
  // Predicated region
  $region50: #{pallas_forward.3} parent=0 // pred_check
    _
  $region51: #{pallas_forward.3} parent=0 // pred_check_branch
    %43 = sbr.rel (0) target = $region53
  $region52: #{pallas_forward.3} parent=0 // pred_region
    _
  $region53: #{pallas_forward.3} parent=0 // pred_fallthru
    _
  %v45 = vld [vmem:[%s0] sm:$0xff]
  %v46 = vld [vmem:[%s0 + $0x8] sm:$0xff]
  %v47 = vld [vmem:[%s0 + $0x10] sm:$0xff]
  %v48 = vld [vmem:[%s0 + $0x18] sm:$0xff]
  %v49 = vld [vmem:[%s0 + $0x20] sm:$0xff]
  %v50 = vld [vmem:[%s0 + $0x28] sm:$0xff]
  %v51 = vld [vmem:[%s0 + $0x30] sm:$0xff]
  %v52 = vld [vmem:[%s0 + $0x38] sm:$0xff]
  %v53 = vpack.c.bf16 %v45, %v45
  %v54 = vpack.c.bf16 %v46, %v46
  %v55 = vpack.c.bf16 %v47, %v47
  %v56 = vpack.c.bf16 %v48, %v48
  %v57 = vpack.c.bf16 %v49, %v49
  %v58 = vpack.c.bf16 %v50, %v50
  %v59 = vpack.c.bf16 %v51, %v51
  %v60 = vpack.c.bf16 %v52, %v52
  %v61 = vld [vmem:[%s1] sm:$0xf]
  %v62 = vld [vmem:[%s1 + $0x4] sm:$0xf]
  %v63 = vld [vmem:[%s1 + $0x8] sm:$0xf]
  %v72 = vunpack.c.l.b16 %v53
  %v73 = vunpack.c.l.b16 %v54
  %v74 = vunpack.c.l.b16 %v55
  %v75 = vunpack.c.l.b16 %v56
  %v76 = vunpack.c.l.b16 %v57
  %v77 = vunpack.c.l.b16 %v58
  %v78 = vunpack.c.l.b16 %v59
  %v79 = vunpack.c.l.b16 %v60
  %v80 = vpack.c.b16 %v73, %v72
  %v81 = vpack.c.b16 %v75, %v74
  %v82 = vpack.c.b16 %v77, %v76
  %v83 = vpack.c.b16 %v79, %v78
  %v87 = vunpack.c.l.b16 %v61
  %v88 = vunpack.c.l.b16 %v62
  %v89 = vunpack.c.l.b16 %v63
  %v90 = vpack.c.b16 %v88, %v87
  %v91 = vpack.c.b16 %v89, %v89
  %vm93 = vcmask 195584
  %v95 = vsel %vm93, %v80, 0
  %v98 = vsel %vm93, %v81, 0
  %v101 = vsel %vm93, %v82, 0
  %v104 = vsel %vm93, %v83, 0
  %vm106 = vcmask 1043456
  %v108 = vsel %vm106, %v91, 0
  %110 = vmatprep.subr.bf16.mxu0 0
  %111 = vmatpush1.bf16.msra.mxu0 0
  %112 = vmatprep.subr.bf16.mxu0 0
  %113 = vmatpush1.bf16.msra.mxu0 0
  %114 = vmatprep.subr.bf16.mxu0 0
  %115 = vmatpush1.bf16.msra.mxu0 0
  %116 = vmatprep.subr.bf16.mxu0 0
  %117 = vmatpush1.bf16.msra.mxu0 0
  %118 = vmatprep.subr.bf16.mxu0 0
  %119 = vmatpush1.bf16.msra.mxu0 0
  %120 = vmatprep.subr.bf16.mxu0 0
  %121 = vmatpush1.bf16.msra.mxu0 0
  %122 = vmatprep.subr.bf16.mxu0 0
  %123 = vmatpush1.bf16.msra.mxu0 %v108
  %124 = vmatprep.subr.bf16.mxu0 0
  %125 = vmatpush1.bf16.msra.mxu0 %v90
  %126 = vmatprep.subr.bf16.mxu0 0
  %127 = vmatpush2.bf16.msra.mxu0 0
  %128 = vmatprep.subr.bf16.mxu0 0
  %129 = vmatpush2.bf16.msra.mxu0 0
  %130 = vmatprep.subr.bf16.mxu0 0
  %131 = vmatpush2.bf16.msra.mxu0 0
  %132 = vmatprep.subr.bf16.mxu0 0
  %133 = vmatpush2.bf16.msra.mxu0 0
  %134 = vmatprep.subr.bf16.mxu0 0
  %135 = vmatpush2.bf16.msra.mxu0 0
  %136 = vmatprep.subr.bf16.mxu0 0
  %137 = vmatpush2.bf16.msra.mxu0 0
  %138 = vmatprep.subr.bf16.mxu0 0
  %139 = vmatpush2.bf16.msra.mxu0 0
  %140 = vmatprep.subr.bf16.mxu0 0
  %141 = vmatpush2.bf16.msra.mxu0 0
  %142 = vmatprep.mubr.bf16.mxu0 0
  %143 = vmatmul.mubr.bf16.gmra.mxu0 %v95
  %v144 = vpop.f32.mrf.mxu0
  %v145 = vadd.f32 0.0, %v144
  %v146 = vpop.f32.mrf.mxu0
  %v147 = vpop.f32.mrf.mxu0
  %v148 = vadd.f32 0.0, %v147
  %v149 = vpop.f32.mrf.mxu0
  %150 = vmatprep.mubr.bf16.mxu0 0
  %151 = vmatmul.mubr.bf16.gmra.mxu0 %v98
  %v152 = vpop.f32.mrf.mxu0
  %v153 = vadd.f32 0.0, %v152
  %v154 = vpop.f32.mrf.mxu0
  %v155 = vpop.f32.mrf.mxu0
  %v156 = vadd.f32 0.0, %v155
  %v157 = vpop.f32.mrf.mxu0
  %158 = vmatprep.mubr.bf16.mxu0 0
  %159 = vmatmul.mubr.bf16.gmra.mxu0 %v101
  %v160 = vpop.f32.mrf.mxu0
  %v161 = vadd.f32 0.0, %v160
  %v162 = vpop.f32.mrf.mxu0
  %v163 = vpop.f32.mrf.mxu0
  %v164 = vadd.f32 0.0, %v163
  %v165 = vpop.f32.mrf.mxu0
  %166 = vmatprep.mubr.bf16.mxu0 0
  %167 = vmatmul.mubr.bf16.gmra.mxu0 %v104
  %v168 = vpop.f32.mrf.mxu0
  %v169 = vadd.f32 0.0, %v168
  %v170 = vpop.f32.mrf.mxu0
  %v171 = vpop.f32.mrf.mxu0
  %v172 = vadd.f32 0.0, %v171
  %v173 = vpop.f32.mrf.mxu0
  %174 = vdwg.mxu0
  %v175 = vld [vmem:[%s2] sm:$0xf]
  %v176 = vld [vmem:[%s2 + $0x4] sm:$0xf]
  %v177 = vld [vmem:[%s2 + $0x8] sm:$0xf]
  %v181 = vunpack.c.l.b16 %v175
  %v182 = vunpack.c.l.b16 %v176
  %v183 = vunpack.c.l.b16 %v177
  %v184 = vpack.c.b16 %v182, %v181
  %v185 = vpack.c.b16 %v183, %v183
  %v188 = vsel %vm106, %v185, 0
  %190 = vmatprep.subr.bf16.mxu0 0
  %191 = vmatpush1.bf16.msra.mxu0 0
  %192 = vmatprep.subr.bf16.mxu0 0
  %193 = vmatpush1.bf16.msra.mxu0 0
  %194 = vmatprep.subr.bf16.mxu0 0
  %195 = vmatpush1.bf16.msra.mxu0 0
  %196 = vmatprep.subr.bf16.mxu0 0
  %197 = vmatpush1.bf16.msra.mxu0 0
  %198 = vmatprep.subr.bf16.mxu0 0
  %199 = vmatpush1.bf16.msra.mxu0 0
  %200 = vmatprep.subr.bf16.mxu0 0
  %201 = vmatpush1.bf16.msra.mxu0 0
  %202 = vmatprep.subr.bf16.mxu0 0
  %203 = vmatpush1.bf16.msra.mxu0 %v188
  %204 = vmatprep.subr.bf16.mxu0 0
  %205 = vmatpush1.bf16.msra.mxu0 %v184
  %206 = vmatprep.subr.bf16.mxu0 0
  %207 = vmatpush2.bf16.msra.mxu0 0
  %208 = vmatprep.subr.bf16.mxu0 0
  %209 = vmatpush2.bf16.msra.mxu0 0
  %210 = vmatprep.subr.bf16.mxu0 0
  %211 = vmatpush2.bf16.msra.mxu0 0
  %212 = vmatprep.subr.bf16.mxu0 0
  %213 = vmatpush2.bf16.msra.mxu0 0
  %214 = vmatprep.subr.bf16.mxu0 0
  %215 = vmatpush2.bf16.msra.mxu0 0
  %216 = vmatprep.subr.bf16.mxu0 0
  %217 = vmatpush2.bf16.msra.mxu0 0
  %218 = vmatprep.subr.bf16.mxu0 0
  %219 = vmatpush2.bf16.msra.mxu0 0
  %220 = vmatprep.subr.bf16.mxu0 0
  %221 = vmatpush2.bf16.msra.mxu0 0
  %222 = vmatprep.mubr.bf16.mxu0 0
  %223 = vmatmul.mubr.bf16.gmra.mxu0 %v95
  %v224 = vpop.f32.mrf.mxu0
  %v225 = vadd.f32 0.0, %v224
  %v226 = vpop.f32.mrf.mxu0
  %v227 = vpop.f32.mrf.mxu0
  %v228 = vadd.f32 0.0, %v227
  %v229 = vpop.f32.mrf.mxu0
  %230 = vmatprep.mubr.bf16.mxu0 0
  %231 = vmatmul.mubr.bf16.gmra.mxu0 %v98
  %v232 = vpop.f32.mrf.mxu0
  %v233 = vadd.f32 0.0, %v232
  %v234 = vpop.f32.mrf.mxu0
  %v235 = vpop.f32.mrf.mxu0
  %v236 = vadd.f32 0.0, %v235
  %v237 = vpop.f32.mrf.mxu0
  %238 = vmatprep.mubr.bf16.mxu0 0
  %239 = vmatmul.mubr.bf16.gmra.mxu0 %v101
  %v240 = vpop.f32.mrf.mxu0
  %v241 = vadd.f32 0.0, %v240
  %v242 = vpop.f32.mrf.mxu0
  %v243 = vpop.f32.mrf.mxu0
  %v244 = vadd.f32 0.0, %v243
  %v245 = vpop.f32.mrf.mxu0
  %246 = vmatprep.mubr.bf16.mxu0 0
  %247 = vmatmul.mubr.bf16.gmra.mxu0 %v104
  %v248 = vpop.f32.mrf.mxu0
  %v249 = vadd.f32 0.0, %v248
  %v250 = vpop.f32.mrf.mxu0
  %v251 = vpop.f32.mrf.mxu0
  %v252 = vadd.f32 0.0, %v251
  %v253 = vpop.f32.mrf.mxu0
  %254 = vdwg.mxu0
  %v255 = vld [vmem:[%s3] sm:$0x1]
  %v256 = vld [vmem:[%s4] sm:$0x1]
  %v258 = vlaneseq
  %v259 = vshrl.u32 %v258, 7
  %v260 = vsub.s32 0, %v259
  %v261 = vrot.slane %v255, %v260
  %v263 = vmul.f32 %v145, %v261
  %v264 = vmul.f32 %v148, %v261
  %v265 = vmul.f32 %v153, %v261
  %v266 = vmul.f32 %v156, %v261
  %v267 = vmul.f32 %v161, %v261
  %v268 = vmul.f32 %v164, %v261
  %v269 = vmul.f32 %v169, %v261
  %v270 = vmul.f32 %v172, %v261
  %v272 = vlaneseq
  %v273 = vshrl.u32 %v272, 7
  %v274 = vsub.s32 0, %v273
  %v275 = vrot.slane %v256, %v274
  %v277 = vadd.f32 %v263, %v275
  %v278 = vadd.f32 %v264, %v275
  %v279 = vadd.f32 %v265, %v275
  %v280 = vadd.f32 %v266, %v275
  %v281 = vadd.f32 %v267, %v275
  %v282 = vadd.f32 %v268, %v275
  %v283 = vadd.f32 %v269, %v275
  %v284 = vadd.f32 %v270, %v275
  %v285 = vmul.f32 %v277, 0.5
  %v286 = vmul.f32 %v278, 0.5
  %v287 = vmul.f32 %v279, 0.5
  %v288 = vmul.f32 %v280, 0.5
  %v289 = vmul.f32 %v281, 0.5
  %v290 = vmul.f32 %v282, 0.5
  %v291 = vmul.f32 %v283, 0.5
  %v292 = vmul.f32 %v284, 0.5
  %v293 = vtanh.pop %v285
  %v294 = vtanh.pop %v286
  %v295 = vtanh.pop %v287
  %v296 = vtanh.pop %v288
  %v297 = vtanh.pop %v289
  %v298 = vtanh.pop %v290
  %v299 = vtanh.pop %v291
  %v300 = vtanh.pop %v292
  %v301 = vmul.f32 %v293, 0.5
  %v302 = vmul.f32 %v294, 0.5
  %v303 = vmul.f32 %v295, 0.5
  %v304 = vmul.f32 %v296, 0.5
  %v305 = vmul.f32 %v297, 0.5
  %v306 = vmul.f32 %v298, 0.5
  %v307 = vmul.f32 %v299, 0.5
  %v308 = vmul.f32 %v300, 0.5
  %v309 = vadd.f32 %v301, 0.5
  %v310 = vadd.f32 %v302, 0.5
  %v311 = vadd.f32 %v303, 0.5
  %v312 = vadd.f32 %v304, 0.5
  %v313 = vadd.f32 %v305, 0.5
  %v314 = vadd.f32 %v306, 0.5
  %v315 = vadd.f32 %v307, 0.5
  %v316 = vadd.f32 %v308, 0.5
  %v317 = vmul.f32 %v225, %v261
  %v318 = vmul.f32 %v228, %v261
  %v319 = vmul.f32 %v233, %v261
  %v320 = vmul.f32 %v236, %v261
  %v321 = vmul.f32 %v241, %v261
  %v322 = vmul.f32 %v244, %v261
  %v323 = vmul.f32 %v249, %v261
  %v324 = vmul.f32 %v252, %v261
  %v325 = vadd.f32 %v317, %v275
  %v326 = vadd.f32 %v318, %v275
  %v327 = vadd.f32 %v319, %v275
  %v328 = vadd.f32 %v320, %v275
  %v329 = vadd.f32 %v321, %v275
  %v330 = vadd.f32 %v322, %v275
  %v331 = vadd.f32 %v323, %v275
  %v332 = vadd.f32 %v324, %v275
  %v333 = vmul.f32 %v325, 0.5
  %v334 = vmul.f32 %v326, 0.5
  %v335 = vmul.f32 %v327, 0.5
  %v336 = vmul.f32 %v328, 0.5
  %v337 = vmul.f32 %v329, 0.5
  %v338 = vmul.f32 %v330, 0.5
  %v339 = vmul.f32 %v331, 0.5
  %v340 = vmul.f32 %v332, 0.5
  %v341 = vtanh.pop %v333
  %v342 = vtanh.pop %v334
  %v343 = vtanh.pop %v335
  %v344 = vtanh.pop %v336
  %v345 = vtanh.pop %v337
  %v346 = vtanh.pop %v338
  %v347 = vtanh.pop %v339
  %v348 = vtanh.pop %v340
  %v349 = vmul.f32 %v341, 0.5
  %v350 = vmul.f32 %v342, 0.5
  %v351 = vmul.f32 %v343, 0.5
  %v352 = vmul.f32 %v344, 0.5
  %v353 = vmul.f32 %v345, 0.5
  %v354 = vmul.f32 %v346, 0.5
  %v355 = vmul.f32 %v347, 0.5
  %v356 = vmul.f32 %v348, 0.5
  %v357 = vadd.f32 %v349, 0.5
  %v358 = vadd.f32 %v350, 0.5
  %v359 = vadd.f32 %v351, 0.5
  %v360 = vadd.f32 %v352, 0.5
  %v361 = vadd.f32 %v353, 0.5
  %v362 = vadd.f32 %v354, 0.5
  %v363 = vadd.f32 %v355, 0.5
  %v364 = vadd.f32 %v356, 0.5
  %v365 = vmax.f32 %v309, %v357
  %v366 = vmax.f32 %v310, %v358
  %v367 = vmax.f32 %v311, %v359
  %v368 = vmax.f32 %v312, %v360
  %v369 = vmax.f32 %v313, %v361
  %v370 = vmax.f32 %v314, %v362
  %v371 = vmax.f32 %v315, %v363
  %v372 = vmax.f32 %v316, %v364
  %v373 = vpack.c.bf16 %v365, %v365
  %v374 = vpack.c.bf16 %v366, %v366
  %v375 = vpack.c.bf16 %v367, %v367
  %v376 = vpack.c.bf16 %v368, %v368
  %v377 = vpack.c.bf16 %v369, %v369
  %v378 = vpack.c.bf16 %v370, %v370
  %v379 = vpack.c.bf16 %v371, %v371
  %v380 = vpack.c.bf16 %v372, %v372
  %v382 = vshrl.u32 %v373, 16
  %v384 = vrot.slane %v382, 7
  %v385 = vshll.u32 %v373, 16
  %v387 = vor.u32 %v384, %v385
  %v389 = vshrl.u32 %v374, 16
  %v391 = vrot.slane %v389, 7
  %v392 = vshll.u32 %v374, 16
  %v394 = vor.u32 %v391, %v392
  %v396 = vshrl.u32 %v375, 16
  %v398 = vrot.slane %v396, 7
  %v399 = vshll.u32 %v375, 16
  %v401 = vor.u32 %v398, %v399
  %v403 = vshrl.u32 %v376, 16
  %v405 = vrot.slane %v403, 7
  %v406 = vshll.u32 %v376, 16
  %v408 = vor.u32 %v405, %v406
  %v410 = vshrl.u32 %v377, 16
  %v412 = vrot.slane %v410, 7
  %v413 = vshll.u32 %v377, 16
  %v415 = vor.u32 %v412, %v413
  %v417 = vshrl.u32 %v378, 16
  %v419 = vrot.slane %v417, 7
  %v420 = vshll.u32 %v378, 16
  %v422 = vor.u32 %v419, %v420
  %v424 = vshrl.u32 %v379, 16
  %v426 = vrot.slane %v424, 7
  %v427 = vshll.u32 %v379, 16
  %v429 = vor.u32 %v426, %v427
  %v431 = vshrl.u32 %v380, 16
  %v433 = vrot.slane %v431, 7
  %v434 = vshll.u32 %v380, 16
  %v436 = vor.u32 %v433, %v434
  %vm445 = vcmask 1040384
  %vm446 = vsmask.f32 256
  %vm447 = vmand %vm445, %vm446
  %v448 = vsel %vm447, 0, %v387
  %v449 = vsel %vm447, 0, %v394
  %v450 = vsel %vm447, 0, %v401
  %v451 = vsel %vm447, 0, %v408
  %v452 = vsel %vm447, 0, %v415
  %v453 = vsel %vm447, 0, %v422
  %v454 = vsel %vm447, 0, %v429
  %v455 = vsel %vm447, 0, %v436
  %v456 = vrot.slane %v385, 1
  %v457 = vor.u32 %v382, %v456
  %v458 = vrot.slane %v392, 1
  %v459 = vor.u32 %v389, %v458
  %v460 = vrot.slane %v399, 1
  %v461 = vor.u32 %v396, %v460
  %v462 = vrot.slane %v406, 1
  %v463 = vor.u32 %v403, %v462
  %v464 = vrot.slane %v413, 1
  %v465 = vor.u32 %v410, %v464
  %v466 = vrot.slane %v420, 1
  %v467 = vor.u32 %v417, %v466
  %v468 = vrot.slane %v427, 1
  %v469 = vor.u32 %v424, %v468
  %v470 = vrot.slane %v434, 1
  %v471 = vor.u32 %v431, %v470
  %vm480 = vcmask 1043456
  %vm481 = vsmask.f32 3328
  %vm482 = vmand %vm480, %vm481
  %v483 = vsel %vm482, %v457, 0
  %v484 = vsel %vm482, %v459, 0
  %v485 = vsel %vm482, %v461, 0
  %v486 = vsel %vm482, %v463, 0
  %v487 = vsel %vm482, %v465, 0
  %v488 = vsel %vm482, %v467, 0
  %v489 = vsel %vm482, %v469, 0
  %v490 = vsel %vm482, %v471, 0
  %v507 = vunpack.c.l.b16 %v448
  %v508 = vunpack.c.l.b16 %v373
  %v509 = vunpack.c.l.b16 %v449
  %v510 = vunpack.c.l.b16 %v374
  %v511 = vunpack.c.l.b16 %v450
  %v512 = vunpack.c.l.b16 %v375
  %v513 = vunpack.c.l.b16 %v451
  %v514 = vunpack.c.l.b16 %v376
  %v515 = vunpack.c.l.b16 %v452
  %v516 = vunpack.c.l.b16 %v377
  %v517 = vunpack.c.l.b16 %v453
  %v518 = vunpack.c.l.b16 %v378
  %v519 = vunpack.c.l.b16 %v454
  %v520 = vunpack.c.l.b16 %v379
  %v521 = vunpack.c.l.b16 %v455
  %v522 = vunpack.c.l.b16 %v380
  %v523 = vld [vmem:[%s5] sm:$0xf]
  %v524 = vld [vmem:[%s5 + $0x4] sm:$0xf]
  %v525 = vld [vmem:[%s5 + $0x8] sm:$0xf]
  %v526 = vld [vmem:[%s5 + $0xc] sm:$0xf]
  %v527 = vld [vmem:[%s5 + $0x10] sm:$0xf]
  %v528 = vld [vmem:[%s5 + $0x14] sm:$0xf]
  %v529 = vld [vmem:[%s5 + $0x18] sm:$0xf]
  %v530 = vld [vmem:[%s5 + $0x1c] sm:$0xf]
  %v531 = vld [vmem:[%s5 + $0x20] sm:$0xf]
  %v532 = vld [vmem:[%s5 + $0x24] sm:$0xf]
  %v533 = vld [vmem:[%s5 + $0x28] sm:$0xf]
  %v534 = vld [vmem:[%s5 + $0x2c] sm:$0xf]
  %v535 = vld [vmem:[%s5 + $0x30] sm:$0xf]
  %v536 = vld [vmem:[%s5 + $0x34] sm:$0xf]
  %v537 = vld [vmem:[%s5 + $0x38] sm:$0xf]
  %v538 = vld [vmem:[%s5 + $0x3c] sm:$0xf]
  %v539 = vld [vmem:[%s5 + $0x40] sm:$0xf]
  %v540 = vld [vmem:[%s5 + $0x44] sm:$0xf]
  %v541 = vld [vmem:[%s5 + $0x48] sm:$0xf]
  %v542 = vld [vmem:[%s5 + $0x4c] sm:$0xf]
  %v543 = vld [vmem:[%s5 + $0x50] sm:$0xf]
  %v544 = vld [vmem:[%s5 + $0x54] sm:$0xf]
  %v545 = vld [vmem:[%s5 + $0x58] sm:$0xf]
  %v546 = vld [vmem:[%s5 + $0x5c] sm:$0xf]
  %v547 = vld [vmem:[%s5 + $0x60] sm:$0xf]
  %v548 = vld [vmem:[%s5 + $0x64] sm:$0xf]
  %v549 = vld [vmem:[%s5 + $0x68] sm:$0xf]
  %v550 = vld [vmem:[%s5 + $0x6c] sm:$0xf]
  %v551 = vld [vmem:[%s5 + $0x70] sm:$0xf]
  %v552 = vld [vmem:[%s5 + $0x74] sm:$0xf]
  %v553 = vld [vmem:[%s5 + $0x78] sm:$0xf]
  %v554 = vld [vmem:[%s5 + $0x7c] sm:$0xf]
  %v555 = vpack.c.b16 %v509, %v507
  %v556 = vpack.c.b16 %v510, %v508
  %v557 = vpack.c.b16 %v513, %v511
  %v558 = vpack.c.b16 %v514, %v512
  %v559 = vpack.c.b16 %v517, %v515
  %v560 = vpack.c.b16 %v518, %v516
  %v561 = vpack.c.b16 %v521, %v519
  %v562 = vpack.c.b16 %v522, %v520
  %v603 = vunpack.c.l.b16 %v523
  %v604 = vunpack.c.l.b16 %v524
  %v605 = vunpack.c.l.b16 %v525
  %v606 = vunpack.c.l.b16 %v526
  %v607 = vunpack.c.l.b16 %v527
  %v608 = vunpack.c.l.b16 %v528
  %v609 = vunpack.c.l.b16 %v529
  %v610 = vunpack.c.l.b16 %v530
  %v611 = vunpack.c.l.b16 %v531
  %v612 = vunpack.c.l.b16 %v532
  %v613 = vunpack.c.l.b16 %v533
  %v614 = vunpack.c.l.b16 %v534
  %v615 = vunpack.c.l.b16 %v535
  %v616 = vunpack.c.l.b16 %v536
  %v617 = vunpack.c.l.b16 %v537
  %v618 = vunpack.c.l.b16 %v538
  %v619 = vunpack.c.l.b16 %v539
  %v620 = vunpack.c.l.b16 %v540
  %v621 = vunpack.c.l.b16 %v541
  %v622 = vunpack.c.l.b16 %v542
  %v623 = vunpack.c.l.b16 %v543
  %v624 = vunpack.c.l.b16 %v544
  %v625 = vunpack.c.l.b16 %v545
  %v626 = vunpack.c.l.b16 %v546
  %v627 = vunpack.c.l.b16 %v547
  %v628 = vunpack.c.l.b16 %v548
  %v629 = vunpack.c.l.b16 %v549
  %v630 = vunpack.c.l.b16 %v550
  %v631 = vunpack.c.l.b16 %v551
  %v632 = vunpack.c.l.b16 %v552
  %v633 = vunpack.c.l.b16 %v553
  %v634 = vunpack.c.l.b16 %v554
  %v635 = vpack.c.b16 %v604, %v603
  %v636 = vpack.c.b16 %v606, %v605
  %v637 = vpack.c.b16 %v608, %v607
  %v638 = vpack.c.b16 %v610, %v609
  %v639 = vpack.c.b16 %v612, %v611
  %v640 = vpack.c.b16 %v614, %v613
  %v641 = vpack.c.b16 %v616, %v615
  %v642 = vpack.c.b16 %v618, %v617
  %v643 = vpack.c.b16 %v620, %v619
  %v644 = vpack.c.b16 %v622, %v621
  %v645 = vpack.c.b16 %v624, %v623
  %v646 = vpack.c.b16 %v626, %v625
  %v647 = vpack.c.b16 %v628, %v627
  %v648 = vpack.c.b16 %v630, %v629
  %v649 = vpack.c.b16 %v632, %v631
  %v650 = vpack.c.b16 %v634, %v633
  %667 = vmatprep.subr.bf16.mxu0 0
  %668 = vmatpush1.bf16.msra.mxu0 %v642
  %669 = vmatprep.subr.bf16.mxu0 0
  %670 = vmatpush1.bf16.msra.mxu0 %v641
  %671 = vmatprep.subr.bf16.mxu0 0
  %672 = vmatpush1.bf16.msra.mxu0 %v640
  %673 = vmatprep.subr.bf16.mxu0 0
  %674 = vmatpush1.bf16.msra.mxu0 %v639
  %675 = vmatprep.subr.bf16.mxu0 0
  %676 = vmatpush1.bf16.msra.mxu0 %v638
  %677 = vmatprep.subr.bf16.mxu0 0
  %678 = vmatpush1.bf16.msra.mxu0 %v637
  %679 = vmatprep.subr.bf16.mxu0 0
  %680 = vmatpush1.bf16.msra.mxu0 %v636
  %681 = vmatprep.subr.bf16.mxu0 0
  %682 = vmatpush1.bf16.msra.mxu0 %v635
  %683 = vmatprep.subr.bf16.mxu0 0
  %684 = vmatpush2.bf16.msra.mxu0 %v650
  %685 = vmatprep.subr.bf16.mxu0 0
  %686 = vmatpush2.bf16.msra.mxu0 %v649
  %687 = vmatprep.subr.bf16.mxu0 0
  %688 = vmatpush2.bf16.msra.mxu0 %v648
  %689 = vmatprep.subr.bf16.mxu0 0
  %690 = vmatpush2.bf16.msra.mxu0 %v647
  %691 = vmatprep.subr.bf16.mxu0 0
  %692 = vmatpush2.bf16.msra.mxu0 %v646
  %693 = vmatprep.subr.bf16.mxu0 0
  %694 = vmatpush2.bf16.msra.mxu0 %v645
  %695 = vmatprep.subr.bf16.mxu0 0
  %696 = vmatpush2.bf16.msra.mxu0 %v644
  %697 = vmatprep.subr.bf16.mxu0 0
  %698 = vmatpush2.bf16.msra.mxu0 %v643
  %699 = vmatprep.mubr.bf16.mxu0 %v556
  %700 = vmatmul.mubr.bf16.gmra.mxu0 %v555
  %v701 = vpop.f32.mrf.mxu0
  %v702 = vadd.f32 0.0, %v701
  %v703 = vpop.f32.mrf.mxu0
  %v704 = vpop.f32.mrf.mxu0
  %v705 = vadd.f32 0.0, %v704
  %v706 = vpop.f32.mrf.mxu0
  %707 = vmatprep.mubr.bf16.mxu0 %v558
  %708 = vmatmul.mubr.bf16.gmra.mxu0 %v557
  %v709 = vpop.f32.mrf.mxu0
  %v710 = vadd.f32 0.0, %v709
  %v711 = vpop.f32.mrf.mxu0
  %v712 = vpop.f32.mrf.mxu0
  %v713 = vadd.f32 0.0, %v712
  %v714 = vpop.f32.mrf.mxu0
  %715 = vmatprep.mubr.bf16.mxu0 %v560
  %716 = vmatmul.mubr.bf16.gmra.mxu0 %v559
  %v717 = vpop.f32.mrf.mxu0
  %v718 = vadd.f32 0.0, %v717
  %v719 = vpop.f32.mrf.mxu0
  %v720 = vpop.f32.mrf.mxu0
  %v721 = vadd.f32 0.0, %v720
  %v722 = vpop.f32.mrf.mxu0
  %723 = vmatprep.mubr.bf16.mxu0 %v562
  %724 = vmatmul.mubr.bf16.gmra.mxu0 %v561
  %v725 = vpop.f32.mrf.mxu0
  %v726 = vadd.f32 0.0, %v725
  %v727 = vpop.f32.mrf.mxu0
  %v728 = vpop.f32.mrf.mxu0
  %v729 = vadd.f32 0.0, %v728
  %v730 = vpop.f32.mrf.mxu0
  %731 = vdwg.mxu0
  %v740 = vunpack.c.l.b16 %v483
  %v741 = vunpack.c.l.b16 %v484
  %v742 = vunpack.c.l.b16 %v485
  %v743 = vunpack.c.l.b16 %v486
  %v744 = vunpack.c.l.b16 %v487
  %v745 = vunpack.c.l.b16 %v488
  %v746 = vunpack.c.l.b16 %v489
  %v747 = vunpack.c.l.b16 %v490
  %v748 = vld [vmem:[%s6] sm:$0xf]
  %v749 = vld [vmem:[%s6 + $0x4] sm:$0xf]
  %v750 = vld [vmem:[%s6 + $0x8] sm:$0xf]
  %v751 = vld [vmem:[%s6 + $0xc] sm:$0xf]
  %v752 = vld [vmem:[%s6 + $0x10] sm:$0xf]
  %v753 = vld [vmem:[%s6 + $0x14] sm:$0xf]
  %v754 = vld [vmem:[%s6 + $0x18] sm:$0xf]
  %v755 = vld [vmem:[%s6 + $0x1c] sm:$0xf]
  %v756 = vld [vmem:[%s6 + $0x20] sm:$0xf]
  %v757 = vld [vmem:[%s6 + $0x24] sm:$0xf]
  %v758 = vld [vmem:[%s6 + $0x28] sm:$0xf]
  %v759 = vld [vmem:[%s6 + $0x2c] sm:$0xf]
  %v760 = vld [vmem:[%s6 + $0x30] sm:$0xf]
  %v761 = vld [vmem:[%s6 + $0x34] sm:$0xf]
  %v762 = vld [vmem:[%s6 + $0x38] sm:$0xf]
  %v763 = vld [vmem:[%s6 + $0x3c] sm:$0xf]
  %v764 = vld [vmem:[%s6 + $0x40] sm:$0xf]
  %v765 = vld [vmem:[%s6 + $0x44] sm:$0xf]
  %v766 = vld [vmem:[%s6 + $0x48] sm:$0xf]
  %v767 = vld [vmem:[%s6 + $0x4c] sm:$0xf]
  %v768 = vld [vmem:[%s6 + $0x50] sm:$0xf]
  %v769 = vld [vmem:[%s6 + $0x54] sm:$0xf]
  %v770 = vld [vmem:[%s6 + $0x58] sm:$0xf]
  %v771 = vld [vmem:[%s6 + $0x5c] sm:$0xf]
  %v772 = vld [vmem:[%s6 + $0x60] sm:$0xf]
  %v773 = vld [vmem:[%s6 + $0x64] sm:$0xf]
  %v774 = vld [vmem:[%s6 + $0x68] sm:$0xf]
  %v775 = vld [vmem:[%s6 + $0x6c] sm:$0xf]
  %v776 = vld [vmem:[%s6 + $0x70] sm:$0xf]
  %v777 = vld [vmem:[%s6 + $0x74] sm:$0xf]
  %v778 = vld [vmem:[%s6 + $0x78] sm:$0xf]
  %v779 = vld [vmem:[%s6 + $0x7c] sm:$0xf]
  %v780 = vpack.c.b16 %v741, %v740
  %v781 = vpack.c.b16 %v743, %v742
  %v782 = vpack.c.b16 %v745, %v744
  %v783 = vpack.c.b16 %v747, %v746
  %v820 = vunpack.c.l.b16 %v748
  %v821 = vunpack.c.l.b16 %v749
  %v822 = vunpack.c.l.b16 %v750
  %v823 = vunpack.c.l.b16 %v751
  %v824 = vunpack.c.l.b16 %v752
  %v825 = vunpack.c.l.b16 %v753
  %v826 = vunpack.c.l.b16 %v754
  %v827 = vunpack.c.l.b16 %v755
  %v828 = vunpack.c.l.b16 %v756
  %v829 = vunpack.c.l.b16 %v757
  %v830 = vunpack.c.l.b16 %v758
  %v831 = vunpack.c.l.b16 %v759
  %v832 = vunpack.c.l.b16 %v760
  %v833 = vunpack.c.l.b16 %v761
  %v834 = vunpack.c.l.b16 %v762
  %v835 = vunpack.c.l.b16 %v763
  %v836 = vunpack.c.l.b16 %v764
  %v837 = vunpack.c.l.b16 %v765
  %v838 = vunpack.c.l.b16 %v766
  %v839 = vunpack.c.l.b16 %v767
  %v840 = vunpack.c.l.b16 %v768
  %v841 = vunpack.c.l.b16 %v769
  %v842 = vunpack.c.l.b16 %v770
  %v843 = vunpack.c.l.b16 %v771
  %v844 = vunpack.c.l.b16 %v772
  %v845 = vunpack.c.l.b16 %v773
  %v846 = vunpack.c.l.b16 %v774
  %v847 = vunpack.c.l.b16 %v775
  %v848 = vunpack.c.l.b16 %v776
  %v849 = vunpack.c.l.b16 %v777
  %v850 = vunpack.c.l.b16 %v778
  %v851 = vunpack.c.l.b16 %v779
  %v852 = vpack.c.b16 %v821, %v820
  %v853 = vpack.c.b16 %v823, %v822
  %v854 = vpack.c.b16 %v825, %v824
  %v855 = vpack.c.b16 %v827, %v826
  %v856 = vpack.c.b16 %v829, %v828
  %v857 = vpack.c.b16 %v831, %v830
  %v858 = vpack.c.b16 %v833, %v832
  %v859 = vpack.c.b16 %v835, %v834
  %v860 = vpack.c.b16 %v837, %v836
  %v861 = vpack.c.b16 %v839, %v838
  %v862 = vpack.c.b16 %v841, %v840
  %v863 = vpack.c.b16 %v843, %v842
  %v864 = vpack.c.b16 %v845, %v844
  %v865 = vpack.c.b16 %v847, %v846
  %v866 = vpack.c.b16 %v849, %v848
  %v867 = vpack.c.b16 %v851, %v850
  %884 = vmatprep.subr.bf16.mxu0 0
  %885 = vmatpush1.bf16.msra.mxu0 %v859
  %886 = vmatprep.subr.bf16.mxu0 0
  %887 = vmatpush1.bf16.msra.mxu0 %v858
  %888 = vmatprep.subr.bf16.mxu0 0
  %889 = vmatpush1.bf16.msra.mxu0 %v857
  %890 = vmatprep.subr.bf16.mxu0 0
  %891 = vmatpush1.bf16.msra.mxu0 %v856
  %892 = vmatprep.subr.bf16.mxu0 0
  %893 = vmatpush1.bf16.msra.mxu0 %v855
  %894 = vmatprep.subr.bf16.mxu0 0
  %895 = vmatpush1.bf16.msra.mxu0 %v854
  %896 = vmatprep.subr.bf16.mxu0 0
  %897 = vmatpush1.bf16.msra.mxu0 %v853
  %898 = vmatprep.subr.bf16.mxu0 0
  %899 = vmatpush1.bf16.msra.mxu0 %v852
  %900 = vmatprep.subr.bf16.mxu0 0
  %901 = vmatpush2.bf16.msra.mxu0 %v867
  %902 = vmatprep.subr.bf16.mxu0 0
  %903 = vmatpush2.bf16.msra.mxu0 %v866
  %904 = vmatprep.subr.bf16.mxu0 0
  %905 = vmatpush2.bf16.msra.mxu0 %v865
  %906 = vmatprep.subr.bf16.mxu0 0
  %907 = vmatpush2.bf16.msra.mxu0 %v864
  %908 = vmatprep.subr.bf16.mxu0 0
  %909 = vmatpush2.bf16.msra.mxu0 %v863
  %910 = vmatprep.subr.bf16.mxu0 0
  %911 = vmatpush2.bf16.msra.mxu0 %v862
  %912 = vmatprep.subr.bf16.mxu0 0
  %913 = vmatpush2.bf16.msra.mxu0 %v861
  %914 = vmatprep.subr.bf16.mxu0 0
  %915 = vmatpush2.bf16.msra.mxu0 %v860
  %916 = vmatprep.mubr.bf16.mxu0 %v780
  %917 = vmatmul.mubr.bf16.gmra.mxu0 %v556
  %v918 = vpop.f32.mrf.mxu0
  %v919 = vadd.f32 0.0, %v918
  %v920 = vpop.f32.mrf.mxu0
  %v921 = vpop.f32.mrf.mxu0
  %v922 = vadd.f32 0.0, %v921
  %v923 = vpop.f32.mrf.mxu0
  %924 = vmatprep.mubr.bf16.mxu0 %v781
  %925 = vmatmul.mubr.bf16.gmra.mxu0 %v558
  %v926 = vpop.f32.mrf.mxu0
  %v927 = vadd.f32 0.0, %v926
  %v928 = vpop.f32.mrf.mxu0
  %v929 = vpop.f32.mrf.mxu0
  %v930 = vadd.f32 0.0, %v929
  %v931 = vpop.f32.mrf.mxu0
  %932 = vmatprep.mubr.bf16.mxu0 %v782
  %933 = vmatmul.mubr.bf16.gmra.mxu0 %v560
  %v934 = vpop.f32.mrf.mxu0
  %v935 = vadd.f32 0.0, %v934
  %v936 = vpop.f32.mrf.mxu0
  %v937 = vpop.f32.mrf.mxu0
  %v938 = vadd.f32 0.0, %v937
  %v939 = vpop.f32.mrf.mxu0
  %940 = vmatprep.mubr.bf16.mxu0 %v783
  %941 = vmatmul.mubr.bf16.gmra.mxu0 %v562
  %v942 = vpop.f32.mrf.mxu0
  %v943 = vadd.f32 0.0, %v942
  %v944 = vpop.f32.mrf.mxu0
  %v945 = vpop.f32.mrf.mxu0
  %v946 = vadd.f32 0.0, %v945
  %v947 = vpop.f32.mrf.mxu0
  %948 = vdwg.mxu0
  %v949 = vld [vmem:[%s7] sm:$0x1]
  %v950 = vld [vmem:[%s8] sm:$0x1]
  %v952 = vlaneseq
  %v953 = vshrl.u32 %v952, 7
  %v954 = vsub.s32 0, %v953
  %v955 = vrot.slane %v949, %v954
  %v957 = vmul.f32 %v702, %v955
  %v958 = vmul.f32 %v705, %v955
  %v959 = vmul.f32 %v710, %v955
  %v960 = vmul.f32 %v713, %v955
  %v961 = vmul.f32 %v718, %v955
  %v962 = vmul.f32 %v721, %v955
  %v963 = vmul.f32 %v726, %v955
  %v964 = vmul.f32 %v729, %v955
  %v966 = vlaneseq
  %v967 = vshrl.u32 %v966, 7
  %v968 = vsub.s32 0, %v967
  %v969 = vrot.slane %v950, %v968
  %v971 = vadd.f32 %v957, %v969
  %v972 = vadd.f32 %v958, %v969
  %v973 = vadd.f32 %v959, %v969
  %v974 = vadd.f32 %v960, %v969
  %v975 = vadd.f32 %v961, %v969
  %v976 = vadd.f32 %v962, %v969
  %v977 = vadd.f32 %v963, %v969
  %v978 = vadd.f32 %v964, %v969
  %v979 = vmul.f32 %v971, 0.5
  %v980 = vmul.f32 %v972, 0.5
  %v981 = vmul.f32 %v973, 0.5
  %v982 = vmul.f32 %v974, 0.5
  %v983 = vmul.f32 %v975, 0.5
  %v984 = vmul.f32 %v976, 0.5
  %v985 = vmul.f32 %v977, 0.5
  %v986 = vmul.f32 %v978, 0.5
  %v987 = vtanh.pop %v979
  %v988 = vtanh.pop %v980
  %v989 = vtanh.pop %v981
  %v990 = vtanh.pop %v982
  %v991 = vtanh.pop %v983
  %v992 = vtanh.pop %v984
  %v993 = vtanh.pop %v985
  %v994 = vtanh.pop %v986
  %v995 = vmul.f32 %v987, 0.5
  %v996 = vmul.f32 %v988, 0.5
  %v997 = vmul.f32 %v989, 0.5
  %v998 = vmul.f32 %v990, 0.5
  %v999 = vmul.f32 %v991, 0.5
  %v1000 = vmul.f32 %v992, 0.5
  %v1001 = vmul.f32 %v993, 0.5
  %v1002 = vmul.f32 %v994, 0.5
  %v1003 = vadd.f32 %v995, 0.5
  %v1004 = vadd.f32 %v996, 0.5
  %v1005 = vadd.f32 %v997, 0.5
  %v1006 = vadd.f32 %v998, 0.5
  %v1007 = vadd.f32 %v999, 0.5
  %v1008 = vadd.f32 %v1000, 0.5
  %v1009 = vadd.f32 %v1001, 0.5
  %v1010 = vadd.f32 %v1002, 0.5
  %v1011 = vmul.f32 %v919, %v955
  %v1012 = vmul.f32 %v922, %v955
  %v1013 = vmul.f32 %v927, %v955
  %v1014 = vmul.f32 %v930, %v955
  %v1015 = vmul.f32 %v935, %v955
  %v1016 = vmul.f32 %v938, %v955
  %v1017 = vmul.f32 %v943, %v955
  %v1018 = vmul.f32 %v946, %v955
  %v1019 = vadd.f32 %v1011, %v969
  %v1020 = vadd.f32 %v1012, %v969
  %v1021 = vadd.f32 %v1013, %v969
  %v1022 = vadd.f32 %v1014, %v969
  %v1023 = vadd.f32 %v1015, %v969
  %v1024 = vadd.f32 %v1016, %v969
  %v1025 = vadd.f32 %v1017, %v969
  %v1026 = vadd.f32 %v1018, %v969
  %v1027 = vmul.f32 %v1019, 0.5
  %v1028 = vmul.f32 %v1020, 0.5
  %v1029 = vmul.f32 %v1021, 0.5
  %v1030 = vmul.f32 %v1022, 0.5
  %v1031 = vmul.f32 %v1023, 0.5
  %v1032 = vmul.f32 %v1024, 0.5
  %v1033 = vmul.f32 %v1025, 0.5
  %v1034 = vmul.f32 %v1026, 0.5
  %v1035 = vtanh.pop %v1027
  %v1036 = vtanh.pop %v1028
  %v1037 = vtanh.pop %v1029
  %v1038 = vtanh.pop %v1030
  %v1039 = vtanh.pop %v1031
  %v1040 = vtanh.pop %v1032
  %v1041 = vtanh.pop %v1033
  %v1042 = vtanh.pop %v1034
  %v1043 = vmul.f32 %v1035, 0.5
  %v1044 = vmul.f32 %v1036, 0.5
  %v1045 = vmul.f32 %v1037, 0.5
  %v1046 = vmul.f32 %v1038, 0.5
  %v1047 = vmul.f32 %v1039, 0.5
  %v1048 = vmul.f32 %v1040, 0.5
  %v1049 = vmul.f32 %v1041, 0.5
  %v1050 = vmul.f32 %v1042, 0.5
  %v1051 = vadd.f32 %v1043, 0.5
  %v1052 = vadd.f32 %v1044, 0.5
  %v1053 = vadd.f32 %v1045, 0.5
  %v1054 = vadd.f32 %v1046, 0.5
  %v1055 = vadd.f32 %v1047, 0.5
  %v1056 = vadd.f32 %v1048, 0.5
  %v1057 = vadd.f32 %v1049, 0.5
  %v1058 = vadd.f32 %v1050, 0.5
  %v1059 = vmax.f32 %v1003, %v1051
  %v1060 = vmax.f32 %v1004, %v1052
  %v1061 = vmax.f32 %v1005, %v1053
  %v1062 = vmax.f32 %v1006, %v1054
  %v1063 = vmax.f32 %v1007, %v1055
  %v1064 = vmax.f32 %v1008, %v1056
  %v1065 = vmax.f32 %v1009, %v1057
  %v1066 = vmax.f32 %v1010, %v1058
  %v1067 = vpack.c.bf16 %v1059, %v1059
  %v1068 = vpack.c.bf16 %v1060, %v1060
  %v1069 = vpack.c.bf16 %v1061, %v1061
  %v1070 = vpack.c.bf16 %v1062, %v1062
  %v1071 = vpack.c.bf16 %v1063, %v1063
  %v1072 = vpack.c.bf16 %v1064, %v1064
  %v1073 = vpack.c.bf16 %v1065, %v1065
  %v1074 = vpack.c.bf16 %v1066, %v1066
  %v1076 = vshrl.u32 %v1067, 16
  %v1078 = vrot.slane %v1076, 7
  %v1079 = vshll.u32 %v1067, 16
  %v1081 = vor.u32 %v1078, %v1079
  %v1083 = vshrl.u32 %v1068, 16
  %v1085 = vrot.slane %v1083, 7
  %v1086 = vshll.u32 %v1068, 16
  %v1088 = vor.u32 %v1085, %v1086
  %v1090 = vshrl.u32 %v1069, 16
  %v1092 = vrot.slane %v1090, 7
  %v1093 = vshll.u32 %v1069, 16
  %v1095 = vor.u32 %v1092, %v1093
  %v1097 = vshrl.u32 %v1070, 16
  %v1099 = vrot.slane %v1097, 7
  %v1100 = vshll.u32 %v1070, 16
  %v1102 = vor.u32 %v1099, %v1100
  %v1104 = vshrl.u32 %v1071, 16
  %v1106 = vrot.slane %v1104, 7
  %v1107 = vshll.u32 %v1071, 16
  %v1109 = vor.u32 %v1106, %v1107
  %v1111 = vshrl.u32 %v1072, 16
  %v1113 = vrot.slane %v1111, 7
  %v1114 = vshll.u32 %v1072, 16
  %v1116 = vor.u32 %v1113, %v1114
  %v1118 = vshrl.u32 %v1073, 16
  %v1120 = vrot.slane %v1118, 7
  %v1121 = vshll.u32 %v1073, 16
  %v1123 = vor.u32 %v1120, %v1121
  %v1125 = vshrl.u32 %v1074, 16
  %v1127 = vrot.slane %v1125, 7
  %v1128 = vshll.u32 %v1074, 16
  %v1130 = vor.u32 %v1127, %v1128
  %v1139 = vsel %vm447, 0, %v1081
  %v1140 = vsel %vm447, 0, %v1088
  %v1141 = vsel %vm447, 0, %v1095
  %v1142 = vsel %vm447, 0, %v1102
  %v1143 = vsel %vm447, 0, %v1109
  %v1144 = vsel %vm447, 0, %v1116
  %v1145 = vsel %vm447, 0, %v1123
  %v1146 = vsel %vm447, 0, %v1130
  %v1147 = vrot.slane %v1079, 1
  %v1148 = vor.u32 %v1076, %v1147
  %v1149 = vrot.slane %v1086, 1
  %v1150 = vor.u32 %v1083, %v1149
  %v1151 = vrot.slane %v1093, 1
  %v1152 = vor.u32 %v1090, %v1151
  %v1153 = vrot.slane %v1100, 1
  %v1154 = vor.u32 %v1097, %v1153
  %v1155 = vrot.slane %v1107, 1
  %v1156 = vor.u32 %v1104, %v1155
  %v1157 = vrot.slane %v1114, 1
  %v1158 = vor.u32 %v1111, %v1157
  %v1159 = vrot.slane %v1121, 1
  %v1160 = vor.u32 %v1118, %v1159
  %v1161 = vrot.slane %v1128, 1
  %v1162 = vor.u32 %v1125, %v1161
  %v1171 = vsel %vm482, %v1148, 0
  %v1172 = vsel %vm482, %v1150, 0
  %v1173 = vsel %vm482, %v1152, 0
  %v1174 = vsel %vm482, %v1154, 0
  %v1175 = vsel %vm482, %v1156, 0
  %v1176 = vsel %vm482, %v1158, 0
  %v1177 = vsel %vm482, %v1160, 0
  %v1178 = vsel %vm482, %v1162, 0
  %v1195 = vunpack.c.l.b16 %v1139
  %v1196 = vunpack.c.l.b16 %v1067
  %v1197 = vunpack.c.l.b16 %v1140
  %v1198 = vunpack.c.l.b16 %v1068
  %v1199 = vunpack.c.l.b16 %v1141
  %v1200 = vunpack.c.l.b16 %v1069
  %v1201 = vunpack.c.l.b16 %v1142
  %v1202 = vunpack.c.l.b16 %v1070
  %v1203 = vunpack.c.l.b16 %v1143
  %v1204 = vunpack.c.l.b16 %v1071
  %v1205 = vunpack.c.l.b16 %v1144
  %v1206 = vunpack.c.l.b16 %v1072
  %v1207 = vunpack.c.l.b16 %v1145
  %v1208 = vunpack.c.l.b16 %v1073
  %v1209 = vunpack.c.l.b16 %v1146
  %v1210 = vunpack.c.l.b16 %v1074
  %v1211 = vld [vmem:[%s9] sm:$0xf]
  %v1212 = vld [vmem:[%s9 + $0x4] sm:$0xf]
  %v1213 = vld [vmem:[%s9 + $0x8] sm:$0xf]
  %v1214 = vld [vmem:[%s9 + $0xc] sm:$0xf]
  %v1215 = vld [vmem:[%s9 + $0x10] sm:$0xf]
  %v1216 = vld [vmem:[%s9 + $0x14] sm:$0xf]
  %v1217 = vld [vmem:[%s9 + $0x18] sm:$0xf]
  %v1218 = vld [vmem:[%s9 + $0x1c] sm:$0xf]
  %v1219 = vld [vmem:[%s9 + $0x20] sm:$0xf]
  %v1220 = vld [vmem:[%s9 + $0x24] sm:$0xf]
  %v1221 = vld [vmem:[%s9 + $0x28] sm:$0xf]
  %v1222 = vld [vmem:[%s9 + $0x2c] sm:$0xf]
  %v1223 = vld [vmem:[%s9 + $0x30] sm:$0xf]
  %v1224 = vld [vmem:[%s9 + $0x34] sm:$0xf]
  %v1225 = vld [vmem:[%s9 + $0x38] sm:$0xf]
  %v1226 = vld [vmem:[%s9 + $0x3c] sm:$0xf]
  %v1227 = vld [vmem:[%s9 + $0x40] sm:$0xf]
  %v1228 = vld [vmem:[%s9 + $0x44] sm:$0xf]
  %v1229 = vld [vmem:[%s9 + $0x48] sm:$0xf]
  %v1230 = vld [vmem:[%s9 + $0x4c] sm:$0xf]
  %v1231 = vld [vmem:[%s9 + $0x50] sm:$0xf]
  %v1232 = vld [vmem:[%s9 + $0x54] sm:$0xf]
  %v1233 = vld [vmem:[%s9 + $0x58] sm:$0xf]
  %v1234 = vld [vmem:[%s9 + $0x5c] sm:$0xf]
  %v1235 = vld [vmem:[%s9 + $0x60] sm:$0xf]
  %v1236 = vld [vmem:[%s9 + $0x64] sm:$0xf]
  %v1237 = vld [vmem:[%s9 + $0x68] sm:$0xf]
  %v1238 = vld [vmem:[%s9 + $0x6c] sm:$0xf]
  %v1239 = vld [vmem:[%s9 + $0x70] sm:$0xf]
  %v1240 = vld [vmem:[%s9 + $0x74] sm:$0xf]
  %v1241 = vld [vmem:[%s9 + $0x78] sm:$0xf]
  %v1242 = vld [vmem:[%s9 + $0x7c] sm:$0xf]
  %v1243 = vpack.c.b16 %v1197, %v1195
  %v1244 = vpack.c.b16 %v1198, %v1196
  %v1245 = vpack.c.b16 %v1201, %v1199
  %v1246 = vpack.c.b16 %v1202, %v1200
  %v1247 = vpack.c.b16 %v1205, %v1203
  %v1248 = vpack.c.b16 %v1206, %v1204
  %v1249 = vpack.c.b16 %v1209, %v1207
  %v1250 = vpack.c.b16 %v1210, %v1208
  %v1291 = vunpack.c.l.b16 %v1211
  %v1292 = vunpack.c.l.b16 %v1212
  %v1293 = vunpack.c.l.b16 %v1213
  %v1294 = vunpack.c.l.b16 %v1214
  %v1295 = vunpack.c.l.b16 %v1215
  %v1296 = vunpack.c.l.b16 %v1216
  %v1297 = vunpack.c.l.b16 %v1217
  %v1298 = vunpack.c.l.b16 %v1218
  %v1299 = vunpack.c.l.b16 %v1219
  %v1300 = vunpack.c.l.b16 %v1220
  %v1301 = vunpack.c.l.b16 %v1221
  %v1302 = vunpack.c.l.b16 %v1222
  %v1303 = vunpack.c.l.b16 %v1223
  %v1304 = vunpack.c.l.b16 %v1224
  %v1305 = vunpack.c.l.b16 %v1225
  %v1306 = vunpack.c.l.b16 %v1226
  %v1307 = vunpack.c.l.b16 %v1227
  %v1308 = vunpack.c.l.b16 %v1228
  %v1309 = vunpack.c.l.b16 %v1229
  %v1310 = vunpack.c.l.b16 %v1230
  %v1311 = vunpack.c.l.b16 %v1231
  %v1312 = vunpack.c.l.b16 %v1232
  %v1313 = vunpack.c.l.b16 %v1233
  %v1314 = vunpack.c.l.b16 %v1234
  %v1315 = vunpack.c.l.b16 %v1235
  %v1316 = vunpack.c.l.b16 %v1236
  %v1317 = vunpack.c.l.b16 %v1237
  %v1318 = vunpack.c.l.b16 %v1238
  %v1319 = vunpack.c.l.b16 %v1239
  %v1320 = vunpack.c.l.b16 %v1240
  %v1321 = vunpack.c.l.b16 %v1241
  %v1322 = vunpack.c.l.b16 %v1242
  %v1323 = vpack.c.b16 %v1292, %v1291
  %v1324 = vpack.c.b16 %v1294, %v1293
  %v1325 = vpack.c.b16 %v1296, %v1295
  %v1326 = vpack.c.b16 %v1298, %v1297
  %v1327 = vpack.c.b16 %v1300, %v1299
  %v1328 = vpack.c.b16 %v1302, %v1301
  %v1329 = vpack.c.b16 %v1304, %v1303
  %v1330 = vpack.c.b16 %v1306, %v1305
  %v1331 = vpack.c.b16 %v1308, %v1307
  %v1332 = vpack.c.b16 %v1310, %v1309
  %v1333 = vpack.c.b16 %v1312, %v1311
  %v1334 = vpack.c.b16 %v1314, %v1313
  %v1335 = vpack.c.b16 %v1316, %v1315
  %v1336 = vpack.c.b16 %v1318, %v1317
  %v1337 = vpack.c.b16 %v1320, %v1319
  %v1338 = vpack.c.b16 %v1322, %v1321
  %1355 = vmatprep.subr.bf16.mxu0 0
  %1356 = vmatpush1.bf16.msra.mxu0 %v1330
  %1357 = vmatprep.subr.bf16.mxu0 0
  %1358 = vmatpush1.bf16.msra.mxu0 %v1329
  %1359 = vmatprep.subr.bf16.mxu0 0
  %1360 = vmatpush1.bf16.msra.mxu0 %v1328
  %1361 = vmatprep.subr.bf16.mxu0 0
  %1362 = vmatpush1.bf16.msra.mxu0 %v1327
  %1363 = vmatprep.subr.bf16.mxu0 0
  %1364 = vmatpush1.bf16.msra.mxu0 %v1326
  %1365 = vmatprep.subr.bf16.mxu0 0
  %1366 = vmatpush1.bf16.msra.mxu0 %v1325
  %1367 = vmatprep.subr.bf16.mxu0 0
  %1368 = vmatpush1.bf16.msra.mxu0 %v1324
  %1369 = vmatprep.subr.bf16.mxu0 0
  %1370 = vmatpush1.bf16.msra.mxu0 %v1323
  %1371 = vmatprep.subr.bf16.mxu0 0
  %1372 = vmatpush2.bf16.msra.mxu0 %v1338
  %1373 = vmatprep.subr.bf16.mxu0 0
  %1374 = vmatpush2.bf16.msra.mxu0 %v1337
  %1375 = vmatprep.subr.bf16.mxu0 0
  %1376 = vmatpush2.bf16.msra.mxu0 %v1336
  %1377 = vmatprep.subr.bf16.mxu0 0
  %1378 = vmatpush2.bf16.msra.mxu0 %v1335
  %1379 = vmatprep.subr.bf16.mxu0 0
  %1380 = vmatpush2.bf16.msra.mxu0 %v1334
  %1381 = vmatprep.subr.bf16.mxu0 0
  %1382 = vmatpush2.bf16.msra.mxu0 %v1333
  %1383 = vmatprep.subr.bf16.mxu0 0
  %1384 = vmatpush2.bf16.msra.mxu0 %v1332
  %1385 = vmatprep.subr.bf16.mxu0 0
  %1386 = vmatpush2.bf16.msra.mxu0 %v1331
  %1387 = vmatprep.mubr.bf16.mxu0 %v1244
  %1388 = vmatmul.mubr.bf16.gmra.mxu0 %v1243
  %v1389 = vpop.f32.mrf.mxu0
  %v1390 = vadd.f32 0.0, %v1389
  %v1391 = vpop.f32.mrf.mxu0
  %v1392 = vpop.f32.mrf.mxu0
  %v1393 = vadd.f32 0.0, %v1392
  %v1394 = vpop.f32.mrf.mxu0
  %1395 = vmatprep.mubr.bf16.mxu0 %v1246
  %1396 = vmatmul.mubr.bf16.gmra.mxu0 %v1245
  %v1397 = vpop.f32.mrf.mxu0
  %v1398 = vadd.f32 0.0, %v1397
  %v1399 = vpop.f32.mrf.mxu0
  %v1400 = vpop.f32.mrf.mxu0
  %v1401 = vadd.f32 0.0, %v1400
  %v1402 = vpop.f32.mrf.mxu0
  %1403 = vmatprep.mubr.bf16.mxu0 %v1248
  %1404 = vmatmul.mubr.bf16.gmra.mxu0 %v1247
  %v1405 = vpop.f32.mrf.mxu0
  %v1406 = vadd.f32 0.0, %v1405
  %v1407 = vpop.f32.mrf.mxu0
  %v1408 = vpop.f32.mrf.mxu0
  %v1409 = vadd.f32 0.0, %v1408
  %v1410 = vpop.f32.mrf.mxu0
  %1411 = vmatprep.mubr.bf16.mxu0 %v1250
  %1412 = vmatmul.mubr.bf16.gmra.mxu0 %v1249
  %v1413 = vpop.f32.mrf.mxu0
  %v1414 = vadd.f32 0.0, %v1413
  %v1415 = vpop.f32.mrf.mxu0
  %v1416 = vpop.f32.mrf.mxu0
  %v1417 = vadd.f32 0.0, %v1416
  %v1418 = vpop.f32.mrf.mxu0
  %1419 = vdwg.mxu0
  %v1428 = vunpack.c.l.b16 %v1171
  %v1429 = vunpack.c.l.b16 %v1172
  %v1430 = vunpack.c.l.b16 %v1173
  %v1431 = vunpack.c.l.b16 %v1174
  %v1432 = vunpack.c.l.b16 %v1175
  %v1433 = vunpack.c.l.b16 %v1176
  %v1434 = vunpack.c.l.b16 %v1177
  %v1435 = vunpack.c.l.b16 %v1178
  %v1436 = vld [vmem:[%s10] sm:$0xf]
  %v1437 = vld [vmem:[%s10 + $0x4] sm:$0xf]
  %v1438 = vld [vmem:[%s10 + $0x8] sm:$0xf]
  %v1439 = vld [vmem:[%s10 + $0xc] sm:$0xf]
  %v1440 = vld [vmem:[%s10 + $0x10] sm:$0xf]
  %v1441 = vld [vmem:[%s10 + $0x14] sm:$0xf]
  %v1442 = vld [vmem:[%s10 + $0x18] sm:$0xf]
  %v1443 = vld [vmem:[%s10 + $0x1c] sm:$0xf]
  %v1444 = vld [vmem:[%s10 + $0x20] sm:$0xf]
  %v1445 = vld [vmem:[%s10 + $0x24] sm:$0xf]
  %v1446 = vld [vmem:[%s10 + $0x28] sm:$0xf]
  %v1447 = vld [vmem:[%s10 + $0x2c] sm:$0xf]
  %v1448 = vld [vmem:[%s10 + $0x30] sm:$0xf]
  %v1449 = vld [vmem:[%s10 + $0x34] sm:$0xf]
  %v1450 = vld [vmem:[%s10 + $0x38] sm:$0xf]
  %v1451 = vld [vmem:[%s10 + $0x3c] sm:$0xf]
  %v1452 = vld [vmem:[%s10 + $0x40] sm:$0xf]
  %v1453 = vld [vmem:[%s10 + $0x44] sm:$0xf]
  %v1454 = vld [vmem:[%s10 + $0x48] sm:$0xf]
  %v1455 = vld [vmem:[%s10 + $0x4c] sm:$0xf]
  %v1456 = vld [vmem:[%s10 + $0x50] sm:$0xf]
  %v1457 = vld [vmem:[%s10 + $0x54] sm:$0xf]
  %v1458 = vld [vmem:[%s10 + $0x58] sm:$0xf]
  %v1459 = vld [vmem:[%s10 + $0x5c] sm:$0xf]
  %v1460 = vld [vmem:[%s10 + $0x60] sm:$0xf]
  %v1461 = vld [vmem:[%s10 + $0x64] sm:$0xf]
  %v1462 = vld [vmem:[%s10 + $0x68] sm:$0xf]
  %v1463 = vld [vmem:[%s10 + $0x6c] sm:$0xf]
  %v1464 = vld [vmem:[%s10 + $0x70] sm:$0xf]
  %v1465 = vld [vmem:[%s10 + $0x74] sm:$0xf]
  %v1466 = vld [vmem:[%s10 + $0x78] sm:$0xf]
  %v1467 = vld [vmem:[%s10 + $0x7c] sm:$0xf]
  %v1468 = vpack.c.b16 %v1429, %v1428
  %v1469 = vpack.c.b16 %v1431, %v1430
  %v1470 = vpack.c.b16 %v1433, %v1432
  %v1471 = vpack.c.b16 %v1435, %v1434
  %v1508 = vunpack.c.l.b16 %v1436
  %v1509 = vunpack.c.l.b16 %v1437
  %v1510 = vunpack.c.l.b16 %v1438
  %v1511 = vunpack.c.l.b16 %v1439
  %v1512 = vunpack.c.l.b16 %v1440
  %v1513 = vunpack.c.l.b16 %v1441
  %v1514 = vunpack.c.l.b16 %v1442
  %v1515 = vunpack.c.l.b16 %v1443
  %v1516 = vunpack.c.l.b16 %v1444
  %v1517 = vunpack.c.l.b16 %v1445
  %v1518 = vunpack.c.l.b16 %v1446
  %v1519 = vunpack.c.l.b16 %v1447
  %v1520 = vunpack.c.l.b16 %v1448
  %v1521 = vunpack.c.l.b16 %v1449
  %v1522 = vunpack.c.l.b16 %v1450
  %v1523 = vunpack.c.l.b16 %v1451
  %v1524 = vunpack.c.l.b16 %v1452
  %v1525 = vunpack.c.l.b16 %v1453
  %v1526 = vunpack.c.l.b16 %v1454
  %v1527 = vunpack.c.l.b16 %v1455
  %v1528 = vunpack.c.l.b16 %v1456
  %v1529 = vunpack.c.l.b16 %v1457
  %v1530 = vunpack.c.l.b16 %v1458
  %v1531 = vunpack.c.l.b16 %v1459
  %v1532 = vunpack.c.l.b16 %v1460
  %v1533 = vunpack.c.l.b16 %v1461
  %v1534 = vunpack.c.l.b16 %v1462
  %v1535 = vunpack.c.l.b16 %v1463
  %v1536 = vunpack.c.l.b16 %v1464
  %v1537 = vunpack.c.l.b16 %v1465
  %v1538 = vunpack.c.l.b16 %v1466
  %v1539 = vunpack.c.l.b16 %v1467
  %v1540 = vpack.c.b16 %v1509, %v1508
  %v1541 = vpack.c.b16 %v1511, %v1510
  %v1542 = vpack.c.b16 %v1513, %v1512
  %v1543 = vpack.c.b16 %v1515, %v1514
  %v1544 = vpack.c.b16 %v1517, %v1516
  %v1545 = vpack.c.b16 %v1519, %v1518
  %v1546 = vpack.c.b16 %v1521, %v1520
  %v1547 = vpack.c.b16 %v1523, %v1522
  %v1548 = vpack.c.b16 %v1525, %v1524
  %v1549 = vpack.c.b16 %v1527, %v1526
  %v1550 = vpack.c.b16 %v1529, %v1528
  %v1551 = vpack.c.b16 %v1531, %v1530
  %v1552 = vpack.c.b16 %v1533, %v1532
  %v1553 = vpack.c.b16 %v1535, %v1534
  %v1554 = vpack.c.b16 %v1537, %v1536
  %v1555 = vpack.c.b16 %v1539, %v1538
  %1572 = vmatprep.subr.bf16.mxu0 0
  %1573 = vmatpush1.bf16.msra.mxu0 %v1547
  %1574 = vmatprep.subr.bf16.mxu0 0
  %1575 = vmatpush1.bf16.msra.mxu0 %v1546
  %1576 = vmatprep.subr.bf16.mxu0 0
  %1577 = vmatpush1.bf16.msra.mxu0 %v1545
  %1578 = vmatprep.subr.bf16.mxu0 0
  %1579 = vmatpush1.bf16.msra.mxu0 %v1544
  %1580 = vmatprep.subr.bf16.mxu0 0
  %1581 = vmatpush1.bf16.msra.mxu0 %v1543
  %1582 = vmatprep.subr.bf16.mxu0 0
  %1583 = vmatpush1.bf16.msra.mxu0 %v1542
  %1584 = vmatprep.subr.bf16.mxu0 0
  %1585 = vmatpush1.bf16.msra.mxu0 %v1541
  %1586 = vmatprep.subr.bf16.mxu0 0
  %1587 = vmatpush1.bf16.msra.mxu0 %v1540
  %1588 = vmatprep.subr.bf16.mxu0 0
  %1589 = vmatpush2.bf16.msra.mxu0 %v1555
  %1590 = vmatprep.subr.bf16.mxu0 0
  %1591 = vmatpush2.bf16.msra.mxu0 %v1554
  %1592 = vmatprep.subr.bf16.mxu0 0
  %1593 = vmatpush2.bf16.msra.mxu0 %v1553
  %1594 = vmatprep.subr.bf16.mxu0 0
  %1595 = vmatpush2.bf16.msra.mxu0 %v1552
  %1596 = vmatprep.subr.bf16.mxu0 0
  %1597 = vmatpush2.bf16.msra.mxu0 %v1551
  %1598 = vmatprep.subr.bf16.mxu0 0
  %1599 = vmatpush2.bf16.msra.mxu0 %v1550
  %1600 = vmatprep.subr.bf16.mxu0 0
  %1601 = vmatpush2.bf16.msra.mxu0 %v1549
  %1602 = vmatprep.subr.bf16.mxu0 0
  %1603 = vmatpush2.bf16.msra.mxu0 %v1548
  %1604 = vmatprep.mubr.bf16.mxu0 %v1468
  %1605 = vmatmul.mubr.bf16.gmra.mxu0 %v1244
  %v1606 = vpop.f32.mrf.mxu0
  %v1607 = vadd.f32 0.0, %v1606
  %v1608 = vpop.f32.mrf.mxu0
  %v1609 = vpop.f32.mrf.mxu0
  %v1610 = vadd.f32 0.0, %v1609
  %v1611 = vpop.f32.mrf.mxu0
  %1612 = vmatprep.mubr.bf16.mxu0 %v1469
  %1613 = vmatmul.mubr.bf16.gmra.mxu0 %v1246
  %v1614 = vpop.f32.mrf.mxu0
  %v1615 = vadd.f32 0.0, %v1614
  %v1616 = vpop.f32.mrf.mxu0
  %v1617 = vpop.f32.mrf.mxu0
  %v1618 = vadd.f32 0.0, %v1617
  %v1619 = vpop.f32.mrf.mxu0
  %1620 = vmatprep.mubr.bf16.mxu0 %v1470
  %1621 = vmatmul.mubr.bf16.gmra.mxu0 %v1248
  %v1622 = vpop.f32.mrf.mxu0
  %v1623 = vadd.f32 0.0, %v1622
  %v1624 = vpop.f32.mrf.mxu0
  %v1625 = vpop.f32.mrf.mxu0
  %v1626 = vadd.f32 0.0, %v1625
  %v1627 = vpop.f32.mrf.mxu0
  %1628 = vmatprep.mubr.bf16.mxu0 %v1471
  %1629 = vmatmul.mubr.bf16.gmra.mxu0 %v1250
  %v1630 = vpop.f32.mrf.mxu0
  %v1631 = vadd.f32 0.0, %v1630
  %v1632 = vpop.f32.mrf.mxu0
  %v1633 = vpop.f32.mrf.mxu0
  %v1634 = vadd.f32 0.0, %v1633
  %v1635 = vpop.f32.mrf.mxu0
  %1636 = vdwg.mxu0
  %v1637 = vld [vmem:[%s11] sm:$0x1]
  %v1638 = vld [vmem:[%s12] sm:$0x1]
  %v1640 = vlaneseq
  %v1641 = vshrl.u32 %v1640, 7
  %v1642 = vsub.s32 0, %v1641
  %v1643 = vrot.slane %v1637, %v1642
  %v1645 = vmul.f32 %v1390, %v1643
  %v1646 = vmul.f32 %v1393, %v1643
  %v1647 = vmul.f32 %v1398, %v1643
  %v1648 = vmul.f32 %v1401, %v1643
  %v1649 = vmul.f32 %v1406, %v1643
  %v1650 = vmul.f32 %v1409, %v1643
  %v1651 = vmul.f32 %v1414, %v1643
  %v1652 = vmul.f32 %v1417, %v1643
  %v1654 = vlaneseq
  %v1655 = vshrl.u32 %v1654, 7
  %v1656 = vsub.s32 0, %v1655
  %v1657 = vrot.slane %v1638, %v1656
  %v1659 = vadd.f32 %v1645, %v1657
  %v1660 = vadd.f32 %v1646, %v1657
  %v1661 = vadd.f32 %v1647, %v1657
  %v1662 = vadd.f32 %v1648, %v1657
  %v1663 = vadd.f32 %v1649, %v1657
  %v1664 = vadd.f32 %v1650, %v1657
  %v1665 = vadd.f32 %v1651, %v1657
  %v1666 = vadd.f32 %v1652, %v1657
  %v1667 = vmul.f32 %v1659, 0.5
  %v1668 = vmul.f32 %v1660, 0.5
  %v1669 = vmul.f32 %v1661, 0.5
  %v1670 = vmul.f32 %v1662, 0.5
  %v1671 = vmul.f32 %v1663, 0.5
  %v1672 = vmul.f32 %v1664, 0.5
  %v1673 = vmul.f32 %v1665, 0.5
  %v1674 = vmul.f32 %v1666, 0.5
  %v1675 = vtanh.pop %v1667
  %v1676 = vtanh.pop %v1668
  %v1677 = vtanh.pop %v1669
  %v1678 = vtanh.pop %v1670
  %v1679 = vtanh.pop %v1671
  %v1680 = vtanh.pop %v1672
  %v1681 = vtanh.pop %v1673
  %v1682 = vtanh.pop %v1674
  %v1683 = vmul.f32 %v1675, 0.5
  %v1684 = vmul.f32 %v1676, 0.5
  %v1685 = vmul.f32 %v1677, 0.5
  %v1686 = vmul.f32 %v1678, 0.5
  %v1687 = vmul.f32 %v1679, 0.5
  %v1688 = vmul.f32 %v1680, 0.5
  %v1689 = vmul.f32 %v1681, 0.5
  %v1690 = vmul.f32 %v1682, 0.5
  %v1691 = vadd.f32 %v1683, 0.5
  %v1692 = vadd.f32 %v1684, 0.5
  %v1693 = vadd.f32 %v1685, 0.5
  %v1694 = vadd.f32 %v1686, 0.5
  %v1695 = vadd.f32 %v1687, 0.5
  %v1696 = vadd.f32 %v1688, 0.5
  %v1697 = vadd.f32 %v1689, 0.5
  %v1698 = vadd.f32 %v1690, 0.5
  %v1699 = vmul.f32 %v1607, %v1643
  %v1700 = vmul.f32 %v1610, %v1643
  %v1701 = vmul.f32 %v1615, %v1643
  %v1702 = vmul.f32 %v1618, %v1643
  %v1703 = vmul.f32 %v1623, %v1643
  %v1704 = vmul.f32 %v1626, %v1643
  %v1705 = vmul.f32 %v1631, %v1643
  %v1706 = vmul.f32 %v1634, %v1643
  %v1707 = vadd.f32 %v1699, %v1657
  %v1708 = vadd.f32 %v1700, %v1657
  %v1709 = vadd.f32 %v1701, %v1657
  %v1710 = vadd.f32 %v1702, %v1657
  %v1711 = vadd.f32 %v1703, %v1657
  %v1712 = vadd.f32 %v1704, %v1657
  %v1713 = vadd.f32 %v1705, %v1657
  %v1714 = vadd.f32 %v1706, %v1657
  %v1715 = vmul.f32 %v1707, 0.5
  %v1716 = vmul.f32 %v1708, 0.5
  %v1717 = vmul.f32 %v1709, 0.5
  %v1718 = vmul.f32 %v1710, 0.5
  %v1719 = vmul.f32 %v1711, 0.5
  %v1720 = vmul.f32 %v1712, 0.5
  %v1721 = vmul.f32 %v1713, 0.5
  %v1722 = vmul.f32 %v1714, 0.5
  %v1723 = vtanh.pop %v1715
  %v1724 = vtanh.pop %v1716
  %v1725 = vtanh.pop %v1717
  %v1726 = vtanh.pop %v1718
  %v1727 = vtanh.pop %v1719
  %v1728 = vtanh.pop %v1720
  %v1729 = vtanh.pop %v1721
  %v1730 = vtanh.pop %v1722
  %v1731 = vmul.f32 %v1723, 0.5
  %v1732 = vmul.f32 %v1724, 0.5
  %v1733 = vmul.f32 %v1725, 0.5
  %v1734 = vmul.f32 %v1726, 0.5
  %v1735 = vmul.f32 %v1727, 0.5
  %v1736 = vmul.f32 %v1728, 0.5
  %v1737 = vmul.f32 %v1729, 0.5
  %v1738 = vmul.f32 %v1730, 0.5
  %v1739 = vadd.f32 %v1731, 0.5
  %v1740 = vadd.f32 %v1732, 0.5
  %v1741 = vadd.f32 %v1733, 0.5
  %v1742 = vadd.f32 %v1734, 0.5
  %v1743 = vadd.f32 %v1735, 0.5
  %v1744 = vadd.f32 %v1736, 0.5
  %v1745 = vadd.f32 %v1737, 0.5
  %v1746 = vadd.f32 %v1738, 0.5
  %v1747 = vmax.f32 %v1691, %v1739
  %v1748 = vmax.f32 %v1692, %v1740
  %v1749 = vmax.f32 %v1693, %v1741
  %v1750 = vmax.f32 %v1694, %v1742
  %v1751 = vmax.f32 %v1695, %v1743
  %v1752 = vmax.f32 %v1696, %v1744
  %v1753 = vmax.f32 %v1697, %v1745
  %v1754 = vmax.f32 %v1698, %v1746
  %v1755 = vpack.c.bf16 %v1747, %v1747
  %v1756 = vpack.c.bf16 %v1748, %v1748
  %v1757 = vpack.c.bf16 %v1749, %v1749
  %v1758 = vpack.c.bf16 %v1750, %v1750
  %v1759 = vpack.c.bf16 %v1751, %v1751
  %v1760 = vpack.c.bf16 %v1752, %v1752
  %v1761 = vpack.c.bf16 %v1753, %v1753
  %v1762 = vpack.c.bf16 %v1754, %v1754
  %1763 = vst [vmem:[%s13] sm:$0xf] %v1755
  %1764 = vst [vmem:[%s13 + $0x4] sm:$0xf] %v1756
  %1765 = vst [vmem:[%s13 + $0x8] sm:$0xf] %v1757
  %1766 = vst [vmem:[%s13 + $0xc] sm:$0xf] %v1758
  %1767 = vst [vmem:[%s13 + $0x10] sm:$0xf] %v1759
  %1768 = vst [vmem:[%s13 + $0x14] sm:$0xf] %v1760
  %1769 = vst [vmem:[%s13 + $0x18] sm:$0xf] %v1761
  %1770 = vst [vmem:[%s13 + $0x1c] sm:$0xf] %v1762
  // Predicated region
  $region54: #{pallas_forward.3} parent=0 // pred_check
    _
  $region55: #{pallas_forward.3} parent=0 // pred_check_branch
    %1772 = sbr.rel (0) target = $region57
  $region56: #{pallas_forward.3} parent=0 // pred_region
    _
  $region57: #{pallas_forward.3} parent=0 // pred_fallthru
    _
  // Predicated region
  $region58: #{pallas_forward.3} parent=0 // pred_check
    _
  $region59: #{pallas_forward.3} parent=0 // pred_check_branch
    %1774 = sbr.rel (0) target = $region61
  $region60: #{pallas_forward.3} parent=0 // pred_region
    _
  $region61: #{pallas_forward.3} parent=0 // pred_fallthru
    _

</llo_original>
